<compile_context>
chip_gen: v6e
topology: v6e:2x2x1
jax: 0.10.0
libtpu: 0.0.40
codegen_flags: <defaults>
</compile_context>

<pallas_src>
import functools

import jax
import jax.numpy as jnp
from jax import lax
from jax.experimental import pallas as pl
from jax.experimental.pallas import tpu as pltpu


def _bottleneck_kernel(x_top_ref, x_mid_ref, x_bot_ref,
                       s1_ref, b1_ref, w1_ref,
                       s2_ref, b2_ref, w2_ref,
                       s3_ref, b3_ref, w3_ref,
                       out_ref):
    """One (batch, row-tile) grid step of the pre-activation bottleneck.

    x_mid_ref : (1, TH, W, Cin)  rows [h*TH, (h+1)*TH) of the image
    x_top_ref : (1, 1,  W, Cin)  row  max(h*TH-1, 0)       (top halo, clamped)
    x_bot_ref : (1, 1,  W, Cin)  row  min((h+1)*TH, H-1)   (bottom halo, clamped)
    w1_ref    : (Cin, P)   bf16  conv1 1x1
    w2_ref    : (9*P, P)   bf16  conv2 3x3, im2col-flattened (ky, kx, cin)-major
    w3_ref    : (P, Cout)  bf16  conv3 1x1
    s*/b*     : (1, C)     f32   folded inference BatchNorm scale / shift
    """
    _, TH, W, Cin = x_mid_ref.shape
    P = w1_ref.shape[1]
    Cout = w3_ref.shape[1]
    h_idx = pl.program_id(1)
    H = pl.num_programs(1) * TH            # full image height

    # --- assemble TH+2 input rows (tile + 1-row halo on each side) ------------
    # 2-D (rows*W, C) slabs; concat along the sublane axis at W-aligned offsets.
    x_top = x_top_ref[...].reshape(W, Cin)
    x_mid = x_mid_ref[...].reshape(TH * W, Cin)
    x_bot = x_bot_ref[...].reshape(W, Cin)
    x_ext = jnp.concatenate([x_top, x_mid, x_bot], axis=0)   # ((TH+2)*W, Cin)

    # --- bn1 + relu (f32 VPU), conv1 1x1 as bf16 MXU matmul, f32 accumulation --
    a = jnp.maximum(x_ext * s1_ref[...] + b1_ref[...], 0.0)
    h = jnp.dot(a.astype(jnp.bfloat16), w1_ref[...],
                preferred_element_type=jnp.float32)           # ((TH+2)*W, P)

    # --- bn2 + relu ------------------------------------------------------------
    h2 = jnp.maximum(h * s2_ref[...] + b2_ref[...], 0.0)

    # conv2's zero padding lives in *post-bn2* space: halo rows that fall outside
    # the real image (top of tile 0 / bottom of the last tile) must be zero here,
    # so mask them (the clamped halo DMA gave them dummy in-image data).
    rowpos = lax.broadcasted_iota(jnp.int32, (TH + 2, W, P), 0) \
                .reshape((TH + 2) * W, P)
    g = rowpos + (h_idx * TH - 1)                             # global image row
    h2 = jnp.where((g >= 0) & (g < H), h2, 0.0).astype(jnp.bfloat16)

    # --- conv2 3x3 (stride 1, pad 1) as ONE im2col matmul ----------------------
    # Pad the flattened (row-major) activation with W zero rows on each end
    # (aligned sublane concat).  Every 3x3 tap is then a contiguous static slice
    # of length TH*W; wrap-around at W boundaries is killed with a column mask
    # (that mask *is* the left/right zero padding of the conv).
    zpad = jnp.zeros((W, P), jnp.bfloat16)
    h2e = jnp.concatenate([zpad, h2, zpad], axis=0)           # ((TH+4)*W, P)
    wpos = lax.broadcasted_iota(jnp.int32, (TH, W, P), 1).reshape(TH * W, P)

    taps = []
    for dy in range(3):
        for dx in range(3):
            start = (dy + 1) * W + (dx - 1)
            t = h2e[start:start + TH * W, :]                  # (TH*W, P)
            if dx == 0:
                t = jnp.where(wpos == 0, 0.0, t)              # left zero pad
            elif dx == 2:
                t = jnp.where(wpos == W - 1, 0.0, t)          # right zero pad
            taps.append(t)
    col = jnp.concatenate(taps, axis=-1)                      # (TH*W, 9*P)
    c2 = jnp.dot(col, w2_ref[...],
                 preferred_element_type=jnp.float32)          # (TH*W, P)

    # --- bn3 + relu, conv3 1x1 --------------------------------------------------
    t3 = jnp.maximum(c2 * s3_ref[...] + b3_ref[...], 0.0)
    o = jnp.dot(t3.astype(jnp.bfloat16), w3_ref[...],
                preferred_element_type=jnp.float32)           # (TH*W, Cout)

    # --- residual add (stride=1, downsample=None -> identity = raw input) ------
    o = o + x_mid
    out_ref[...] = o.reshape(1, TH, W, Cout)


@functools.partial(jax.jit, static_argnames=("tile_h",))
def bottleneck_v2_forward(x, s1, b1, w1, s2, b2, w2f, s3, b3, w3, *, tile_h=8):
    """x: (N, H, W, Cin) f32 NHWC.  Weights in kernel layout:
       w1 (Cin, P) bf16, w2f (9*P, P) bf16 (ky, kx, cin order), w3 (P, Cout) bf16.
       s*/b*: (1, C) f32 folded inference BatchNorm."""
    N, H, W, Cin = x.shape
    P = w1.shape[1]
    Cout = w3.shape[1]
    assert Cin == Cout, "stride=1 / downsample=None requires inplanes == planes*4"
    if H % tile_h != 0:
        tile_h = H
    TH = tile_h
    n_h = H // TH

    # The 3x3 conv for output rows [h*TH, (h+1)*TH) needs input rows
    # [h*TH-1, (h+1)*TH+1).  Body rows come from one TH-row block; the two halo
    # rows come from 1-row blocks of the *same* array with clamped index maps
    # (clamped rows are masked to zero inside the kernel = conv2 zero padding).
    top_map = lambda n, h: (n, jnp.maximum(h * TH - 1, 0), 0, 0)
    mid_map = lambda n, h: (n, h, 0, 0)
    bot_map = lambda n, h: (n, jnp.minimum((h + 1) * TH, H - 1), 0, 0)
    full = lambda arr: pl.BlockSpec(arr.shape, lambda n, h: (0,) * arr.ndim)

    return pl.pallas_call(
        _bottleneck_kernel,
        out_shape=jax.ShapeDtypeStruct((N, H, W, Cout), jnp.float32),
        grid=(N, n_h),
        in_specs=[
            pl.BlockSpec((1, 1, W, Cin), top_map),
            pl.BlockSpec((1, TH, W, Cin), mid_map),
            pl.BlockSpec((1, 1, W, Cin), bot_map),
            full(s1), full(b1), full(w1),
            full(s2), full(b2), full(w2f),
            full(s3), full(b3), full(w3),
        ],
        out_specs=pl.BlockSpec((1, TH, W, Cout), mid_map),
        compiler_params=pltpu.CompilerParams(
            # Both grid axes are independent -> megacore-shardable on v7x.
            dimension_semantics=("parallel", "parallel"),
            vmem_limit_bytes=32 * 1024 * 1024,
        ),
    )(x, x, x, s1, b1, w1, s2, b2, w2f, s3, b3, w3)


def _fold_bn(gamma, beta, mean, var, eps=1e-5):
    scale = gamma / jnp.sqrt(var + eps)
    shift = beta - mean * scale
    return scale.astype(jnp.float32), shift.astype(jnp.float32)


def _reference_nhwc(x, bn_params, w1_hwio, w2_hwio, w3_hwio):
    """Plain-JAX NHWC reference with the same bf16-input / f32-accumulate conv
    numerics as the kernel (independent algorithm: XLA convolutions)."""
    def bn_relu(t, s, b):
        return jnp.maximum(t * s.reshape(1, 1, 1, -1) + b.reshape(1, 1, 1, -1), 0.0)

    def conv(t, w, pad):
        return lax.conv_general_dilated(
            t.astype(jnp.bfloat16), w.astype(jnp.bfloat16),
            window_strides=(1, 1), padding=pad,
            dimension_numbers=("NHWC", "HWIO", "NHWC"),
            preferred_element_type=jnp.float32)

    (s1, b1), (s2, b2), (s3, b3) = bn_params
    out = bn_relu(x, s1, b1)
    out = conv(out, w1_hwio, "VALID")
    out = bn_relu(out, s2, b2)
    out = conv(out, w2_hwio, ((1, 1), (1, 1)))
    out = bn_relu(out, s3, b3)
    out = conv(out, w3_hwio, "VALID")
    return out + x


if __name__ == "__main__":
    # Module config: inplanes = planes * expansion, stride = 1, downsample = None
    # (required for the residual add).  Channel widths chosen lane-dense
    # (multiples of 128), matching a real ResNet stage.
    planes = 128
    expansion = 4
    inplanes = planes * expansion          # 512
    N, H, W = 2, 16, 16

    key = jax.random.PRNGKey(0)
    keys = jax.random.split(key, 16)

    # Activations are NHWC end-to-end (PyTorch NCHW would be transposed once at
    # the model boundary, not per block).
    x = jax.random.normal(keys[0], (N, H, W, inplanes), dtype=jnp.float32)

    # Conv weights in PyTorch OIHW layout (synthetic init), converted once at
    # "model load" time to the kernel's matmul layouts.
    w1_oihw = 0.1 * jax.random.normal(keys[1], (planes, inplanes, 1, 1), jnp.float32)
    w2_oihw = 0.1 * jax.random.normal(keys[2], (planes, planes, 3, 3), jnp.float32)
    w3_oihw = 0.1 * jax.random.normal(keys[3], (planes * expansion, planes, 1, 1), jnp.float32)

    def bn_init(kg, kb, km, kv, c):
        gamma = 1.0 + 0.1 * jax.random.normal(kg, (c,), jnp.float32)
        beta = 0.1 * jax.random.normal(kb, (c,), jnp.float32)
        mean = 0.1 * jax.random.normal(km, (c,), jnp.float32)
        var = 1.0 + 0.1 * jax.random.uniform(kv, (c,), jnp.float32)
        return gamma, beta, mean, var

    bn1 = bn_init(keys[4], keys[5], keys[6], keys[7], inplanes)
    bn2 = bn_init(keys[8], keys[9], keys[10], keys[11], planes)
    bn3 = bn_init(keys[12], keys[13], keys[14], keys[15], planes)
    s1, b1 = _fold_bn(*bn1)
    s2, b2 = _fold_bn(*bn2)
    s3, b3 = _fold_bn(*bn3)

    # One-time weight prep: 1x1 convs -> (Cin, Cout) matmul weights, 3x3 conv ->
    # HWIO then im2col-flattened (9*Cin, Cout); pre-cast to bf16 for the MXU
    # (accumulation stays f32 inside the kernel).
    w1_k = jnp.transpose(w1_oihw[:, :, 0, 0], (1, 0))            # (inplanes, planes)
    w2_hwio = jnp.transpose(w2_oihw, (2, 3, 1, 0))               # (3, 3, planes, planes)
    w2_flat = w2_hwio.reshape(9 * planes, planes)                # (9*planes, planes)
    w3_k = jnp.transpose(w3_oihw[:, :, 0, 0], (1, 0))            # (planes, inplanes)

    out = bottleneck_v2_forward(
        x,
        s1.reshape(1, -1), b1.reshape(1, -1), w1_k.astype(jnp.bfloat16),
        s2.reshape(1, -1), b2.reshape(1, -1), w2_flat.astype(jnp.bfloat16),
        s3.reshape(1, -1), b3.reshape(1, -1), w3_k.astype(jnp.bfloat16),
        tile_h=8,
    )
    out = jax.block_until_ready(out)

    ref = _reference_nhwc(x, ((s1, b1), (s2, b2), (s3, b3)),
                          w1_k[None, None], w2_hwio, w3_k[None, None])
    ref = jax.block_until_ready(ref)

    assert out.shape == (N, H, W, inplanes), out.shape
    err = float(jnp.max(jnp.abs(out - ref)))
    assert jnp.allclose(out, ref, atol=3e-2, rtol=3e-2), f"max abs err = {err}"

    print("KERNEL_OK")
</pallas_src>

<mosaic_0001>
module attributes {stable_mosaic.version = 11 : i64} {
  func.func @_bottleneck_kernel(%arg0: i32, %arg1: i32, %arg2: memref<1x1x16x512xf32, #tpu.memory_space<vmem>>, %arg3: memref<1x8x16x512xf32, #tpu.memory_space<vmem>>, %arg4: memref<1x1x16x512xf32, #tpu.memory_space<vmem>>, %arg5: memref<1x512xf32, #tpu.memory_space<vmem>>, %arg6: memref<1x512xf32, #tpu.memory_space<vmem>>, %arg7: memref<512x128xbf16, #tpu.memory_space<vmem>>, %arg8: memref<1x128xf32, #tpu.memory_space<vmem>>, %arg9: memref<1x128xf32, #tpu.memory_space<vmem>>, %arg10: memref<1152x128xbf16, #tpu.memory_space<vmem>>, %arg11: memref<1x128xf32, #tpu.memory_space<vmem>>, %arg12: memref<1x128xf32, #tpu.memory_space<vmem>>, %arg13: memref<128x512xbf16, #tpu.memory_space<vmem>>, %arg14: memref<1x8x16x512xf32, #tpu.memory_space<vmem>>) attributes {dimension_semantics = [#tpu.dimension_semantics<parallel>, #tpu.dimension_semantics<parallel>], iteration_bounds = array<i64: 2, 2>, scalar_prefetch = 0 : i64, scratch_operands = 0 : i64, tpu.core_type = #tpu.core_type<tc>, window_params = [{transform_indices = @transform_0, window_bounds = array<i64: 1, 1, 16, 512>}, {transform_indices = @transform_1, window_bounds = array<i64: 1, 8, 16, 512>}, {transform_indices = @transform_2, window_bounds = array<i64: 1, 1, 16, 512>}, {pipeline_mode = #tpu.pipeline_mode<synchronous>, transform_indices = @transform_3, window_bounds = array<i64: 1, 512>}, {pipeline_mode = #tpu.pipeline_mode<synchronous>, transform_indices = @transform_4, window_bounds = array<i64: 1, 512>}, {pipeline_mode = #tpu.pipeline_mode<synchronous>, transform_indices = @transform_5, window_bounds = array<i64: 512, 128>}, {pipeline_mode = #tpu.pipeline_mode<synchronous>, transform_indices = @transform_6, window_bounds = array<i64: 1, 128>}, {pipeline_mode = #tpu.pipeline_mode<synchronous>, transform_indices = @transform_7, window_bounds = array<i64: 1, 128>}, {pipeline_mode = #tpu.pipeline_mode<synchronous>, transform_indices = @transform_8, window_bounds = array<i64: 1152, 128>}, {pipeline_mode = #tpu.pipeline_mode<synchronous>, transform_indices = @transform_9, window_bounds = array<i64: 1, 128>}, {pipeline_mode = #tpu.pipeline_mode<synchronous>, transform_indices = @transform_10, window_bounds = array<i64: 1, 128>}, {pipeline_mode = #tpu.pipeline_mode<synchronous>, transform_indices = @transform_11, window_bounds = array<i64: 128, 512>}, {transform_indices = @transform_12, window_bounds = array<i64: 1, 8, 16, 512>}]} {
    %c0 = arith.constant 0 : index
    %c0_0 = arith.constant 0 : index
    %c0_1 = arith.constant 0 : index
    %c0_2 = arith.constant 0 : index
    %0 = vector.load %arg2[%c0, %c0_0, %c0_1, %c0_2] : memref<1x1x16x512xf32, #tpu.memory_space<vmem>>, vector<1x1x16x512xf32>
    %1 = vector.shape_cast %0 : vector<1x1x16x512xf32> to vector<16x512xf32>
    %c0_3 = arith.constant 0 : index
    %c0_4 = arith.constant 0 : index
    %c0_5 = arith.constant 0 : index
    %c0_6 = arith.constant 0 : index
    %2 = vector.load %arg3[%c0_3, %c0_4, %c0_5, %c0_6] : memref<1x8x16x512xf32, #tpu.memory_space<vmem>>, vector<1x8x16x512xf32>
    %3 = vector.shape_cast %2 : vector<1x8x16x512xf32> to vector<128x512xf32>
    %c0_7 = arith.constant 0 : index
    %c0_8 = arith.constant 0 : index
    %c0_9 = arith.constant 0 : index
    %c0_10 = arith.constant 0 : index
    %4 = vector.load %arg4[%c0_7, %c0_8, %c0_9, %c0_10] : memref<1x1x16x512xf32, #tpu.memory_space<vmem>>, vector<1x1x16x512xf32>
    %5 = vector.shape_cast %4 : vector<1x1x16x512xf32> to vector<16x512xf32>
    %6 = tpu.concatenate %1, %3, %5 in 0 : vector<16x512xf32>, vector<128x512xf32>, vector<16x512xf32> -> vector<160x512xf32>
    %c0_11 = arith.constant 0 : index
    %c0_12 = arith.constant 0 : index
    %7 = vector.load %arg5[%c0_11, %c0_12] : memref<1x512xf32, #tpu.memory_space<vmem>>, vector<1x512xf32>
    %8 = vector.broadcast %7 : vector<1x512xf32> to vector<160x512xf32>
    %9 = arith.mulf %6, %8 : vector<160x512xf32>
    %c0_13 = arith.constant 0 : index
    %c0_14 = arith.constant 0 : index
    %10 = vector.load %arg6[%c0_13, %c0_14] : memref<1x512xf32, #tpu.memory_space<vmem>>, vector<1x512xf32>
    %11 = vector.broadcast %10 : vector<1x512xf32> to vector<160x512xf32>
    %12 = arith.addf %9, %11 : vector<160x512xf32>
    %cst = arith.constant 0.000000e+00 : f32
    %13 = vector.broadcast %cst : f32 to vector<160x512xf32>
    %14 = arith.maximumf %12, %13 : vector<160x512xf32>
    %15 = arith.truncf %14 : vector<160x512xf32> to vector<160x512xbf16>
    %c0_15 = arith.constant 0 : index
    %c0_16 = arith.constant 0 : index
    %16 = vector.load %arg7[%c0_15, %c0_16] : memref<512x128xbf16, #tpu.memory_space<vmem>>, vector<512x128xbf16>
    %cst_17 = arith.constant dense<0.000000e+00> : vector<160x128xf32>
    %17 = tpu.matmul %15, %16, %cst_17 {dimension_numbers = #tpu.dot_dimension_numbers<[1], [0], [0], [1], [0, 0, 1, 1], [], []>} : vector<160x512xbf16>, vector<512x128xbf16>, vector<160x128xf32> -> vector<160x128xf32>
    %c0_18 = arith.constant 0 : index
    %c0_19 = arith.constant 0 : index
    %18 = vector.load %arg8[%c0_18, %c0_19] : memref<1x128xf32, #tpu.memory_space<vmem>>, vector<1x128xf32>
    %19 = vector.broadcast %18 : vector<1x128xf32> to vector<160x128xf32>
    %20 = arith.mulf %17, %19 : vector<160x128xf32>
    %c0_20 = arith.constant 0 : index
    %c0_21 = arith.constant 0 : index
    %21 = vector.load %arg9[%c0_20, %c0_21] : memref<1x128xf32, #tpu.memory_space<vmem>>, vector<1x128xf32>
    %22 = vector.broadcast %21 : vector<1x128xf32> to vector<160x128xf32>
    %23 = arith.addf %20, %22 : vector<160x128xf32>
    %cst_22 = arith.constant 0.000000e+00 : f32
    %24 = vector.broadcast %cst_22 : f32 to vector<160x128xf32>
    %25 = arith.maximumf %23, %24 : vector<160x128xf32>
    %26 = tpu.iota {dimensions = array<i32: 0>} : vector<10x16x128xi32>
    %27 = vector.shape_cast %26 : vector<10x16x128xi32> to vector<160x128xi32>
    %c8_i32 = arith.constant 8 : i32
    %28 = arith.muli %arg1, %c8_i32 : i32
    %c1_i32 = arith.constant 1 : i32
    %29 = arith.subi %28, %c1_i32 : i32
    %30 = vector.broadcast %29 : i32 to vector<160x128xi32>
    %31 = arith.addi %27, %30 : vector<160x128xi32>
    %c0_i32 = arith.constant 0 : i32
    %32 = vector.broadcast %c0_i32 : i32 to vector<160x128xi32>
    %33 = arith.cmpi sge, %31, %32 : vector<160x128xi32>
    %c16_i32 = arith.constant 16 : i32
    %34 = vector.broadcast %c16_i32 : i32 to vector<160x128xi32>
    %35 = arith.cmpi slt, %31, %34 : vector<160x128xi32>
    %36 = arith.andi %33, %35 : vector<160x128xi1>
    %cst_23 = arith.constant 0.000000e+00 : f32
    %37 = vector.broadcast %cst_23 : f32 to vector<160x128xf32>
    %38 = arith.select %36, %25, %37 : vector<160x128xi1>, vector<160x128xf32>
    %39 = arith.truncf %38 : vector<160x128xf32> to vector<160x128xbf16>
    %cst_24 = arith.constant 0.000000e+00 : bf16
    %40 = vector.broadcast %cst_24 : bf16 to vector<16x128xbf16>
    %41 = tpu.concatenate %40, %39, %40 in 0 : vector<16x128xbf16>, vector<160x128xbf16>, vector<16x128xbf16> -> vector<192x128xbf16>
    %42 = tpu.iota {dimensions = array<i32: 1>} : vector<8x16x128xi32>
    %43 = vector.shape_cast %42 : vector<8x16x128xi32> to vector<128x128xi32>
    %44 = vector.extract_strided_slice %41 {offsets = [15, 0], sizes = [128, 128], strides = [1, 1]} : vector<192x128xbf16> to vector<128x128xbf16>
    %c0_i32_25 = arith.constant 0 : i32
    %45 = vector.broadcast %c0_i32_25 : i32 to vector<128x128xi32>
    %46 = arith.cmpi eq, %43, %45 : vector<128x128xi32>
    %cst_26 = arith.constant 0.000000e+00 : f32
    %47 = arith.truncf %cst_26 : f32 to bf16
    %48 = vector.broadcast %47 : bf16 to vector<128x128xbf16>
    %49 = arith.select %46, %48, %44 : vector<128x128xi1>, vector<128x128xbf16>
    %50 = vector.extract_strided_slice %41 {offsets = [16, 0], sizes = [128, 128], strides = [1, 1]} : vector<192x128xbf16> to vector<128x128xbf16>
    %51 = vector.extract_strided_slice %41 {offsets = [17, 0], sizes = [128, 128], strides = [1, 1]} : vector<192x128xbf16> to vector<128x128xbf16>
    %c15_i32 = arith.constant 15 : i32
    %52 = vector.broadcast %c15_i32 : i32 to vector<128x128xi32>
    %53 = arith.cmpi eq, %43, %52 : vector<128x128xi32>
    %cst_27 = arith.constant 0.000000e+00 : f32
    %54 = arith.truncf %cst_27 : f32 to bf16
    %55 = vector.broadcast %54 : bf16 to vector<128x128xbf16>
    %56 = arith.select %53, %55, %51 : vector<128x128xi1>, vector<128x128xbf16>
    %57 = vector.extract_strided_slice %41 {offsets = [31, 0], sizes = [128, 128], strides = [1, 1]} : vector<192x128xbf16> to vector<128x128xbf16>
    %c0_i32_28 = arith.constant 0 : i32
    %58 = vector.broadcast %c0_i32_28 : i32 to vector<128x128xi32>
    %59 = arith.cmpi eq, %43, %58 : vector<128x128xi32>
    %cst_29 = arith.constant 0.000000e+00 : f32
    %60 = arith.truncf %cst_29 : f32 to bf16
    %61 = vector.broadcast %60 : bf16 to vector<128x128xbf16>
    %62 = arith.select %59, %61, %57 : vector<128x128xi1>, vector<128x128xbf16>
    %63 = vector.extract_strided_slice %41 {offsets = [32, 0], sizes = [128, 128], strides = [1, 1]} : vector<192x128xbf16> to vector<128x128xbf16>
    %64 = vector.extract_strided_slice %41 {offsets = [33, 0], sizes = [128, 128], strides = [1, 1]} : vector<192x128xbf16> to vector<128x128xbf16>
    %c15_i32_30 = arith.constant 15 : i32
    %65 = vector.broadcast %c15_i32_30 : i32 to vector<128x128xi32>
    %66 = arith.cmpi eq, %43, %65 : vector<128x128xi32>
    %cst_31 = arith.constant 0.000000e+00 : f32
    %67 = arith.truncf %cst_31 : f32 to bf16
    %68 = vector.broadcast %67 : bf16 to vector<128x128xbf16>
    %69 = arith.select %66, %68, %64 : vector<128x128xi1>, vector<128x128xbf16>
    %70 = vector.extract_strided_slice %41 {offsets = [47, 0], sizes = [128, 128], strides = [1, 1]} : vector<192x128xbf16> to vector<128x128xbf16>
    %c0_i32_32 = arith.constant 0 : i32
    %71 = vector.broadcast %c0_i32_32 : i32 to vector<128x128xi32>
    %72 = arith.cmpi eq, %43, %71 : vector<128x128xi32>
    %cst_33 = arith.constant 0.000000e+00 : f32
    %73 = arith.truncf %cst_33 : f32 to bf16
    %74 = vector.broadcast %73 : bf16 to vector<128x128xbf16>
    %75 = arith.select %72, %74, %70 : vector<128x128xi1>, vector<128x128xbf16>
    %76 = vector.extract_strided_slice %41 {offsets = [48, 0], sizes = [128, 128], strides = [1, 1]} : vector<192x128xbf16> to vector<128x128xbf16>
    %77 = vector.extract_strided_slice %41 {offsets = [49, 0], sizes = [128, 128], strides = [1, 1]} : vector<192x128xbf16> to vector<128x128xbf16>
    %c15_i32_34 = arith.constant 15 : i32
    %78 = vector.broadcast %c15_i32_34 : i32 to vector<128x128xi32>
    %79 = arith.cmpi eq, %43, %78 : vector<128x128xi32>
    %cst_35 = arith.constant 0.000000e+00 : f32
    %80 = arith.truncf %cst_35 : f32 to bf16
    %81 = vector.broadcast %80 : bf16 to vector<128x128xbf16>
    %82 = arith.select %79, %81, %77 : vector<128x128xi1>, vector<128x128xbf16>
    %83 = tpu.concatenate %49, %50, %56, %62, %63, %69, %75, %76, %82 in 1 : vector<128x128xbf16>, vector<128x128xbf16>, vector<128x128xbf16>, vector<128x128xbf16>, vector<128x128xbf16>, vector<128x128xbf16>, vector<128x128xbf16>, vector<128x128xbf16>, vector<128x128xbf16> -> vector<128x1152xbf16>
    %c0_36 = arith.constant 0 : index
    %c0_37 = arith.constant 0 : index
    %84 = vector.load %arg10[%c0_36, %c0_37] : memref<1152x128xbf16, #tpu.memory_space<vmem>>, vector<1152x128xbf16>
    %cst_38 = arith.constant dense<0.000000e+00> : vector<128x128xf32>
    %85 = tpu.matmul %83, %84, %cst_38 {dimension_numbers = #tpu.dot_dimension_numbers<[1], [0], [0], [1], [0, 0, 1, 1], [], []>} : vector<128x1152xbf16>, vector<1152x128xbf16>, vector<128x128xf32> -> vector<128x128xf32>
    %c0_39 = arith.constant 0 : index
    %c0_40 = arith.constant 0 : index
    %86 = vector.load %arg11[%c0_39, %c0_40] : memref<1x128xf32, #tpu.memory_space<vmem>>, vector<1x128xf32>
    %87 = vector.broadcast %86 : vector<1x128xf32> to vector<128x128xf32>
    %88 = arith.mulf %85, %87 : vector<128x128xf32>
    %c0_41 = arith.constant 0 : index
    %c0_42 = arith.constant 0 : index
    %89 = vector.load %arg12[%c0_41, %c0_42] : memref<1x128xf32, #tpu.memory_space<vmem>>, vector<1x128xf32>
    %90 = vector.broadcast %89 : vector<1x128xf32> to vector<128x128xf32>
    %91 = arith.addf %88, %90 : vector<128x128xf32>
    %cst_43 = arith.constant 0.000000e+00 : f32
    %92 = vector.broadcast %cst_43 : f32 to vector<128x128xf32>
    %93 = arith.maximumf %91, %92 : vector<128x128xf32>
    %94 = arith.truncf %93 : vector<128x128xf32> to vector<128x128xbf16>
    %c0_44 = arith.constant 0 : index
    %c0_45 = arith.constant 0 : index
    %95 = vector.load %arg13[%c0_44, %c0_45] : memref<128x512xbf16, #tpu.memory_space<vmem>>, vector<128x512xbf16>
    %cst_46 = arith.constant dense<0.000000e+00> : vector<128x512xf32>
    %96 = tpu.matmul %94, %95, %cst_46 {dimension_numbers = #tpu.dot_dimension_numbers<[1], [0], [0], [1], [0, 0, 1, 1], [], []>} : vector<128x128xbf16>, vector<128x512xbf16>, vector<128x512xf32> -> vector<128x512xf32>
    %97 = arith.addf %96, %3 : vector<128x512xf32>
    %98 = vector.shape_cast %97 : vector<128x512xf32> to vector<1x8x16x512xf32>
    %c0_47 = arith.constant 0 : index
    %c0_48 = arith.constant 0 : index
    %c0_49 = arith.constant 0 : index
    %c0_50 = arith.constant 0 : index
    %99 = vector.load %arg14[%c0_47, %c0_48, %c0_49, %c0_50] : memref<1x8x16x512xf32, #tpu.memory_space<vmem>>, vector<1x8x16x512xf32>
    tpu.vector_store %arg14[%c0_47, %c0_48, %c0_49, %c0_50], %98 {strides = array<i32>} : memref<1x8x16x512xf32, #tpu.memory_space<vmem>>, vector<1x8x16x512xf32>,
    return
  }
  func.func @transform_0(%arg0: i32, %arg1: i32) -> (i32, i32, i32, i32) {
    %c8_i32 = arith.constant 8 : i32
    %0 = arith.muli %arg1, %c8_i32 : i32
    %c1_i32 = arith.constant 1 : i32
    %1 = arith.subi %0, %c1_i32 : i32
    %c0_i32 = arith.constant 0 : i32
    %2 = arith.maxsi %1, %c0_i32 : i32
    %c0_i32_0 = arith.constant 0 : i32
    %c0_i32_1 = arith.constant 0 : i32
    %c0_i32_2 = arith.constant 0 : i32
    return %arg0, %2, %c0_i32_0, %c0_i32_1 : i32, i32, i32, i32
  }
  func.func @transform_1(%arg0: i32, %arg1: i32) -> (i32, i32, i32, i32) {
    %c0_i32 = arith.constant 0 : i32
    %c0_i32_0 = arith.constant 0 : i32
    %c0_i32_1 = arith.constant 0 : i32
    return %arg0, %arg1, %c0_i32, %c0_i32_0 : i32, i32, i32, i32
  }
  func.func @transform_2(%arg0: i32, %arg1: i32) -> (i32, i32, i32, i32) {
    %c1_i32 = arith.constant 1 : i32
    %0 = arith.addi %arg1, %c1_i32 : i32
    %c8_i32 = arith.constant 8 : i32
    %1 = arith.muli %0, %c8_i32 : i32
    %c15_i32 = arith.constant 15 : i32
    %2 = arith.minsi %1, %c15_i32 : i32
    %c0_i32 = arith.constant 0 : i32
    %c0_i32_0 = arith.constant 0 : i32
    %c0_i32_1 = arith.constant 0 : i32
    return %arg0, %2, %c0_i32, %c0_i32_0 : i32, i32, i32, i32
  }
  func.func @transform_3(%arg0: i32, %arg1: i32) -> (i32, i32) {
    %c0_i32 = arith.constant 0 : i32
    %c0_i32_0 = arith.constant 0 : i32
    %c0_i32_1 = arith.constant 0 : i32
    return %c0_i32, %c0_i32_0 : i32, i32
  }
  func.func @transform_4(%arg0: i32, %arg1: i32) -> (i32, i32) {
    %c0_i32 = arith.constant 0 : i32
    %c0_i32_0 = arith.constant 0 : i32
    %c0_i32_1 = arith.constant 0 : i32
    return %c0_i32, %c0_i32_0 : i32, i32
  }
  func.func @transform_5(%arg0: i32, %arg1: i32) -> (i32, i32) {
    %c0_i32 = arith.constant 0 : i32
    %c0_i32_0 = arith.constant 0 : i32
    %c0_i32_1 = arith.constant 0 : i32
    return %c0_i32, %c0_i32_0 : i32, i32
  }
  func.func @transform_6(%arg0: i32, %arg1: i32) -> (i32, i32) {
    %c0_i32 = arith.constant 0 : i32
    %c0_i32_0 = arith.constant 0 : i32
    %c0_i32_1 = arith.constant 0 : i32
    return %c0_i32, %c0_i32_0 : i32, i32
  }
  func.func @transform_7(%arg0: i32, %arg1: i32) -> (i32, i32) {
    %c0_i32 = arith.constant 0 : i32
    %c0_i32_0 = arith.constant 0 : i32
    %c0_i32_1 = arith.constant 0 : i32
    return %c0_i32, %c0_i32_0 : i32, i32
  }
  func.func @transform_8(%arg0: i32, %arg1: i32) -> (i32, i32) {
    %c0_i32 = arith.constant 0 : i32
    %c0_i32_0 = arith.constant 0 : i32
    %c0_i32_1 = arith.constant 0 : i32
    return %c0_i32, %c0_i32_0 : i32, i32
  }
  func.func @transform_9(%arg0: i32, %arg1: i32) -> (i32, i32) {
    %c0_i32 = arith.constant 0 : i32
    %c0_i32_0 = arith.constant 0 : i32
    %c0_i32_1 = arith.constant 0 : i32
    return %c0_i32, %c0_i32_0 : i32, i32
  }
  func.func @transform_10(%arg0: i32, %arg1: i32) -> (i32, i32) {
    %c0_i32 = arith.constant 0 : i32
    %c0_i32_0 = arith.constant 0 : i32
    %c0_i32_1 = arith.constant 0 : i32
    return %c0_i32, %c0_i32_0 : i32, i32
  }
  func.func @transform_11(%arg0: i32, %arg1: i32) -> (i32, i32) {
    %c0_i32 = arith.constant 0 : i32
    %c0_i32_0 = arith.constant 0 : i32
    %c0_i32_1 = arith.constant 0 : i32
    return %c0_i32, %c0_i32_0 : i32, i32
  }
  func.func @transform_12(%arg0: i32, %arg1: i32) -> (i32, i32, i32, i32) {
    %c0_i32 = arith.constant 0 : i32
    %c0_i32_0 = arith.constant 0 : i32
    %c0_i32_1 = arith.constant 0 : i32
    return %arg0, %arg1, %c0_i32, %c0_i32_0 : i32, i32, i32, i32
  }
}

</mosaic_0001>

<llo_original>
// kernel: bottleneck_v2_forward.1
$region0: #{bottleneck_v2_forward.1}
  #allocation0 [shape = 'u32[]', space=smem, size = 0x4, offset = 0x4, fixed_abs, tag = 'smem constant byte address 0x4 - core index']
  #allocation1 [shape = 'u32[144,128]{1,0:T(1,128)}', space=vmem, size = 0x12000, scoped, tag = 'internal scratch']
  %s0 = inlined_call_operand.hbm [shape: f32[2,16,16,512], index: 0, kind: input, shape index: {}, may-alias: {0,1,2}]
  %s1 = inlined_call_operand.hbm [shape: f32[2,16,16,512], index: 1, kind: input, shape index: {}, may-alias: {0,1,2}]
  %s2 = inlined_call_operand.hbm [shape: f32[2,16,16,512], index: 2, kind: input, shape index: {}, may-alias: {0,1,2}]
  %s3 = inlined_call_operand.hbm [shape: f32[1,512], index: 3, kind: input, shape index: {}]
  %s4 = inlined_call_operand.hbm [shape: f32[1,512], index: 4, kind: input, shape index: {}]
  %s5 = inlined_call_operand.hbm [shape: bf16[512,128], index: 5, kind: input, shape index: {}]
  %s6 = inlined_call_operand.vmem [shape: f32[1,128], index: 6, kind: input, shape index: {}]
  %s7 = inlined_call_operand.vmem [shape: f32[1,128], index: 7, kind: input, shape index: {}]
  %s8 = inlined_call_operand.hbm [shape: bf16[1152,128], index: 8, kind: input, shape index: {}]
  %s9 = inlined_call_operand.vmem [shape: f32[1,128], index: 9, kind: input, shape index: {}]
  %s10 = inlined_call_operand.vmem [shape: f32[1,128], index: 10, kind: input, shape index: {}]
  %s11 = inlined_call_operand.hbm [shape: bf16[128,512], index: 11, kind: input, shape index: {}]
  %s12 = inlined_call_operand.hbm [shape: f32[2,16,16,512], index: 12, kind: output, shape index: {}]
  %s13 = sld [smem:[#allocation0]]
  $region113: #{bottleneck_v2_forward.1} parent=0
    _
  %s15 = ssub.s32 1, %s13
  %s16 = scalar_select 0, %s15, %s13
  $region1: #{bottleneck_v2_forward.1} parent=0
    #allocation2 [shape = 'u8[65536]{0}', space=vmem, size = 0x10000, scoped, tag = 'input window, operand 0']
    #allocation3 [shape = 's32[2]{0}', space=sflag, size = 0x8, scoped, tag = 'scoped memory for bottleneck_v2_forward.1']
    #allocation4 [shape = 's32[2]{0}', space=sflag, size = 0x8, scoped, tag = 'scoped memory for bottleneck_v2_forward.1']
    #allocation5 [shape = 'u8[524288]{0}', space=vmem, size = 0x80000, scoped, tag = 'input window, operand 1']
    #allocation6 [shape = 's32[2]{0}', space=sflag, size = 0x8, scoped, tag = 'scoped memory for bottleneck_v2_forward.1']
    #allocation7 [shape = 'u8[65536]{0}', space=vmem, size = 0x10000, scoped, tag = 'input window, operand 2']
    #allocation8 [shape = 'u8[2048]{0}', space=vmem, size = 0x800, scoped, tag = 'input window, operand 3, single buffered']
    #allocation9 [shape = 's32[1]{0}', space=sflag, size = 0x4, scoped, tag = 'scoped memory for bottleneck_v2_forward.1']
    #allocation10 [shape = 'u8[2048]{0}', space=vmem, size = 0x800, scoped, tag = 'input window, operand 4, single buffered']
    #allocation11 [shape = 'u8[131072]{0}', space=vmem, size = 0x20000, scoped, tag = 'input window, operand 5, single buffered']
    #allocation12 [shape = 's32[1]{0}', space=sflag, size = 0x4, scoped, tag = 'scoped memory for bottleneck_v2_forward.1']
    #allocation13 [shape = 'u8[294912]{0}', space=vmem, size = 0x48000, scoped, tag = 'input window, operand 8, single buffered']
    #allocation14 [shape = 'u8[131072]{0}', space=vmem, size = 0x20000, scoped, tag = 'input window, operand 11, single buffered']
    #allocation15 [shape = 's32[1]{0}', space=sflag, size = 0x4, scoped, tag = 'scoped memory for bottleneck_v2_forward.1']
    #allocation16 [shape = 'u8[524288]{0}', space=vmem, size = 0x80000, scoped, tag = 'output window, operand 0']
    %17 = vsyncpa [#allocation3], 0
    %s18 = scalar_lea.sflag [#allocation3], 1
    %19 = vsyncpa %s18, 0
    %20 = vsyncpa [#allocation6], 0
    %s21 = scalar_lea.sflag [#allocation6], 1
    %22 = vsyncpa %s21, 0
    %23 = vsyncpa [#allocation9], 0
    %24 = vsyncpa [#allocation12], 0
    %25 = vsyncpa [#allocation15], 0
    %26 = vsyncpa [#allocation4], 0
    %s27 = scalar_lea.sflag [#allocation4], 1
    %28 = vsyncpa %s27, 0
    loop: start=0, step=1, limit=6
    $region2: #{bottleneck_v2_forward.1} parent=1 // loop_pre_header
      _
    $region3: #{bottleneck_v2_forward.1} parent=1 // loop_header
      %s30 = sphi 0, %s34
      %p31 = scmp.ge.s32.totalorder %s30, 6
      %s37 = sphi 0, %s49
      %s38 = sphi 0, %s45
      %s39 = sphi 0, %s37
      %s40 = sphi 0, %s38
      %s41 = sphi 0, %s39
      %s42 = sphi 0, %s40
      %s62 = sphi 0, %s64
      %s65 = sphi 0, %s62
      %s66 = sphi 0, %s65
      %s82 = sphi 0, %s66
      %s90 = sphi 0, %s92
      %s93 = sphi 0, %s90
      %s94 = sphi 0, %s93
      %s110 = sphi 0, %s94
      %s126 = sphi 0, %s128
      %s129 = sphi 0, %s126
      %s130 = sphi 0, %s129
      %s146 = sphi 0, %s130
      %s150 = sphi 0, %s150
      %s152 = sphi 0, %s150
      %s153 = sphi 0, %s152
      %s167 = sphi 0, %s153
      %s171 = sphi 0, %s171
      %s173 = sphi 0, %s171
      %s174 = sphi 0, %s173
      %s188 = sphi 0, %s174
      %s192 = sphi 0, %s192
      %s194 = sphi 0, %s192
      %s195 = sphi 0, %s194
      %s209 = sphi 0, %s195
      %s213 = sphi 0, %s213
      %s215 = sphi 0, %s213
      %s216 = sphi 0, %s215
      %s230 = sphi 0, %s216
      %s234 = sphi 0, %s234
      %s236 = sphi 0, %s234
      %s237 = sphi 0, %s236
      %s251 = sphi 0, %s237
      %s255 = sphi 0, %s255
      %s257 = sphi 0, %s255
      %s258 = sphi 0, %s257
      %s272 = sphi 0, %s258
      %s276 = sphi 0, %s276
      %s278 = sphi 0, %s276
      %s279 = sphi 0, %s278
      %s293 = sphi 0, %s279
      %s297 = sphi 0, %s297
      %s299 = sphi 0, %s297
      %s300 = sphi 0, %s299
      %s314 = sphi 0, %s300
      %s318 = sphi 0, %s318
      %s320 = sphi 0, %s318
      %s321 = sphi 0, %s320
      %s335 = sphi 0, %s321
      %s343 = sphi 0, %s345
      %s346 = sphi 0, %s343
      %s347 = sphi 0, %s346
      %s363 = sphi 0, %s347
    $region4: #{bottleneck_v2_forward.1} parent=1 // loop_header_branch
      %33 = sbr.rel (%p31) target = $region8
    $region5: #{bottleneck_v2_forward.1} parent=1 // loop_body
      %s35 = ssub.s32 %s30, 1
      %s36 = ssub.s32 %s30, 2
      %s43 = sadd.s32 1, %s38
      %p44 = scmp.ge.s32.totalorder %s43, 2
      %s45 = scalar_select %p44, 0, %s43
      %s46 = sadd.s32 1, %s37
      %s47 = scalar_select %p44, %s46, %s37
      %p48 = scmp.ge.s32.totalorder %s47, 2
      %s49 = scalar_select %p48, 0, %s47
      %s50 = smul.u32 %s38, 8
      %s51 = ssub.s32 %s50, 1
      %p52 = scmp.gt.s32.totalorder %s51, 0
      %s53 = scalar_select %p52, %s51, 0
      %s54 = smul.u32 %s45, 8
      %s55 = ssub.s32 %s54, 1
      %p56 = scmp.gt.s32.totalorder %s55, 0
      %s57 = scalar_select %p56, %s55, 0
      %s58 = ssub.s32 %s37, %s49
      %s59 = ssub.s32 %s53, %s57
      %s60 = sor.u32 %s58, %s59
      %p61 = scmp.eq.s32.totalorder %s60, 0
      %s63 = sadd.s32 %s62, 1
      %s64 = scalar_select %p61, %s62, %s63
      %p67 = pneg %p61
      %p68 = scmp.eq.s32.totalorder %s30, 3
      %p69 = por %p67, %p68
      %p70 = scmp.ne.s32.totalorder %s62, %s65
      %p71 = scmp.eq.s32.totalorder %s30, 0
      %p72 = por %p70, %p71
      %p73 = scmp.ne.s32.totalorder %s62, %s65
      %p74 = scmp.eq.s32.totalorder %s35, 3
      %p75 = por %p73, %p74
      %p76 = scmp.ne.s32.totalorder %s65, %s66
      %p77 = scmp.eq.s32.totalorder %s35, 0
      %p78 = por %p76, %p77
      %p79 = scmp.ne.s32.totalorder %s65, %s66
      %p80 = scmp.eq.s32.totalorder %s36, 3
      %p81 = por %p79, %p80
      %p83 = scmp.ne.s32.totalorder %s66, %s82
      %p84 = scmp.eq.s32.totalorder %s36, 0
      %p85 = por %p83, %p84
      %s86 = ssub.s32 %s37, %s49
      %s87 = ssub.s32 %s38, %s45
      %s88 = sor.u32 %s86, %s87
      %p89 = scmp.eq.s32.totalorder %s88, 0
      %s91 = sadd.s32 %s90, 1
      %s92 = scalar_select %p89, %s90, %s91
      %p95 = pneg %p89
      %p96 = scmp.eq.s32.totalorder %s30, 3
      %p97 = por %p95, %p96
      %p98 = scmp.ne.s32.totalorder %s90, %s93
      %p99 = scmp.eq.s32.totalorder %s30, 0
      %p100 = por %p98, %p99
      %p101 = scmp.ne.s32.totalorder %s90, %s93
      %p102 = scmp.eq.s32.totalorder %s35, 3
      %p103 = por %p101, %p102
      %p104 = scmp.ne.s32.totalorder %s93, %s94
      %p105 = scmp.eq.s32.totalorder %s35, 0
      %p106 = por %p104, %p105
      %p107 = scmp.ne.s32.totalorder %s93, %s94
      %p108 = scmp.eq.s32.totalorder %s36, 3
      %p109 = por %p107, %p108
      %p111 = scmp.ne.s32.totalorder %s94, %s110
      %p112 = scmp.eq.s32.totalorder %s36, 0
      %p113 = por %p111, %p112
      %s114 = sadd.s32 %s38, 1
      %s115 = smul.u32 %s114, 8
      %p116 = scmp.lt.s32.totalorder %s115, 15
      %s117 = scalar_select %p116, %s115, 15
      %s118 = sadd.s32 %s45, 1
      %s119 = smul.u32 %s118, 8
      %p120 = scmp.lt.s32.totalorder %s119, 15
      %s121 = scalar_select %p120, %s119, 15
      %s122 = ssub.s32 %s37, %s49
      %s123 = ssub.s32 %s117, %s121
      %s124 = sor.u32 %s122, %s123
      %p125 = scmp.eq.s32.totalorder %s124, 0
      %s127 = sadd.s32 %s126, 1
      %s128 = scalar_select %p125, %s126, %s127
      %p131 = pneg %p125
      %p132 = scmp.eq.s32.totalorder %s30, 3
      %p133 = por %p131, %p132
      %p134 = scmp.ne.s32.totalorder %s126, %s129
      %p135 = scmp.eq.s32.totalorder %s30, 0
      %p136 = por %p134, %p135
      %p137 = scmp.ne.s32.totalorder %s126, %s129
      %p138 = scmp.eq.s32.totalorder %s35, 3
      %p139 = por %p137, %p138
      %p140 = scmp.ne.s32.totalorder %s129, %s130
      %p141 = scmp.eq.s32.totalorder %s35, 0
      %p142 = por %p140, %p141
      %p143 = scmp.ne.s32.totalorder %s129, %s130
      %p144 = scmp.eq.s32.totalorder %s36, 3
      %p145 = por %p143, %p144
      %p147 = scmp.ne.s32.totalorder %s130, %s146
      %p148 = scmp.eq.s32.totalorder %s36, 0
      %p149 = por %p147, %p148
      %s151 = sadd.s32 %s150, 1
      %p154 = scmp.eq.s32.totalorder %s30, 3
      %p155 = scmp.ne.s32.totalorder %s150, %s152
      %p156 = scmp.eq.s32.totalorder %s30, 0
      %p157 = por %p155, %p156
      %p158 = scmp.ne.s32.totalorder %s150, %s152
      %p159 = scmp.eq.s32.totalorder %s35, 3
      %p160 = por %p158, %p159
      %p161 = scmp.ne.s32.totalorder %s152, %s153
      %p162 = scmp.eq.s32.totalorder %s35, 0
      %p163 = por %p161, %p162
      %p164 = scmp.ne.s32.totalorder %s152, %s153
      %p165 = scmp.eq.s32.totalorder %s36, 3
      %p166 = por %p164, %p165
      %p168 = scmp.ne.s32.totalorder %s153, %s167
      %p169 = scmp.eq.s32.totalorder %s36, 0
      %p170 = por %p168, %p169
      %s172 = sadd.s32 %s171, 1
      %p175 = scmp.eq.s32.totalorder %s30, 3
      %p176 = scmp.ne.s32.totalorder %s171, %s173
      %p177 = scmp.eq.s32.totalorder %s30, 0
      %p178 = por %p176, %p177
      %p179 = scmp.ne.s32.totalorder %s171, %s173
      %p180 = scmp.eq.s32.totalorder %s35, 3
      %p181 = por %p179, %p180
      %p182 = scmp.ne.s32.totalorder %s173, %s174
      %p183 = scmp.eq.s32.totalorder %s35, 0
      %p184 = por %p182, %p183
      %p185 = scmp.ne.s32.totalorder %s173, %s174
      %p186 = scmp.eq.s32.totalorder %s36, 3
      %p187 = por %p185, %p186
      %p189 = scmp.ne.s32.totalorder %s174, %s188
      %p190 = scmp.eq.s32.totalorder %s36, 0
      %p191 = por %p189, %p190
      %s193 = sadd.s32 %s192, 1
      %p196 = scmp.eq.s32.totalorder %s30, 3
      %p197 = scmp.ne.s32.totalorder %s192, %s194
      %p198 = scmp.eq.s32.totalorder %s30, 0
      %p199 = por %p197, %p198
      %p200 = scmp.ne.s32.totalorder %s192, %s194
      %p201 = scmp.eq.s32.totalorder %s35, 3
      %p202 = por %p200, %p201
      %p203 = scmp.ne.s32.totalorder %s194, %s195
      %p204 = scmp.eq.s32.totalorder %s35, 0
      %p205 = por %p203, %p204
      %p206 = scmp.ne.s32.totalorder %s194, %s195
      %p207 = scmp.eq.s32.totalorder %s36, 3
      %p208 = por %p206, %p207
      %p210 = scmp.ne.s32.totalorder %s195, %s209
      %p211 = scmp.eq.s32.totalorder %s36, 0
      %p212 = por %p210, %p211
      %s214 = sadd.s32 %s213, 1
      %p217 = scmp.eq.s32.totalorder %s30, 3
      %p218 = scmp.ne.s32.totalorder %s213, %s215
      %p219 = scmp.eq.s32.totalorder %s30, 0
      %p220 = por %p218, %p219
      %p221 = scmp.ne.s32.totalorder %s213, %s215
      %p222 = scmp.eq.s32.totalorder %s35, 3
      %p223 = por %p221, %p222
      %p224 = scmp.ne.s32.totalorder %s215, %s216
      %p225 = scmp.eq.s32.totalorder %s35, 0
      %p226 = por %p224, %p225
      %p227 = scmp.ne.s32.totalorder %s215, %s216
      %p228 = scmp.eq.s32.totalorder %s36, 3
      %p229 = por %p227, %p228
      %p231 = scmp.ne.s32.totalorder %s216, %s230
      %p232 = scmp.eq.s32.totalorder %s36, 0
      %p233 = por %p231, %p232
      %s235 = sadd.s32 %s234, 1
      %p238 = scmp.eq.s32.totalorder %s30, 3
      %p239 = scmp.ne.s32.totalorder %s234, %s236
      %p240 = scmp.eq.s32.totalorder %s30, 0
      %p241 = por %p239, %p240
      %p242 = scmp.ne.s32.totalorder %s234, %s236
      %p243 = scmp.eq.s32.totalorder %s35, 3
      %p244 = por %p242, %p243
      %p245 = scmp.ne.s32.totalorder %s236, %s237
      %p246 = scmp.eq.s32.totalorder %s35, 0
      %p247 = por %p245, %p246
      %p248 = scmp.ne.s32.totalorder %s236, %s237
      %p249 = scmp.eq.s32.totalorder %s36, 3
      %p250 = por %p248, %p249
      %p252 = scmp.ne.s32.totalorder %s237, %s251
      %p253 = scmp.eq.s32.totalorder %s36, 0
      %p254 = por %p252, %p253
      %s256 = sadd.s32 %s255, 1
      %p259 = scmp.eq.s32.totalorder %s30, 3
      %p260 = scmp.ne.s32.totalorder %s255, %s257
      %p261 = scmp.eq.s32.totalorder %s30, 0
      %p262 = por %p260, %p261
      %p263 = scmp.ne.s32.totalorder %s255, %s257
      %p264 = scmp.eq.s32.totalorder %s35, 3
      %p265 = por %p263, %p264
      %p266 = scmp.ne.s32.totalorder %s257, %s258
      %p267 = scmp.eq.s32.totalorder %s35, 0
      %p268 = por %p266, %p267
      %p269 = scmp.ne.s32.totalorder %s257, %s258
      %p270 = scmp.eq.s32.totalorder %s36, 3
      %p271 = por %p269, %p270
      %p273 = scmp.ne.s32.totalorder %s258, %s272
      %p274 = scmp.eq.s32.totalorder %s36, 0
      %p275 = por %p273, %p274
      %s277 = sadd.s32 %s276, 1
      %p280 = scmp.eq.s32.totalorder %s30, 3
      %p281 = scmp.ne.s32.totalorder %s276, %s278
      %p282 = scmp.eq.s32.totalorder %s30, 0
      %p283 = por %p281, %p282
      %p284 = scmp.ne.s32.totalorder %s276, %s278
      %p285 = scmp.eq.s32.totalorder %s35, 3
      %p286 = por %p284, %p285
      %p287 = scmp.ne.s32.totalorder %s278, %s279
      %p288 = scmp.eq.s32.totalorder %s35, 0
      %p289 = por %p287, %p288
      %p290 = scmp.ne.s32.totalorder %s278, %s279
      %p291 = scmp.eq.s32.totalorder %s36, 3
      %p292 = por %p290, %p291
      %p294 = scmp.ne.s32.totalorder %s279, %s293
      %p295 = scmp.eq.s32.totalorder %s36, 0
      %p296 = por %p294, %p295
      %s298 = sadd.s32 %s297, 1
      %p301 = scmp.eq.s32.totalorder %s30, 3
      %p302 = scmp.ne.s32.totalorder %s297, %s299
      %p303 = scmp.eq.s32.totalorder %s30, 0
      %p304 = por %p302, %p303
      %p305 = scmp.ne.s32.totalorder %s297, %s299
      %p306 = scmp.eq.s32.totalorder %s35, 3
      %p307 = por %p305, %p306
      %p308 = scmp.ne.s32.totalorder %s299, %s300
      %p309 = scmp.eq.s32.totalorder %s35, 0
      %p310 = por %p308, %p309
      %p311 = scmp.ne.s32.totalorder %s299, %s300
      %p312 = scmp.eq.s32.totalorder %s36, 3
      %p313 = por %p311, %p312
      %p315 = scmp.ne.s32.totalorder %s300, %s314
      %p316 = scmp.eq.s32.totalorder %s36, 0
      %p317 = por %p315, %p316
      %s319 = sadd.s32 %s318, 1
      %p322 = scmp.eq.s32.totalorder %s30, 3
      %p323 = scmp.ne.s32.totalorder %s318, %s320
      %p324 = scmp.eq.s32.totalorder %s30, 0
      %p325 = por %p323, %p324
      %p326 = scmp.ne.s32.totalorder %s318, %s320
      %p327 = scmp.eq.s32.totalorder %s35, 3
      %p328 = por %p326, %p327
      %p329 = scmp.ne.s32.totalorder %s320, %s321
      %p330 = scmp.eq.s32.totalorder %s35, 0
      %p331 = por %p329, %p330
      %p332 = scmp.ne.s32.totalorder %s320, %s321
      %p333 = scmp.eq.s32.totalorder %s36, 3
      %p334 = por %p332, %p333
      %p336 = scmp.ne.s32.totalorder %s321, %s335
      %p337 = scmp.eq.s32.totalorder %s36, 0
      %p338 = por %p336, %p337
      %s339 = ssub.s32 %s37, %s49
      %s340 = ssub.s32 %s38, %s45
      %s341 = sor.u32 %s339, %s340
      %p342 = scmp.eq.s32.totalorder %s341, 0
      %s344 = sadd.s32 %s343, 1
      %s345 = scalar_select %p342, %s343, %s344
      %p348 = pneg %p342
      %p349 = scmp.eq.s32.totalorder %s30, 3
      %p350 = por %p348, %p349
      %p351 = scmp.ne.s32.totalorder %s343, %s346
      %p352 = scmp.eq.s32.totalorder %s30, 0
      %p353 = por %p351, %p352
      %p354 = scmp.ne.s32.totalorder %s343, %s346
      %p355 = scmp.eq.s32.totalorder %s35, 3
      %p356 = por %p354, %p355
      %p357 = scmp.ne.s32.totalorder %s346, %s347
      %p358 = scmp.eq.s32.totalorder %s35, 0
      %p359 = por %p357, %p358
      %p360 = scmp.ne.s32.totalorder %s346, %s347
      %p361 = scmp.eq.s32.totalorder %s36, 3
      %p362 = por %p360, %p361
      %p364 = scmp.ne.s32.totalorder %s347, %s363
      %p365 = scmp.eq.s32.totalorder %s36, 0
      %p366 = por %p364, %p365
      %p367 = scmp.le.s32.totalorder 1, %s30
      %p368 = scmp.lt.s32.totalorder %s30, 5
      %p369 = pnand %p367, %p368
      %p370 = pneg %p369
      // Predicated region
      $region9: #{bottleneck_v2_forward.1} parent=5 // pred_check
        _
      $region10: #{bottleneck_v2_forward.1} parent=5 // pred_check_branch
        %372 = sbr.rel (%p369) target = $region12
      $region11: #{bottleneck_v2_forward.1} parent=5 // pred_region
        %s373 = ssub.s32 %s30, 1
        // Predicated region
        $region13: #{bottleneck_v2_forward.1} parent=11 // pred_check
          %p374 = pneg %p163
        $region14: #{bottleneck_v2_forward.1} parent=11 // pred_check_branch
          %376 = sbr.rel (%p374) target = $region16
        $region15: #{bottleneck_v2_forward.1} parent=11 // pred_region
          %s378 = ssub.s32 64, 64
          %379 = vsyncadd [#allocation9], %s378
          %s381 = sshll.u32 [#allocation8], 4
          %s382 = int_to_ptr.vmem [resolvable:$true] %s381
          %384 = dma.hbm_to_vmem [thread:$0]  %s3, 64, %s382, [#allocation9]
        $region16: #{bottleneck_v2_forward.1} parent=11 // pred_fallthru
          _
        // Predicated region
        $region17: #{bottleneck_v2_forward.1} parent=11 // pred_check
          %p385 = pneg %p184
        $region18: #{bottleneck_v2_forward.1} parent=11 // pred_check_branch
          %387 = sbr.rel (%p385) target = $region20
        $region19: #{bottleneck_v2_forward.1} parent=11 // pred_region
          %s389 = ssub.s32 64, 64
          %390 = vsyncadd [#allocation9], %s389
          %s392 = sshll.u32 [#allocation10], 4
          %s393 = int_to_ptr.vmem [resolvable:$true] %s392
          %395 = dma.hbm_to_vmem [thread:$0]  %s4, 64, %s393, [#allocation9]
        $region20: #{bottleneck_v2_forward.1} parent=11 // pred_fallthru
          _
        // Predicated region
        $region21: #{bottleneck_v2_forward.1} parent=11 // pred_check
          %p396 = pneg %p205
        $region22: #{bottleneck_v2_forward.1} parent=11 // pred_check_branch
          %398 = sbr.rel (%p396) target = $region24
        $region23: #{bottleneck_v2_forward.1} parent=11 // pred_region
          %s400 = ssub.s32 4096, 4096
          %401 = vsyncadd [#allocation12], %s400
          %s402 = sshll.u32 [#allocation11], 4
          %s403 = int_to_ptr.vmem [resolvable:$true] %s402
          %408 = dma.hbm_to_vmem [thread:$0]  %s5, 4096, %s403, [#allocation12], 64, 64, 4
        $region24: #{bottleneck_v2_forward.1} parent=11 // pred_fallthru
          _
        // Predicated region
        $region25: #{bottleneck_v2_forward.1} parent=11 // pred_check
          %p409 = pneg %p226
        $region26: #{bottleneck_v2_forward.1} parent=11 // pred_check_branch
          %411 = sbr.rel (%p409) target = $region28
        $region27: #{bottleneck_v2_forward.1} parent=11 // pred_region
          _
        $region28: #{bottleneck_v2_forward.1} parent=11 // pred_fallthru
          _
        // Predicated region
        $region29: #{bottleneck_v2_forward.1} parent=11 // pred_check
          %p412 = pneg %p247
        $region30: #{bottleneck_v2_forward.1} parent=11 // pred_check_branch
          %414 = sbr.rel (%p412) target = $region32
        $region31: #{bottleneck_v2_forward.1} parent=11 // pred_region
          _
        $region32: #{bottleneck_v2_forward.1} parent=11 // pred_fallthru
          _
        // Predicated region
        $region33: #{bottleneck_v2_forward.1} parent=11 // pred_check
          %p415 = pneg %p268
        $region34: #{bottleneck_v2_forward.1} parent=11 // pred_check_branch
          %417 = sbr.rel (%p415) target = $region36
        $region35: #{bottleneck_v2_forward.1} parent=11 // pred_region
          %s419 = ssub.s32 9216, 9216
          %420 = vsyncadd [#allocation12], %s419
          %s421 = sshll.u32 [#allocation13], 4
          %s422 = int_to_ptr.vmem [resolvable:$true] %s421
          %427 = dma.hbm_to_vmem [thread:$0]  %s8, 9216, %s422, [#allocation12], 64, 64, 4
        $region36: #{bottleneck_v2_forward.1} parent=11 // pred_fallthru
          _
        // Predicated region
        $region37: #{bottleneck_v2_forward.1} parent=11 // pred_check
          %p428 = pneg %p289
        $region38: #{bottleneck_v2_forward.1} parent=11 // pred_check_branch
          %430 = sbr.rel (%p428) target = $region40
        $region39: #{bottleneck_v2_forward.1} parent=11 // pred_region
          _
        $region40: #{bottleneck_v2_forward.1} parent=11 // pred_fallthru
          _
        // Predicated region
        $region41: #{bottleneck_v2_forward.1} parent=11 // pred_check
          %p431 = pneg %p310
        $region42: #{bottleneck_v2_forward.1} parent=11 // pred_check_branch
          %433 = sbr.rel (%p431) target = $region44
        $region43: #{bottleneck_v2_forward.1} parent=11 // pred_region
          _
        $region44: #{bottleneck_v2_forward.1} parent=11 // pred_fallthru
          _
        // Predicated region
        $region45: #{bottleneck_v2_forward.1} parent=11 // pred_check
          %p434 = pneg %p331
        $region46: #{bottleneck_v2_forward.1} parent=11 // pred_check_branch
          %436 = sbr.rel (%p434) target = $region48
        $region47: #{bottleneck_v2_forward.1} parent=11 // pred_region
          %s438 = ssub.s32 4096, 4096
          %439 = vsyncadd [#allocation15], %s438
          %s440 = sshll.u32 [#allocation14], 4
          %s441 = int_to_ptr.vmem [resolvable:$true] %s440
          %446 = dma.hbm_to_vmem [thread:$0]  %s11, 4096, %s441, [#allocation15], 256, 256, 16
        $region48: #{bottleneck_v2_forward.1} parent=11 // pred_fallthru
          _
      $region12: #{bottleneck_v2_forward.1} parent=5 // pred_fallthru
        _
      %p447 = scmp.lt.s32.totalorder %s30, 4
      // Predicated region
      $region49: #{bottleneck_v2_forward.1} parent=5 // pred_check
        %p448 = pneg %p447
      $region50: #{bottleneck_v2_forward.1} parent=5 // pred_check_branch
        %450 = sbr.rel (%p448) target = $region52
      $region51: #{bottleneck_v2_forward.1} parent=5 // pred_region
        // Predicated region
        $region53: #{bottleneck_v2_forward.1} parent=51 // pred_check
          %p451 = pneg %p72
        $region54: #{bottleneck_v2_forward.1} parent=51 // pred_check_branch
          %453 = sbr.rel (%p451) target = $region56
        $region55: #{bottleneck_v2_forward.1} parent=51 // pred_region
          %s454 = sand.u32 %s62, 1
          %s455 = scalar_lea.sflag [#allocation3], %s454
          %s456 = sand.u32 %s62, 1
          %s457 = smul.addr %s456, 64
          %s458 = scalar_lea.vmem [#allocation2], %s457
          %s459 = smul.u32 %s38, 8
          %s460 = ssub.s32 %s459, 1
          %p461 = scmp.gt.s32.totalorder %s460, 0
          %s462 = scalar_select %p461, %s460, 0
          %s464 = ssub.s32 1024, 1024
          %465 = vsyncadd %s455, %s464
          %s466 = smul.addr %s462, 8
          %s467 = smul.addr %s37, 128
          %s468 = sadd.s32 %s466, %s467
          %s469 = smul.addr %s468, 128
          %s470 = scalar_lea.hbm %s0, %s469
          %s471 = sshll.u32 %s458, 4
          %s472 = int_to_ptr.vmem [resolvable:$true] %s471
          %477 = dma.hbm_to_vmem [thread:$0]  %s470, 1024, %s472, %s455, 512, 512, 32
        $region56: #{bottleneck_v2_forward.1} parent=51 // pred_fallthru
          _
        // Predicated region
        $region57: #{bottleneck_v2_forward.1} parent=51 // pred_check
          %p478 = pneg %p100
        $region58: #{bottleneck_v2_forward.1} parent=51 // pred_check_branch
          %480 = sbr.rel (%p478) target = $region60
        $region59: #{bottleneck_v2_forward.1} parent=51 // pred_region
          %s481 = sand.u32 %s30, 1
          %s482 = scalar_lea.sflag [#allocation6], %s481
          %s483 = sand.u32 %s90, 1
          %s484 = smul.addr %s483, 512
          %s485 = scalar_lea.vmem [#allocation5], %s484
          %s486 = smul.u32 8, %s38
          %s488 = ssub.s32 8192, 8192
          %489 = vsyncadd %s482, %s488
          %s490 = smul.addr %s486, 8
          %s491 = smul.addr %s37, 128
          %s492 = sadd.s32 %s490, %s491
          %s493 = smul.addr %s492, 128
          %s494 = scalar_lea.hbm %s1, %s493
          %s495 = sshll.u32 %s485, 4
          %s496 = int_to_ptr.vmem [resolvable:$true] %s495
          %501 = dma.hbm_to_vmem [thread:$0]  %s494, 8192, %s496, %s482, 512, 512, 32
        $region60: #{bottleneck_v2_forward.1} parent=51 // pred_fallthru
          _
        // Predicated region
        $region61: #{bottleneck_v2_forward.1} parent=51 // pred_check
          %p502 = pneg %p136
        $region62: #{bottleneck_v2_forward.1} parent=51 // pred_check_branch
          %504 = sbr.rel (%p502) target = $region64
        $region63: #{bottleneck_v2_forward.1} parent=51 // pred_region
          %s505 = sand.u32 %s30, 1
          %s506 = scalar_lea.sflag [#allocation6], %s505
          %s507 = sand.u32 %s126, 1
          %s508 = smul.addr %s507, 64
          %s509 = scalar_lea.vmem [#allocation7], %s508
          %s510 = sadd.s32 %s38, 1
          %s511 = smul.u32 %s510, 8
          %p512 = scmp.lt.s32.totalorder %s511, 15
          %s513 = scalar_select %p512, %s511, 15
          %s515 = ssub.s32 1024, 1024
          %516 = vsyncadd %s506, %s515
          %s517 = smul.addr %s513, 8
          %s518 = smul.addr %s37, 128
          %s519 = sadd.s32 %s517, %s518
          %s520 = smul.addr %s519, 128
          %s521 = scalar_lea.hbm %s2, %s520
          %s522 = sshll.u32 %s509, 4
          %s523 = int_to_ptr.vmem [resolvable:$true] %s522
          %528 = dma.hbm_to_vmem [thread:$0]  %s521, 1024, %s523, %s506, 512, 512, 32
        $region64: #{bottleneck_v2_forward.1} parent=51 // pred_fallthru
          _
      $region52: #{bottleneck_v2_forward.1} parent=5 // pred_fallthru
        _
      %p529 = scmp.le.s32.totalorder 1, %s30
      %p530 = scmp.lt.s32.totalorder %s30, 5
      %p531 = pnand %p529, %p530
      %p532 = pneg %p531
      // Predicated region
      $region65: #{bottleneck_v2_forward.1} parent=5 // pred_check
        _
      $region66: #{bottleneck_v2_forward.1} parent=5 // pred_check_branch
        %534 = sbr.rel (%p531) target = $region68
      $region67: #{bottleneck_v2_forward.1} parent=5 // pred_region
        %s535 = ssub.s32 %s30, 1
        %s536 = sand.u32 %s65, 1
        %s537 = scalar_lea.sflag [#allocation3], %s536
        %s538 = sand.u32 %s65, 1
        %s539 = smul.addr %s538, 64
        %s540 = scalar_lea.vmem [#allocation2], %s539
        // Predicated region
        $region69: #{bottleneck_v2_forward.1} parent=67 // pred_check
          %p541 = pneg %p78
        $region70: #{bottleneck_v2_forward.1} parent=67 // pred_check_branch
          %543 = sbr.rel (%p541) target = $region72
        $region71: #{bottleneck_v2_forward.1} parent=67 // pred_region
          %544 = dma.done %s537, 1024
        $region72: #{bottleneck_v2_forward.1} parent=67 // pred_fallthru
          _
        %s545 = sand.u32 %s35, 1
        %s546 = scalar_lea.sflag [#allocation6], %s545
        %s547 = sand.u32 %s93, 1
        %s548 = smul.addr %s547, 512
        %s549 = scalar_lea.vmem [#allocation5], %s548
        // Predicated region
        $region73: #{bottleneck_v2_forward.1} parent=67 // pred_check
          %p550 = pneg %p106
        $region74: #{bottleneck_v2_forward.1} parent=67 // pred_check_branch
          %552 = sbr.rel (%p550) target = $region76
        $region75: #{bottleneck_v2_forward.1} parent=67 // pred_region
          %553 = dma.done %s546, 8192
        $region76: #{bottleneck_v2_forward.1} parent=67 // pred_fallthru
          _
        %s554 = sand.u32 %s35, 1
        %s555 = scalar_lea.sflag [#allocation6], %s554
        %s556 = sand.u32 %s129, 1
        %s557 = smul.addr %s556, 64
        %s558 = scalar_lea.vmem [#allocation7], %s557
        // Predicated region
        $region77: #{bottleneck_v2_forward.1} parent=67 // pred_check
          %p559 = pneg %p142
        $region78: #{bottleneck_v2_forward.1} parent=67 // pred_check_branch
          %561 = sbr.rel (%p559) target = $region80
        $region79: #{bottleneck_v2_forward.1} parent=67 // pred_region
          %562 = dma.done %s555, 1024
        $region80: #{bottleneck_v2_forward.1} parent=67 // pred_fallthru
          _
        // Predicated region
        $region81: #{bottleneck_v2_forward.1} parent=67 // pred_check
          %p563 = pneg %p163
        $region82: #{bottleneck_v2_forward.1} parent=67 // pred_check_branch
          %565 = sbr.rel (%p563) target = $region84
        $region83: #{bottleneck_v2_forward.1} parent=67 // pred_region
          %566 = dma.done [#allocation9], 64
        $region84: #{bottleneck_v2_forward.1} parent=67 // pred_fallthru
          _
        // Predicated region
        $region85: #{bottleneck_v2_forward.1} parent=67 // pred_check
          %p567 = pneg %p184
        $region86: #{bottleneck_v2_forward.1} parent=67 // pred_check_branch
          %569 = sbr.rel (%p567) target = $region88
        $region87: #{bottleneck_v2_forward.1} parent=67 // pred_region
          %570 = dma.done [#allocation9], 64
        $region88: #{bottleneck_v2_forward.1} parent=67 // pred_fallthru
          _
        // Predicated region
        $region89: #{bottleneck_v2_forward.1} parent=67 // pred_check
          %p571 = pneg %p205
        $region90: #{bottleneck_v2_forward.1} parent=67 // pred_check_branch
          %573 = sbr.rel (%p571) target = $region92
        $region91: #{bottleneck_v2_forward.1} parent=67 // pred_region
          %574 = dma.done [#allocation12], 4096
        $region92: #{bottleneck_v2_forward.1} parent=67 // pred_fallthru
          _
        // Predicated region
        $region93: #{bottleneck_v2_forward.1} parent=67 // pred_check
          %p575 = pneg %p268
        $region94: #{bottleneck_v2_forward.1} parent=67 // pred_check_branch
          %577 = sbr.rel (%p575) target = $region96
        $region95: #{bottleneck_v2_forward.1} parent=67 // pred_region
          %578 = dma.done [#allocation12], 9216
        $region96: #{bottleneck_v2_forward.1} parent=67 // pred_fallthru
          _
        // Predicated region
        $region97: #{bottleneck_v2_forward.1} parent=67 // pred_check
          %p579 = pneg %p331
        $region98: #{bottleneck_v2_forward.1} parent=67 // pred_check_branch
          %581 = sbr.rel (%p579) target = $region100
        $region99: #{bottleneck_v2_forward.1} parent=67 // pred_region
          %582 = dma.done [#allocation15], 4096
        $region100: #{bottleneck_v2_forward.1} parent=67 // pred_fallthru
          _
        %s583 = sand.u32 %s65, 1
        %s584 = scalar_lea.sflag [#allocation3], %s583
        %s585 = sand.u32 %s65, 1
        %s586 = smul.addr %s585, 64
        %s587 = scalar_lea.vmem [#allocation2], %s586
        %p588 = pneg %p78
        %p589 = pneg %p75
        %s590 = sand.u32 %s35, 1
        %s591 = scalar_lea.sflag [#allocation6], %s590
        %s592 = sand.u32 %s93, 1
        %s593 = smul.addr %s592, 512
        %s594 = scalar_lea.vmem [#allocation5], %s593
        %p595 = pneg %p106
        %p596 = pneg %p103
        %s597 = sand.u32 %s35, 1
        %s598 = scalar_lea.sflag [#allocation6], %s597
        %s599 = sand.u32 %s129, 1
        %s600 = smul.addr %s599, 64
        %s601 = scalar_lea.vmem [#allocation7], %s600
        %p602 = pneg %p142
        %p603 = pneg %p139
        %p604 = pneg %p163
        %p605 = pneg %p160
        %p606 = pneg %p184
        %p607 = pneg %p181
        %p608 = pneg %p205
        %p609 = pneg %p202
        %p610 = pneg %p226
        %p611 = pneg %p223
        %p612 = pneg %p247
        %p613 = pneg %p244
        %p614 = pneg %p268
        %p615 = pneg %p265
        %p616 = pneg %p289
        %p617 = pneg %p286
        %p618 = pneg %p310
        %p619 = pneg %p307
        %p620 = pneg %p331
        %p621 = pneg %p328
        %p622 = pneg %p359
        %p623 = pneg %p356
        %s624 = sand.u32 %s346, 1
        %s625 = scalar_lea.sflag [#allocation4], %s624
        %s626 = sand.u32 %s346, 1
        %s627 = smul.addr %s626, 512
        %s628 = scalar_lea.vmem [#allocation16], %s627
        %s629 = smul.u32 %s40, 8
        %s630 = ssub.s32 %s629, 1
        %p631 = scmp.gt.s32.totalorder %s630, 0
        %s632 = scalar_select %p631, %s630, 0
        %s633 = smul.u32 8, %s40
        %s634 = sadd.s32 %s40, 1
        %s635 = smul.u32 %s634, 8
        %p636 = scmp.lt.s32.totalorder %s635, 15
        %s637 = scalar_select %p636, %s635, 15
        %s638 = smul.u32 8, %s40
        %v642 = vld [vmem:[%s540] sm:$0xff]
        %v643 = vld [vmem:[%s540 + $0x8] sm:$0xff]
        %v644 = vld [vmem:[%s540 + $0x10] sm:$0xff]
        %v645 = vld [vmem:[%s540 + $0x18] sm:$0xff]
        %v646 = vld [vmem:[%s540 + $0x20] sm:$0xff]
        %v647 = vld [vmem:[%s540 + $0x28] sm:$0xff]
        %v648 = vld [vmem:[%s540 + $0x30] sm:$0xff]
        %v649 = vld [vmem:[%s540 + $0x38] sm:$0xff]
        %v650 = vld [vmem:[%s549] sm:$0xff]
        %v651 = vld [vmem:[%s549 + $0x8] sm:$0xff]
        %v652 = vld [vmem:[%s549 + $0x10] sm:$0xff]
        %v653 = vld [vmem:[%s549 + $0x18] sm:$0xff]
        %v654 = vld [vmem:[%s549 + $0x20] sm:$0xff]
        %v655 = vld [vmem:[%s549 + $0x28] sm:$0xff]
        %v656 = vld [vmem:[%s549 + $0x30] sm:$0xff]
        %v657 = vld [vmem:[%s549 + $0x38] sm:$0xff]
        %v658 = vld [vmem:[%s549 + $0x40] sm:$0xff]
        %v659 = vld [vmem:[%s549 + $0x48] sm:$0xff]
        %v660 = vld [vmem:[%s549 + $0x50] sm:$0xff]
        %v661 = vld [vmem:[%s549 + $0x58] sm:$0xff]
        %v662 = vld [vmem:[%s549 + $0x60] sm:$0xff]
        %v663 = vld [vmem:[%s549 + $0x68] sm:$0xff]
        %v664 = vld [vmem:[%s549 + $0x70] sm:$0xff]
        %v665 = vld [vmem:[%s549 + $0x78] sm:$0xff]
        %v666 = vld [vmem:[%s549 + $0x80] sm:$0xff]
        %v667 = vld [vmem:[%s549 + $0x88] sm:$0xff]
        %v668 = vld [vmem:[%s549 + $0x90] sm:$0xff]
        %v669 = vld [vmem:[%s549 + $0x98] sm:$0xff]
        %v670 = vld [vmem:[%s549 + $0xa0] sm:$0xff]
        %v671 = vld [vmem:[%s549 + $0xa8] sm:$0xff]
        %v672 = vld [vmem:[%s549 + $0xb0] sm:$0xff]
        %v673 = vld [vmem:[%s549 + $0xb8] sm:$0xff]
        %v674 = vld [vmem:[%s549 + $0xc0] sm:$0xff]
        %v675 = vld [vmem:[%s549 + $0xc8] sm:$0xff]
        %v676 = vld [vmem:[%s549 + $0xd0] sm:$0xff]
        %v677 = vld [vmem:[%s549 + $0xd8] sm:$0xff]
        %v678 = vld [vmem:[%s549 + $0xe0] sm:$0xff]
        %v679 = vld [vmem:[%s549 + $0xe8] sm:$0xff]
        %v680 = vld [vmem:[%s549 + $0xf0] sm:$0xff]
        %v681 = vld [vmem:[%s549 + $0xf8] sm:$0xff]
        %v682 = vld [vmem:[%s549 + $0x100] sm:$0xff]
        %v683 = vld [vmem:[%s549 + $0x108] sm:$0xff]
        %v684 = vld [vmem:[%s549 + $0x110] sm:$0xff]
        %v685 = vld [vmem:[%s549 + $0x118] sm:$0xff]
        %v686 = vld [vmem:[%s549 + $0x120] sm:$0xff]
        %v687 = vld [vmem:[%s549 + $0x128] sm:$0xff]
        %v688 = vld [vmem:[%s549 + $0x130] sm:$0xff]
        %v689 = vld [vmem:[%s549 + $0x138] sm:$0xff]
        %v690 = vld [vmem:[%s549 + $0x140] sm:$0xff]
        %v691 = vld [vmem:[%s549 + $0x148] sm:$0xff]
        %v692 = vld [vmem:[%s549 + $0x150] sm:$0xff]
        %v693 = vld [vmem:[%s549 + $0x158] sm:$0xff]
        %v694 = vld [vmem:[%s549 + $0x160] sm:$0xff]
        %v695 = vld [vmem:[%s549 + $0x168] sm:$0xff]
        %v696 = vld [vmem:[%s549 + $0x170] sm:$0xff]
        %v697 = vld [vmem:[%s549 + $0x178] sm:$0xff]
        %v698 = vld [vmem:[%s549 + $0x180] sm:$0xff]
        %v699 = vld [vmem:[%s549 + $0x188] sm:$0xff]
        %v700 = vld [vmem:[%s549 + $0x190] sm:$0xff]
        %v701 = vld [vmem:[%s549 + $0x198] sm:$0xff]
        %v702 = vld [vmem:[%s549 + $0x1a0] sm:$0xff]
        %v703 = vld [vmem:[%s549 + $0x1a8] sm:$0xff]
        %v704 = vld [vmem:[%s549 + $0x1b0] sm:$0xff]
        %v705 = vld [vmem:[%s549 + $0x1b8] sm:$0xff]
        %v706 = vld [vmem:[%s549 + $0x1c0] sm:$0xff]
        %v707 = vld [vmem:[%s549 + $0x1c8] sm:$0xff]
        %v708 = vld [vmem:[%s549 + $0x1d0] sm:$0xff]
        %v709 = vld [vmem:[%s549 + $0x1d8] sm:$0xff]
        %v710 = vld [vmem:[%s549 + $0x1e0] sm:$0xff]
        %v711 = vld [vmem:[%s549 + $0x1e8] sm:$0xff]
        %v712 = vld [vmem:[%s549 + $0x1f0] sm:$0xff]
        %v713 = vld [vmem:[%s549 + $0x1f8] sm:$0xff]
        %v714 = vld [vmem:[%s558] sm:$0xff]
        %v715 = vld [vmem:[%s558 + $0x8] sm:$0xff]
        %v716 = vld [vmem:[%s558 + $0x10] sm:$0xff]
        %v717 = vld [vmem:[%s558 + $0x18] sm:$0xff]
        %v718 = vld [vmem:[%s558 + $0x20] sm:$0xff]
        %v719 = vld [vmem:[%s558 + $0x28] sm:$0xff]
        %v720 = vld [vmem:[%s558 + $0x30] sm:$0xff]
        %v721 = vld [vmem:[%s558 + $0x38] sm:$0xff]
        %v722 = vld [vmem:[#allocation8] sm:$0xf]
        %v724 = vlaneseq
        %v725 = vshrl.u32 %v724, 7
        %v726 = vsub.s32 0, %v725
        %v727 = vrot.slane %v722, %v726
        %v728 = vlaneseq
        %v729 = vshrl.u32 %v728, 7
        %v730 = vsub.s32 1, %v729
        %v731 = vrot.slane %v722, %v730
        %v732 = vlaneseq
        %v733 = vshrl.u32 %v732, 7
        %v734 = vsub.s32 2, %v733
        %v735 = vrot.slane %v722, %v734
        %v736 = vlaneseq
        %v737 = vshrl.u32 %v736, 7
        %v738 = vsub.s32 3, %v737
        %v739 = vrot.slane %v722, %v738
        %v744 = vmul.f32 %v642, %v727
        %v745 = vmul.f32 %v643, %v731
        %v746 = vmul.f32 %v644, %v735
        %v747 = vmul.f32 %v645, %v739
        %v748 = vmul.f32 %v646, %v727
        %v749 = vmul.f32 %v647, %v731
        %v750 = vmul.f32 %v648, %v735
        %v751 = vmul.f32 %v649, %v739
        %v752 = vmul.f32 %v650, %v727
        %v753 = vmul.f32 %v651, %v731
        %v754 = vmul.f32 %v652, %v735
        %v755 = vmul.f32 %v653, %v739
        %v756 = vmul.f32 %v654, %v727
        %v757 = vmul.f32 %v655, %v731
        %v758 = vmul.f32 %v656, %v735
        %v759 = vmul.f32 %v657, %v739
        %v760 = vmul.f32 %v658, %v727
        %v761 = vmul.f32 %v659, %v731
        %v762 = vmul.f32 %v660, %v735
        %v763 = vmul.f32 %v661, %v739
        %v764 = vmul.f32 %v662, %v727
        %v765 = vmul.f32 %v663, %v731
        %v766 = vmul.f32 %v664, %v735
        %v767 = vmul.f32 %v665, %v739
        %v768 = vmul.f32 %v666, %v727
        %v769 = vmul.f32 %v667, %v731
        %v770 = vmul.f32 %v668, %v735
        %v771 = vmul.f32 %v669, %v739
        %v772 = vmul.f32 %v670, %v727
        %v773 = vmul.f32 %v671, %v731
        %v774 = vmul.f32 %v672, %v735
        %v775 = vmul.f32 %v673, %v739
        %v776 = vmul.f32 %v674, %v727
        %v777 = vmul.f32 %v675, %v731
        %v778 = vmul.f32 %v676, %v735
        %v779 = vmul.f32 %v677, %v739
        %v780 = vmul.f32 %v678, %v727
        %v781 = vmul.f32 %v679, %v731
        %v782 = vmul.f32 %v680, %v735
        %v783 = vmul.f32 %v681, %v739
        %v784 = vmul.f32 %v682, %v727
        %v785 = vmul.f32 %v683, %v731
        %v786 = vmul.f32 %v684, %v735
        %v787 = vmul.f32 %v685, %v739
        %v788 = vmul.f32 %v686, %v727
        %v789 = vmul.f32 %v687, %v731
        %v790 = vmul.f32 %v688, %v735
        %v791 = vmul.f32 %v689, %v739
        %v792 = vmul.f32 %v690, %v727
        %v793 = vmul.f32 %v691, %v731
        %v794 = vmul.f32 %v692, %v735
        %v795 = vmul.f32 %v693, %v739
        %v796 = vmul.f32 %v694, %v727
        %v797 = vmul.f32 %v695, %v731
        %v798 = vmul.f32 %v696, %v735
        %v799 = vmul.f32 %v697, %v739
        %v800 = vmul.f32 %v698, %v727
        %v801 = vmul.f32 %v699, %v731
        %v802 = vmul.f32 %v700, %v735
        %v803 = vmul.f32 %v701, %v739
        %v804 = vmul.f32 %v702, %v727
        %v805 = vmul.f32 %v703, %v731
        %v806 = vmul.f32 %v704, %v735
        %v807 = vmul.f32 %v705, %v739
        %v808 = vmul.f32 %v706, %v727
        %v809 = vmul.f32 %v707, %v731
        %v810 = vmul.f32 %v708, %v735
        %v811 = vmul.f32 %v709, %v739
        %v812 = vmul.f32 %v710, %v727
        %v813 = vmul.f32 %v711, %v731
        %v814 = vmul.f32 %v712, %v735
        %v815 = vmul.f32 %v713, %v739
        %v816 = vmul.f32 %v714, %v727
        %v817 = vmul.f32 %v715, %v731
        %v818 = vmul.f32 %v716, %v735
        %v819 = vmul.f32 %v717, %v739
        %v820 = vmul.f32 %v718, %v727
        %v821 = vmul.f32 %v719, %v731
        %v822 = vmul.f32 %v720, %v735
        %v823 = vmul.f32 %v721, %v739
        %v824 = vld [vmem:[#allocation10] sm:$0xf]
        %v826 = vlaneseq
        %v827 = vshrl.u32 %v826, 7
        %v828 = vsub.s32 0, %v827
        %v829 = vrot.slane %v824, %v828
        %v830 = vlaneseq
        %v831 = vshrl.u32 %v830, 7
        %v832 = vsub.s32 1, %v831
        %v833 = vrot.slane %v824, %v832
        %v834 = vlaneseq
        %v835 = vshrl.u32 %v834, 7
        %v836 = vsub.s32 2, %v835
        %v837 = vrot.slane %v824, %v836
        %v838 = vlaneseq
        %v839 = vshrl.u32 %v838, 7
        %v840 = vsub.s32 3, %v839
        %v841 = vrot.slane %v824, %v840
        %v846 = vadd.f32 %v744, %v829
        %v847 = vadd.f32 %v745, %v833
        %v848 = vadd.f32 %v746, %v837
        %v849 = vadd.f32 %v747, %v841
        %v850 = vadd.f32 %v748, %v829
        %v851 = vadd.f32 %v749, %v833
        %v852 = vadd.f32 %v750, %v837
        %v853 = vadd.f32 %v751, %v841
        %v854 = vadd.f32 %v752, %v829
        %v855 = vadd.f32 %v753, %v833
        %v856 = vadd.f32 %v754, %v837
        %v857 = vadd.f32 %v755, %v841
        %v858 = vadd.f32 %v756, %v829
        %v859 = vadd.f32 %v757, %v833
        %v860 = vadd.f32 %v758, %v837
        %v861 = vadd.f32 %v759, %v841
        %v862 = vadd.f32 %v760, %v829
        %v863 = vadd.f32 %v761, %v833
        %v864 = vadd.f32 %v762, %v837
        %v865 = vadd.f32 %v763, %v841
        %v866 = vadd.f32 %v764, %v829
        %v867 = vadd.f32 %v765, %v833
        %v868 = vadd.f32 %v766, %v837
        %v869 = vadd.f32 %v767, %v841
        %v870 = vadd.f32 %v768, %v829
        %v871 = vadd.f32 %v769, %v833
        %v872 = vadd.f32 %v770, %v837
        %v873 = vadd.f32 %v771, %v841
        %v874 = vadd.f32 %v772, %v829
        %v875 = vadd.f32 %v773, %v833
        %v876 = vadd.f32 %v774, %v837
        %v877 = vadd.f32 %v775, %v841
        %v878 = vadd.f32 %v776, %v829
        %v879 = vadd.f32 %v777, %v833
        %v880 = vadd.f32 %v778, %v837
        %v881 = vadd.f32 %v779, %v841
        %v882 = vadd.f32 %v780, %v829
        %v883 = vadd.f32 %v781, %v833
        %v884 = vadd.f32 %v782, %v837
        %v885 = vadd.f32 %v783, %v841
        %v886 = vadd.f32 %v784, %v829
        %v887 = vadd.f32 %v785, %v833
        %v888 = vadd.f32 %v786, %v837
        %v889 = vadd.f32 %v787, %v841
        %v890 = vadd.f32 %v788, %v829
        %v891 = vadd.f32 %v789, %v833
        %v892 = vadd.f32 %v790, %v837
        %v893 = vadd.f32 %v791, %v841
        %v894 = vadd.f32 %v792, %v829
        %v895 = vadd.f32 %v793, %v833
        %v896 = vadd.f32 %v794, %v837
        %v897 = vadd.f32 %v795, %v841
        %v898 = vadd.f32 %v796, %v829
        %v899 = vadd.f32 %v797, %v833
        %v900 = vadd.f32 %v798, %v837
        %v901 = vadd.f32 %v799, %v841
        %v902 = vadd.f32 %v800, %v829
        %v903 = vadd.f32 %v801, %v833
        %v904 = vadd.f32 %v802, %v837
        %v905 = vadd.f32 %v803, %v841
        %v906 = vadd.f32 %v804, %v829
        %v907 = vadd.f32 %v805, %v833
        %v908 = vadd.f32 %v806, %v837
        %v909 = vadd.f32 %v807, %v841
        %v910 = vadd.f32 %v808, %v829
        %v911 = vadd.f32 %v809, %v833
        %v912 = vadd.f32 %v810, %v837
        %v913 = vadd.f32 %v811, %v841
        %v914 = vadd.f32 %v812, %v829
        %v915 = vadd.f32 %v813, %v833
        %v916 = vadd.f32 %v814, %v837
        %v917 = vadd.f32 %v815, %v841
        %v918 = vadd.f32 %v816, %v829
        %v919 = vadd.f32 %v817, %v833
        %v920 = vadd.f32 %v818, %v837
        %v921 = vadd.f32 %v819, %v841
        %v922 = vadd.f32 %v820, %v829
        %v923 = vadd.f32 %v821, %v833
        %v924 = vadd.f32 %v822, %v837
        %v925 = vadd.f32 %v823, %v841
        %v926 = vmax.f32 %v846, 0.0
        %v927 = vmax.f32 %v847, 0.0
        %v928 = vmax.f32 %v848, 0.0
        %v929 = vmax.f32 %v849, 0.0
        %v930 = vmax.f32 %v850, 0.0
        %v931 = vmax.f32 %v851, 0.0
        %v932 = vmax.f32 %v852, 0.0
        %v933 = vmax.f32 %v853, 0.0
        %v934 = vmax.f32 %v854, 0.0
        %v935 = vmax.f32 %v855, 0.0
        %v936 = vmax.f32 %v856, 0.0
        %v937 = vmax.f32 %v857, 0.0
        %v938 = vmax.f32 %v858, 0.0
        %v939 = vmax.f32 %v859, 0.0
        %v940 = vmax.f32 %v860, 0.0
        %v941 = vmax.f32 %v861, 0.0
        %v942 = vmax.f32 %v862, 0.0
        %v943 = vmax.f32 %v863, 0.0
        %v944 = vmax.f32 %v864, 0.0
        %v945 = vmax.f32 %v865, 0.0
        %v946 = vmax.f32 %v866, 0.0
        %v947 = vmax.f32 %v867, 0.0
        %v948 = vmax.f32 %v868, 0.0
        %v949 = vmax.f32 %v869, 0.0
        %v950 = vmax.f32 %v870, 0.0
        %v951 = vmax.f32 %v871, 0.0
        %v952 = vmax.f32 %v872, 0.0
        %v953 = vmax.f32 %v873, 0.0
        %v954 = vmax.f32 %v874, 0.0
        %v955 = vmax.f32 %v875, 0.0
        %v956 = vmax.f32 %v876, 0.0
        %v957 = vmax.f32 %v877, 0.0
        %v958 = vmax.f32 %v878, 0.0
        %v959 = vmax.f32 %v879, 0.0
        %v960 = vmax.f32 %v880, 0.0
        %v961 = vmax.f32 %v881, 0.0
        %v962 = vmax.f32 %v882, 0.0
        %v963 = vmax.f32 %v883, 0.0
        %v964 = vmax.f32 %v884, 0.0
        %v965 = vmax.f32 %v885, 0.0
        %v966 = vmax.f32 %v886, 0.0
        %v967 = vmax.f32 %v887, 0.0
        %v968 = vmax.f32 %v888, 0.0
        %v969 = vmax.f32 %v889, 0.0
        %v970 = vmax.f32 %v890, 0.0
        %v971 = vmax.f32 %v891, 0.0
        %v972 = vmax.f32 %v892, 0.0
        %v973 = vmax.f32 %v893, 0.0
        %v974 = vmax.f32 %v894, 0.0
        %v975 = vmax.f32 %v895, 0.0
        %v976 = vmax.f32 %v896, 0.0
        %v977 = vmax.f32 %v897, 0.0
        %v978 = vmax.f32 %v898, 0.0
        %v979 = vmax.f32 %v899, 0.0
        %v980 = vmax.f32 %v900, 0.0
        %v981 = vmax.f32 %v901, 0.0
        %v982 = vmax.f32 %v902, 0.0
        %v983 = vmax.f32 %v903, 0.0
        %v984 = vmax.f32 %v904, 0.0
        %v985 = vmax.f32 %v905, 0.0
        %v986 = vmax.f32 %v906, 0.0
        %v987 = vmax.f32 %v907, 0.0
        %v988 = vmax.f32 %v908, 0.0
        %v989 = vmax.f32 %v909, 0.0
        %v990 = vmax.f32 %v910, 0.0
        %v991 = vmax.f32 %v911, 0.0
        %v992 = vmax.f32 %v912, 0.0
        %v993 = vmax.f32 %v913, 0.0
        %v994 = vmax.f32 %v914, 0.0
        %v995 = vmax.f32 %v915, 0.0
        %v996 = vmax.f32 %v916, 0.0
        %v997 = vmax.f32 %v917, 0.0
        %v998 = vmax.f32 %v918, 0.0
        %v999 = vmax.f32 %v919, 0.0
        %v1000 = vmax.f32 %v920, 0.0
        %v1001 = vmax.f32 %v921, 0.0
        %v1002 = vmax.f32 %v922, 0.0
        %v1003 = vmax.f32 %v923, 0.0
        %v1004 = vmax.f32 %v924, 0.0
        %v1005 = vmax.f32 %v925, 0.0
        %v1006 = vpack.c.bf16 %v930, %v926
        %v1007 = vpack.c.bf16 %v931, %v927
        %v1008 = vpack.c.bf16 %v932, %v928
        %v1009 = vpack.c.bf16 %v933, %v929
        %v1010 = vpack.c.bf16 %v938, %v934
        %v1011 = vpack.c.bf16 %v939, %v935
        %v1012 = vpack.c.bf16 %v940, %v936
        %v1013 = vpack.c.bf16 %v941, %v937
        %v1014 = vpack.c.bf16 %v946, %v942
        %v1015 = vpack.c.bf16 %v947, %v943
        %v1016 = vpack.c.bf16 %v948, %v944
        %v1017 = vpack.c.bf16 %v949, %v945
        %v1018 = vpack.c.bf16 %v954, %v950
        %v1019 = vpack.c.bf16 %v955, %v951
        %v1020 = vpack.c.bf16 %v956, %v952
        %v1021 = vpack.c.bf16 %v957, %v953
        %v1022 = vpack.c.bf16 %v962, %v958
        %v1023 = vpack.c.bf16 %v963, %v959
        %v1024 = vpack.c.bf16 %v964, %v960
        %v1025 = vpack.c.bf16 %v965, %v961
        %v1026 = vpack.c.bf16 %v970, %v966
        %v1027 = vpack.c.bf16 %v971, %v967
        %v1028 = vpack.c.bf16 %v972, %v968
        %v1029 = vpack.c.bf16 %v973, %v969
        %v1030 = vpack.c.bf16 %v978, %v974
        %v1031 = vpack.c.bf16 %v979, %v975
        %v1032 = vpack.c.bf16 %v980, %v976
        %v1033 = vpack.c.bf16 %v981, %v977
        %v1034 = vpack.c.bf16 %v986, %v982
        %v1035 = vpack.c.bf16 %v987, %v983
        %v1036 = vpack.c.bf16 %v988, %v984
        %v1037 = vpack.c.bf16 %v989, %v985
        %v1038 = vpack.c.bf16 %v994, %v990
        %v1039 = vpack.c.bf16 %v995, %v991
        %v1040 = vpack.c.bf16 %v996, %v992
        %v1041 = vpack.c.bf16 %v997, %v993
        %v1042 = vpack.c.bf16 %v1002, %v998
        %v1043 = vpack.c.bf16 %v1003, %v999
        %v1044 = vpack.c.bf16 %v1004, %v1000
        %v1045 = vpack.c.bf16 %v1005, %v1001
        %v1046 = vld [vmem:[#allocation11] sm:$0xf]
        %v1047 = vld [vmem:[#allocation11 + $0x4] sm:$0xf]
        %v1048 = vld [vmem:[#allocation11 + $0x8] sm:$0xf]
        %v1049 = vld [vmem:[#allocation11 + $0xc] sm:$0xf]
        %v1050 = vld [vmem:[#allocation11 + $0x10] sm:$0xf]
        %v1051 = vld [vmem:[#allocation11 + $0x14] sm:$0xf]
        %v1052 = vld [vmem:[#allocation11 + $0x18] sm:$0xf]
        %v1053 = vld [vmem:[#allocation11 + $0x1c] sm:$0xf]
        %v1054 = vld [vmem:[#allocation11 + $0x20] sm:$0xf]
        %v1055 = vld [vmem:[#allocation11 + $0x24] sm:$0xf]
        %v1056 = vld [vmem:[#allocation11 + $0x28] sm:$0xf]
        %v1057 = vld [vmem:[#allocation11 + $0x2c] sm:$0xf]
        %v1058 = vld [vmem:[#allocation11 + $0x30] sm:$0xf]
        %v1059 = vld [vmem:[#allocation11 + $0x34] sm:$0xf]
        %v1060 = vld [vmem:[#allocation11 + $0x38] sm:$0xf]
        %v1061 = vld [vmem:[#allocation11 + $0x3c] sm:$0xf]
        %v1062 = vld [vmem:[#allocation11 + $0x40] sm:$0xf]
        %v1063 = vld [vmem:[#allocation11 + $0x44] sm:$0xf]
        %v1064 = vld [vmem:[#allocation11 + $0x48] sm:$0xf]
        %v1065 = vld [vmem:[#allocation11 + $0x4c] sm:$0xf]
        %v1066 = vld [vmem:[#allocation11 + $0x50] sm:$0xf]
        %v1067 = vld [vmem:[#allocation11 + $0x54] sm:$0xf]
        %v1068 = vld [vmem:[#allocation11 + $0x58] sm:$0xf]
        %v1069 = vld [vmem:[#allocation11 + $0x5c] sm:$0xf]
        %v1070 = vld [vmem:[#allocation11 + $0x60] sm:$0xf]
        %v1071 = vld [vmem:[#allocation11 + $0x64] sm:$0xf]
        %v1072 = vld [vmem:[#allocation11 + $0x68] sm:$0xf]
        %v1073 = vld [vmem:[#allocation11 + $0x6c] sm:$0xf]
        %v1074 = vld [vmem:[#allocation11 + $0x70] sm:$0xf]
        %v1075 = vld [vmem:[#allocation11 + $0x74] sm:$0xf]
        %v1076 = vld [vmem:[#allocation11 + $0x78] sm:$0xf]
        %v1077 = vld [vmem:[#allocation11 + $0x7c] sm:$0xf]
        %v1078 = vld [vmem:[#allocation11 + $0x80] sm:$0xf]
        %v1079 = vld [vmem:[#allocation11 + $0x84] sm:$0xf]
        %v1080 = vld [vmem:[#allocation11 + $0x88] sm:$0xf]
        %v1081 = vld [vmem:[#allocation11 + $0x8c] sm:$0xf]
        %v1082 = vld [vmem:[#allocation11 + $0x90] sm:$0xf]
        %v1083 = vld [vmem:[#allocation11 + $0x94] sm:$0xf]
        %v1084 = vld [vmem:[#allocation11 + $0x98] sm:$0xf]
        %v1085 = vld [vmem:[#allocation11 + $0x9c] sm:$0xf]
        %v1086 = vld [vmem:[#allocation11 + $0xa0] sm:$0xf]
        %v1087 = vld [vmem:[#allocation11 + $0xa4] sm:$0xf]
        %v1088 = vld [vmem:[#allocation11 + $0xa8] sm:$0xf]
        %v1089 = vld [vmem:[#allocation11 + $0xac] sm:$0xf]
        %v1090 = vld [vmem:[#allocation11 + $0xb0] sm:$0xf]
        %v1091 = vld [vmem:[#allocation11 + $0xb4] sm:$0xf]
        %v1092 = vld [vmem:[#allocation11 + $0xb8] sm:$0xf]
        %v1093 = vld [vmem:[#allocation11 + $0xbc] sm:$0xf]
        %v1094 = vld [vmem:[#allocation11 + $0xc0] sm:$0xf]
        %v1095 = vld [vmem:[#allocation11 + $0xc4] sm:$0xf]
        %v1096 = vld [vmem:[#allocation11 + $0xc8] sm:$0xf]
        %v1097 = vld [vmem:[#allocation11 + $0xcc] sm:$0xf]
        %v1098 = vld [vmem:[#allocation11 + $0xd0] sm:$0xf]
        %v1099 = vld [vmem:[#allocation11 + $0xd4] sm:$0xf]
        %v1100 = vld [vmem:[#allocation11 + $0xd8] sm:$0xf]
        %v1101 = vld [vmem:[#allocation11 + $0xdc] sm:$0xf]
        %v1102 = vld [vmem:[#allocation11 + $0xe0] sm:$0xf]
        %v1103 = vld [vmem:[#allocation11 + $0xe4] sm:$0xf]
        %v1104 = vld [vmem:[#allocation11 + $0xe8] sm:$0xf]
        %v1105 = vld [vmem:[#allocation11 + $0xec] sm:$0xf]
        %v1106 = vld [vmem:[#allocation11 + $0xf0] sm:$0xf]
        %v1107 = vld [vmem:[#allocation11 + $0xf4] sm:$0xf]
        %v1108 = vld [vmem:[#allocation11 + $0xf8] sm:$0xf]
        %v1109 = vld [vmem:[#allocation11 + $0xfc] sm:$0xf]
        %v1174 = vunpack.c.l.b16 %v1046
        %v1175 = vunpack.c.l.b16 %v1047
        %v1176 = vunpack.c.l.b16 %v1048
        %v1177 = vunpack.c.l.b16 %v1049
        %v1178 = vunpack.c.l.b16 %v1050
        %v1179 = vunpack.c.l.b16 %v1051
        %v1180 = vunpack.c.l.b16 %v1052
        %v1181 = vunpack.c.l.b16 %v1053
        %v1182 = vunpack.c.l.b16 %v1054
        %v1183 = vunpack.c.l.b16 %v1055
        %v1184 = vunpack.c.l.b16 %v1056
        %v1185 = vunpack.c.l.b16 %v1057
        %v1186 = vunpack.c.l.b16 %v1058
        %v1187 = vunpack.c.l.b16 %v1059
        %v1188 = vunpack.c.l.b16 %v1060
        %v1189 = vunpack.c.l.b16 %v1061
        %v1190 = vunpack.c.l.b16 %v1062
        %v1191 = vunpack.c.l.b16 %v1063
        %v1192 = vunpack.c.l.b16 %v1064
        %v1193 = vunpack.c.l.b16 %v1065
        %v1194 = vunpack.c.l.b16 %v1066
        %v1195 = vunpack.c.l.b16 %v1067
        %v1196 = vunpack.c.l.b16 %v1068
        %v1197 = vunpack.c.l.b16 %v1069
        %v1198 = vunpack.c.l.b16 %v1070
        %v1199 = vunpack.c.l.b16 %v1071
        %v1200 = vunpack.c.l.b16 %v1072
        %v1201 = vunpack.c.l.b16 %v1073
        %v1202 = vunpack.c.l.b16 %v1074
        %v1203 = vunpack.c.l.b16 %v1075
        %v1204 = vunpack.c.l.b16 %v1076
        %v1205 = vunpack.c.l.b16 %v1077
        %v1206 = vunpack.c.l.b16 %v1078
        %v1207 = vunpack.c.l.b16 %v1079
        %v1208 = vunpack.c.l.b16 %v1080
        %v1209 = vunpack.c.l.b16 %v1081
        %v1210 = vunpack.c.l.b16 %v1082
        %v1211 = vunpack.c.l.b16 %v1083
        %v1212 = vunpack.c.l.b16 %v1084
        %v1213 = vunpack.c.l.b16 %v1085
        %v1214 = vunpack.c.l.b16 %v1086
        %v1215 = vunpack.c.l.b16 %v1087
        %v1216 = vunpack.c.l.b16 %v1088
        %v1217 = vunpack.c.l.b16 %v1089
        %v1218 = vunpack.c.l.b16 %v1090
        %v1219 = vunpack.c.l.b16 %v1091
        %v1220 = vunpack.c.l.b16 %v1092
        %v1221 = vunpack.c.l.b16 %v1093
        %v1222 = vunpack.c.l.b16 %v1094
        %v1223 = vunpack.c.l.b16 %v1095
        %v1224 = vunpack.c.l.b16 %v1096
        %v1225 = vunpack.c.l.b16 %v1097
        %v1226 = vunpack.c.l.b16 %v1098
        %v1227 = vunpack.c.l.b16 %v1099
        %v1228 = vunpack.c.l.b16 %v1100
        %v1229 = vunpack.c.l.b16 %v1101
        %v1230 = vunpack.c.l.b16 %v1102
        %v1231 = vunpack.c.l.b16 %v1103
        %v1232 = vunpack.c.l.b16 %v1104
        %v1233 = vunpack.c.l.b16 %v1105
        %v1234 = vunpack.c.l.b16 %v1106
        %v1235 = vunpack.c.l.b16 %v1107
        %v1236 = vunpack.c.l.b16 %v1108
        %v1237 = vunpack.c.l.b16 %v1109
        %v1238 = vpack.c.b16 %v1175, %v1174
        %v1239 = vpack.c.b16 %v1177, %v1176
        %v1240 = vpack.c.b16 %v1179, %v1178
        %v1241 = vpack.c.b16 %v1181, %v1180
        %v1242 = vpack.c.b16 %v1183, %v1182
        %v1243 = vpack.c.b16 %v1185, %v1184
        %v1244 = vpack.c.b16 %v1187, %v1186
        %v1245 = vpack.c.b16 %v1189, %v1188
        %v1246 = vpack.c.b16 %v1191, %v1190
        %v1247 = vpack.c.b16 %v1193, %v1192
        %v1248 = vpack.c.b16 %v1195, %v1194
        %v1249 = vpack.c.b16 %v1197, %v1196
        %v1250 = vpack.c.b16 %v1199, %v1198
        %v1251 = vpack.c.b16 %v1201, %v1200
        %v1252 = vpack.c.b16 %v1203, %v1202
        %v1253 = vpack.c.b16 %v1205, %v1204
        %v1254 = vpack.c.b16 %v1207, %v1206
        %v1255 = vpack.c.b16 %v1209, %v1208
        %v1256 = vpack.c.b16 %v1211, %v1210
        %v1257 = vpack.c.b16 %v1213, %v1212
        %v1258 = vpack.c.b16 %v1215, %v1214
        %v1259 = vpack.c.b16 %v1217, %v1216
        %v1260 = vpack.c.b16 %v1219, %v1218
        %v1261 = vpack.c.b16 %v1221, %v1220
        %v1262 = vpack.c.b16 %v1223, %v1222
        %v1263 = vpack.c.b16 %v1225, %v1224
        %v1264 = vpack.c.b16 %v1227, %v1226
        %v1265 = vpack.c.b16 %v1229, %v1228
        %v1266 = vpack.c.b16 %v1231, %v1230
        %v1267 = vpack.c.b16 %v1233, %v1232
        %v1268 = vpack.c.b16 %v1235, %v1234
        %v1269 = vpack.c.b16 %v1237, %v1236
        %1302 = vmatprep.subr.bf16.mxu0 0
        %1303 = vmatpush1.bf16.msra.mxu0 %v1245
        %1304 = vmatprep.subr.bf16.mxu0 0
        %1305 = vmatpush1.bf16.msra.mxu0 %v1244
        %1306 = vmatprep.subr.bf16.mxu0 0
        %1307 = vmatpush1.bf16.msra.mxu0 %v1243
        %1308 = vmatprep.subr.bf16.mxu0 0
        %1309 = vmatpush1.bf16.msra.mxu0 %v1242
        %1310 = vmatprep.subr.bf16.mxu0 0
        %1311 = vmatpush1.bf16.msra.mxu0 %v1241
        %1312 = vmatprep.subr.bf16.mxu0 0
        %1313 = vmatpush1.bf16.msra.mxu0 %v1240
        %1314 = vmatprep.subr.bf16.mxu0 0
        %1315 = vmatpush1.bf16.msra.mxu0 %v1239
        %1316 = vmatprep.subr.bf16.mxu0 0
        %1317 = vmatpush1.bf16.msra.mxu0 %v1238
        %1318 = vmatprep.subr.bf16.mxu0 0
        %1319 = vmatpush2.bf16.msra.mxu0 %v1253
        %1320 = vmatprep.subr.bf16.mxu0 0
        %1321 = vmatpush2.bf16.msra.mxu0 %v1252
        %1322 = vmatprep.subr.bf16.mxu0 0
        %1323 = vmatpush2.bf16.msra.mxu0 %v1251
        %1324 = vmatprep.subr.bf16.mxu0 0
        %1325 = vmatpush2.bf16.msra.mxu0 %v1250
        %1326 = vmatprep.subr.bf16.mxu0 0
        %1327 = vmatpush2.bf16.msra.mxu0 %v1249
        %1328 = vmatprep.subr.bf16.mxu0 0
        %1329 = vmatpush2.bf16.msra.mxu0 %v1248
        %1330 = vmatprep.subr.bf16.mxu0 0
        %1331 = vmatpush2.bf16.msra.mxu0 %v1247
        %1332 = vmatprep.subr.bf16.mxu0 0
        %1333 = vmatpush2.bf16.msra.mxu0 %v1246
        %1334 = vmatprep.mubr.bf16.mxu0 %v1007
        %1335 = vmatmul.mubr.bf16.gmra.mxu0 %v1006
        %v1336 = vpop.f32.mrf.mxu0
        %v1337 = vadd.f32 0.0, %v1336
        %v1338 = vpop.f32.mrf.mxu0
        %v1339 = vpop.f32.mrf.mxu0
        %v1340 = vadd.f32 0.0, %v1339
        %v1341 = vpop.f32.mrf.mxu0
        %1342 = vmatprep.mubr.bf16.mxu0 %v1011
        %1343 = vmatmul.mubr.bf16.gmra.mxu0 %v1010
        %v1344 = vpop.f32.mrf.mxu0
        %v1345 = vadd.f32 0.0, %v1344
        %v1346 = vpop.f32.mrf.mxu0
        %v1347 = vpop.f32.mrf.mxu0
        %v1348 = vadd.f32 0.0, %v1347
        %v1349 = vpop.f32.mrf.mxu0
        %1350 = vmatprep.mubr.bf16.mxu0 %v1015
        %1351 = vmatmul.mubr.bf16.gmra.mxu0 %v1014
        %v1352 = vpop.f32.mrf.mxu0
        %v1353 = vadd.f32 0.0, %v1352
        %v1354 = vpop.f32.mrf.mxu0
        %v1355 = vpop.f32.mrf.mxu0
        %v1356 = vadd.f32 0.0, %v1355
        %v1357 = vpop.f32.mrf.mxu0
        %1358 = vmatprep.mubr.bf16.mxu0 %v1019
        %1359 = vmatmul.mubr.bf16.gmra.mxu0 %v1018
        %v1360 = vpop.f32.mrf.mxu0
        %v1361 = vadd.f32 0.0, %v1360
        %v1362 = vpop.f32.mrf.mxu0
        %v1363 = vpop.f32.mrf.mxu0
        %v1364 = vadd.f32 0.0, %v1363
        %v1365 = vpop.f32.mrf.mxu0
        %1366 = vmatprep.mubr.bf16.mxu0 %v1023
        %1367 = vmatmul.mubr.bf16.gmra.mxu0 %v1022
        %v1368 = vpop.f32.mrf.mxu0
        %v1369 = vadd.f32 0.0, %v1368
        %v1370 = vpop.f32.mrf.mxu0
        %v1371 = vpop.f32.mrf.mxu0
        %v1372 = vadd.f32 0.0, %v1371
        %v1373 = vpop.f32.mrf.mxu0
        %1374 = vmatprep.mubr.bf16.mxu0 %v1027
        %1375 = vmatmul.mubr.bf16.gmra.mxu0 %v1026
        %v1376 = vpop.f32.mrf.mxu0
        %v1377 = vadd.f32 0.0, %v1376
        %v1378 = vpop.f32.mrf.mxu0
        %v1379 = vpop.f32.mrf.mxu0
        %v1380 = vadd.f32 0.0, %v1379
        %v1381 = vpop.f32.mrf.mxu0
        %1382 = vmatprep.mubr.bf16.mxu0 %v1031
        %1383 = vmatmul.mubr.bf16.gmra.mxu0 %v1030
        %v1384 = vpop.f32.mrf.mxu0
        %v1385 = vadd.f32 0.0, %v1384
        %v1386 = vpop.f32.mrf.mxu0
        %v1387 = vpop.f32.mrf.mxu0
        %v1388 = vadd.f32 0.0, %v1387
        %v1389 = vpop.f32.mrf.mxu0
        %1390 = vmatprep.mubr.bf16.mxu0 %v1035
        %1391 = vmatmul.mubr.bf16.gmra.mxu0 %v1034
        %v1392 = vpop.f32.mrf.mxu0
        %v1393 = vadd.f32 0.0, %v1392
        %v1394 = vpop.f32.mrf.mxu0
        %v1395 = vpop.f32.mrf.mxu0
        %v1396 = vadd.f32 0.0, %v1395
        %v1397 = vpop.f32.mrf.mxu0
        %1398 = vmatprep.mubr.bf16.mxu0 %v1039
        %1399 = vmatmul.mubr.bf16.gmra.mxu0 %v1038
        %v1400 = vpop.f32.mrf.mxu0
        %v1401 = vadd.f32 0.0, %v1400
        %v1402 = vpop.f32.mrf.mxu0
        %v1403 = vpop.f32.mrf.mxu0
        %v1404 = vadd.f32 0.0, %v1403
        %v1405 = vpop.f32.mrf.mxu0
        %1406 = vmatprep.mubr.bf16.mxu0 %v1043
        %1407 = vmatmul.mubr.bf16.gmra.mxu0 %v1042
        %v1408 = vpop.f32.mrf.mxu0
        %v1409 = vadd.f32 0.0, %v1408
        %v1410 = vpop.f32.mrf.mxu0
        %v1411 = vpop.f32.mrf.mxu0
        %v1412 = vadd.f32 0.0, %v1411
        %v1413 = vpop.f32.mrf.mxu0
        %1414 = vdwg.mxu0
        %1415 = vmatprep.subr.bf16.mxu0 0
        %1416 = vmatpush1.bf16.msra.mxu0 %v1261
        %1417 = vmatprep.subr.bf16.mxu0 0
        %1418 = vmatpush1.bf16.msra.mxu0 %v1260
        %1419 = vmatprep.subr.bf16.mxu0 0
        %1420 = vmatpush1.bf16.msra.mxu0 %v1259
        %1421 = vmatprep.subr.bf16.mxu0 0
        %1422 = vmatpush1.bf16.msra.mxu0 %v1258
        %1423 = vmatprep.subr.bf16.mxu0 0
        %1424 = vmatpush1.bf16.msra.mxu0 %v1257
        %1425 = vmatprep.subr.bf16.mxu0 0
        %1426 = vmatpush1.bf16.msra.mxu0 %v1256
        %1427 = vmatprep.subr.bf16.mxu0 0
        %1428 = vmatpush1.bf16.msra.mxu0 %v1255
        %1429 = vmatprep.subr.bf16.mxu0 0
        %1430 = vmatpush1.bf16.msra.mxu0 %v1254
        %1431 = vmatprep.subr.bf16.mxu0 0
        %1432 = vmatpush2.bf16.msra.mxu0 %v1269
        %1433 = vmatprep.subr.bf16.mxu0 0
        %1434 = vmatpush2.bf16.msra.mxu0 %v1268
        %1435 = vmatprep.subr.bf16.mxu0 0
        %1436 = vmatpush2.bf16.msra.mxu0 %v1267
        %1437 = vmatprep.subr.bf16.mxu0 0
        %1438 = vmatpush2.bf16.msra.mxu0 %v1266
        %1439 = vmatprep.subr.bf16.mxu0 0
        %1440 = vmatpush2.bf16.msra.mxu0 %v1265
        %1441 = vmatprep.subr.bf16.mxu0 0
        %1442 = vmatpush2.bf16.msra.mxu0 %v1264
        %1443 = vmatprep.subr.bf16.mxu0 0
        %1444 = vmatpush2.bf16.msra.mxu0 %v1263
        %1445 = vmatprep.subr.bf16.mxu0 0
        %1446 = vmatpush2.bf16.msra.mxu0 %v1262
        %1447 = vmatprep.mubr.bf16.mxu0 %v1009
        %1448 = vmatmul.mubr.bf16.gmra.mxu0 %v1008
        %v1449 = vpop.f32.mrf.mxu0
        %v1450 = vadd.f32 %v1337, %v1449
        %v1451 = vpop.f32.mrf.mxu0
        %v1452 = vpop.f32.mrf.mxu0
        %v1453 = vadd.f32 %v1340, %v1452
        %v1454 = vpop.f32.mrf.mxu0
        %1455 = vmatprep.mubr.bf16.mxu0 %v1013
        %1456 = vmatmul.mubr.bf16.gmra.mxu0 %v1012
        %v1457 = vpop.f32.mrf.mxu0
        %v1458 = vadd.f32 %v1345, %v1457
        %v1459 = vpop.f32.mrf.mxu0
        %v1460 = vpop.f32.mrf.mxu0
        %v1461 = vadd.f32 %v1348, %v1460
        %v1462 = vpop.f32.mrf.mxu0
        %1463 = vmatprep.mubr.bf16.mxu0 %v1017
        %1464 = vmatmul.mubr.bf16.gmra.mxu0 %v1016
        %v1465 = vpop.f32.mrf.mxu0
        %v1466 = vadd.f32 %v1353, %v1465
        %v1467 = vpop.f32.mrf.mxu0
        %v1468 = vpop.f32.mrf.mxu0
        %v1469 = vadd.f32 %v1356, %v1468
        %v1470 = vpop.f32.mrf.mxu0
        %1471 = vmatprep.mubr.bf16.mxu0 %v1021
        %1472 = vmatmul.mubr.bf16.gmra.mxu0 %v1020
        %v1473 = vpop.f32.mrf.mxu0
        %v1474 = vadd.f32 %v1361, %v1473
        %v1475 = vpop.f32.mrf.mxu0
        %v1476 = vpop.f32.mrf.mxu0
        %v1477 = vadd.f32 %v1364, %v1476
        %v1478 = vpop.f32.mrf.mxu0
        %1479 = vmatprep.mubr.bf16.mxu0 %v1025
        %1480 = vmatmul.mubr.bf16.gmra.mxu0 %v1024
        %v1481 = vpop.f32.mrf.mxu0
        %v1482 = vadd.f32 %v1369, %v1481
        %v1483 = vpop.f32.mrf.mxu0
        %v1484 = vpop.f32.mrf.mxu0
        %v1485 = vadd.f32 %v1372, %v1484
        %v1486 = vpop.f32.mrf.mxu0
        %1487 = vmatprep.mubr.bf16.mxu0 %v1029
        %1488 = vmatmul.mubr.bf16.gmra.mxu0 %v1028
        %v1489 = vpop.f32.mrf.mxu0
        %v1490 = vadd.f32 %v1377, %v1489
        %v1491 = vpop.f32.mrf.mxu0
        %v1492 = vpop.f32.mrf.mxu0
        %v1493 = vadd.f32 %v1380, %v1492
        %v1494 = vpop.f32.mrf.mxu0
        %1495 = vmatprep.mubr.bf16.mxu0 %v1033
        %1496 = vmatmul.mubr.bf16.gmra.mxu0 %v1032
        %v1497 = vpop.f32.mrf.mxu0
        %v1498 = vadd.f32 %v1385, %v1497
        %v1499 = vpop.f32.mrf.mxu0
        %v1500 = vpop.f32.mrf.mxu0
        %v1501 = vadd.f32 %v1388, %v1500
        %v1502 = vpop.f32.mrf.mxu0
        %1503 = vmatprep.mubr.bf16.mxu0 %v1037
        %1504 = vmatmul.mubr.bf16.gmra.mxu0 %v1036
        %v1505 = vpop.f32.mrf.mxu0
        %v1506 = vadd.f32 %v1393, %v1505
        %v1507 = vpop.f32.mrf.mxu0
        %v1508 = vpop.f32.mrf.mxu0
        %v1509 = vadd.f32 %v1396, %v1508
        %v1510 = vpop.f32.mrf.mxu0
        %1511 = vmatprep.mubr.bf16.mxu0 %v1041
        %1512 = vmatmul.mubr.bf16.gmra.mxu0 %v1040
        %v1513 = vpop.f32.mrf.mxu0
        %v1514 = vadd.f32 %v1401, %v1513
        %v1515 = vpop.f32.mrf.mxu0
        %v1516 = vpop.f32.mrf.mxu0
        %v1517 = vadd.f32 %v1404, %v1516
        %v1518 = vpop.f32.mrf.mxu0
        %1519 = vmatprep.mubr.bf16.mxu0 %v1045
        %1520 = vmatmul.mubr.bf16.gmra.mxu0 %v1044
        %v1521 = vpop.f32.mrf.mxu0
        %v1522 = vadd.f32 %v1409, %v1521
        %v1523 = vpop.f32.mrf.mxu0
        %v1524 = vpop.f32.mrf.mxu0
        %v1525 = vadd.f32 %v1412, %v1524
        %v1526 = vpop.f32.mrf.mxu0
        %1527 = vdwg.mxu0
        %v1528 = vld [vmem:[%s6] sm:$0x1]
        %v1530 = vlaneseq
        %v1531 = vshrl.u32 %v1530, 7
        %v1532 = vsub.s32 0, %v1531
        %v1533 = vrot.slane %v1528, %v1532
        %v1535 = vmul.f32 %v1450, %v1533
        %v1536 = vmul.f32 %v1453, %v1533
        %v1537 = vmul.f32 %v1458, %v1533
        %v1538 = vmul.f32 %v1461, %v1533
        %v1539 = vmul.f32 %v1466, %v1533
        %v1540 = vmul.f32 %v1469, %v1533
        %v1541 = vmul.f32 %v1474, %v1533
        %v1542 = vmul.f32 %v1477, %v1533
        %v1543 = vmul.f32 %v1482, %v1533
        %v1544 = vmul.f32 %v1485, %v1533
        %v1545 = vmul.f32 %v1490, %v1533
        %v1546 = vmul.f32 %v1493, %v1533
        %v1547 = vmul.f32 %v1498, %v1533
        %v1548 = vmul.f32 %v1501, %v1533
        %v1549 = vmul.f32 %v1506, %v1533
        %v1550 = vmul.f32 %v1509, %v1533
        %v1551 = vmul.f32 %v1514, %v1533
        %v1552 = vmul.f32 %v1517, %v1533
        %v1553 = vmul.f32 %v1522, %v1533
        %v1554 = vmul.f32 %v1525, %v1533
        %v1555 = vld [vmem:[%s7] sm:$0x1]
        %v1557 = vlaneseq
        %v1558 = vshrl.u32 %v1557, 7
        %v1559 = vsub.s32 0, %v1558
        %v1560 = vrot.slane %v1555, %v1559
        %v1562 = vadd.f32 %v1535, %v1560
        %v1563 = vadd.f32 %v1536, %v1560
        %v1564 = vadd.f32 %v1537, %v1560
        %v1565 = vadd.f32 %v1538, %v1560
        %v1566 = vadd.f32 %v1539, %v1560
        %v1567 = vadd.f32 %v1540, %v1560
        %v1568 = vadd.f32 %v1541, %v1560
        %v1569 = vadd.f32 %v1542, %v1560
        %v1570 = vadd.f32 %v1543, %v1560
        %v1571 = vadd.f32 %v1544, %v1560
        %v1572 = vadd.f32 %v1545, %v1560
        %v1573 = vadd.f32 %v1546, %v1560
        %v1574 = vadd.f32 %v1547, %v1560
        %v1575 = vadd.f32 %v1548, %v1560
        %v1576 = vadd.f32 %v1549, %v1560
        %v1577 = vadd.f32 %v1550, %v1560
        %v1578 = vadd.f32 %v1551, %v1560
        %v1579 = vadd.f32 %v1552, %v1560
        %v1580 = vadd.f32 %v1553, %v1560
        %v1581 = vadd.f32 %v1554, %v1560
        %v1582 = vmax.f32 %v1562, 0.0
        %v1583 = vmax.f32 %v1563, 0.0
        %v1584 = vmax.f32 %v1564, 0.0
        %v1585 = vmax.f32 %v1565, 0.0
        %v1586 = vmax.f32 %v1566, 0.0
        %v1587 = vmax.f32 %v1567, 0.0
        %v1588 = vmax.f32 %v1568, 0.0
        %v1589 = vmax.f32 %v1569, 0.0
        %v1590 = vmax.f32 %v1570, 0.0
        %v1591 = vmax.f32 %v1571, 0.0
        %v1592 = vmax.f32 %v1572, 0.0
        %v1593 = vmax.f32 %v1573, 0.0
        %v1594 = vmax.f32 %v1574, 0.0
        %v1595 = vmax.f32 %v1575, 0.0
        %v1596 = vmax.f32 %v1576, 0.0
        %v1597 = vmax.f32 %v1577, 0.0
        %v1598 = vmax.f32 %v1578, 0.0
        %v1599 = vmax.f32 %v1579, 0.0
        %v1600 = vmax.f32 %v1580, 0.0
        %v1601 = vmax.f32 %v1581, 0.0
        %s1602 = smul.u32 %s40, 8
        %s1603 = ssub.s32 %s1602, 1
        %v1604 = vstv %s1603
        %v1605 = vadd.s32 %v1604, 1
        %v1606 = vadd.s32 %v1604, 2
        %v1607 = vadd.s32 %v1604, 3
        %v1608 = vadd.s32 %v1604, 4
        %v1609 = vadd.s32 %v1604, 5
        %v1610 = vadd.s32 %v1604, 6
        %v1611 = vadd.s32 %v1604, 7
        %v1612 = vadd.s32 %v1604, 8
        %v1613 = vadd.s32 %v1604, 9
        %vm1614 = vcmp.ge.s32.totalorder %v1604, 0
        %vm1615 = vcmp.ge.s32.totalorder %v1605, 0
        %vm1616 = vcmp.ge.s32.totalorder %v1606, 0
        %vm1617 = vcmp.ge.s32.totalorder %v1607, 0
        %vm1618 = vcmp.ge.s32.totalorder %v1608, 0
        %vm1619 = vcmp.ge.s32.totalorder %v1609, 0
        %vm1620 = vcmp.ge.s32.totalorder %v1610, 0
        %vm1621 = vcmp.ge.s32.totalorder %v1611, 0
        %vm1622 = vcmp.ge.s32.totalorder %v1612, 0
        %vm1623 = vcmp.ge.s32.totalorder %v1613, 0
        %vm1624 = vcmp.lt.s32.totalorder %v1604, 16
        %vm1625 = vcmp.lt.s32.totalorder %v1605, 16
        %vm1626 = vcmp.lt.s32.totalorder %v1606, 16
        %vm1627 = vcmp.lt.s32.totalorder %v1607, 16
        %vm1628 = vcmp.lt.s32.totalorder %v1608, 16
        %vm1629 = vcmp.lt.s32.totalorder %v1609, 16
        %vm1630 = vcmp.lt.s32.totalorder %v1610, 16
        %vm1631 = vcmp.lt.s32.totalorder %v1611, 16
        %vm1632 = vcmp.lt.s32.totalorder %v1612, 16
        %vm1633 = vcmp.lt.s32.totalorder %v1613, 16
        %vm1634 = vmand %vm1614, %vm1624
        %vm1635 = vmand %vm1615, %vm1625
        %vm1636 = vmand %vm1616, %vm1626
        %vm1637 = vmand %vm1617, %vm1627
        %vm1638 = vmand %vm1618, %vm1628
        %vm1639 = vmand %vm1619, %vm1629
        %vm1640 = vmand %vm1620, %vm1630
        %vm1641 = vmand %vm1621, %vm1631
        %vm1642 = vmand %vm1622, %vm1632
        %vm1643 = vmand %vm1623, %vm1633
        %v1644 = vsel %vm1634, %v1582, 0.0
        %v1645 = vsel %vm1634, %v1583, 0.0
        %v1646 = vsel %vm1635, %v1584, 0.0
        %v1647 = vsel %vm1635, %v1585, 0.0
        %v1648 = vsel %vm1636, %v1586, 0.0
        %v1649 = vsel %vm1636, %v1587, 0.0
        %v1650 = vsel %vm1637, %v1588, 0.0
        %v1651 = vsel %vm1637, %v1589, 0.0
        %v1652 = vsel %vm1638, %v1590, 0.0
        %v1653 = vsel %vm1638, %v1591, 0.0
        %v1654 = vsel %vm1639, %v1592, 0.0
        %v1655 = vsel %vm1639, %v1593, 0.0
        %v1656 = vsel %vm1640, %v1594, 0.0
        %v1657 = vsel %vm1640, %v1595, 0.0
        %v1658 = vsel %vm1641, %v1596, 0.0
        %v1659 = vsel %vm1641, %v1597, 0.0
        %v1660 = vsel %vm1642, %v1598, 0.0
        %v1661 = vsel %vm1642, %v1599, 0.0
        %v1662 = vsel %vm1643, %v1600, 0.0
        %v1663 = vsel %vm1643, %v1601, 0.0
        %v1664 = vpack.c.bf16 %v1645, %v1644
        %v1665 = vpack.c.bf16 %v1647, %v1646
        %v1666 = vpack.c.bf16 %v1649, %v1648
        %v1667 = vpack.c.bf16 %v1651, %v1650
        %v1668 = vpack.c.bf16 %v1653, %v1652
        %v1669 = vpack.c.bf16 %v1655, %v1654
        %v1670 = vpack.c.bf16 %v1657, %v1656
        %v1671 = vpack.c.bf16 %v1659, %v1658
        %v1672 = vpack.c.bf16 %v1661, %v1660
        %v1673 = vpack.c.bf16 %v1663, %v1662
        %v1674 = vlaneseq
        %v1675 = vshrl.u32 %v1674, 7
        %v1676 = vadd.s32 %v1675, 8
        %vm1677 = vcmp.eq.s32.totalorder %v1675, 0
        %vm1678 = vcmp.eq.s32.totalorder %v1676, 0
        %vm1679 = vmpackc.low %vm1677, %vm1677
        %vm1680 = vmpackc.low %vm1678, %vm1678
        %v1681 = vsel %vm1679, 65537, 0
        %v1682 = vsel %vm1680, 65537, 0
        %v1683 = vunpack.c.l.b16 %v1681
        %v1684 = vunpack.c.l.b16 %v1682
        %v1685 = vpack.c.b16 %v1684, %v1683
        %vm1686 = vsmask.f32 7424
        %v1688 = vshrl.u32 %v1685, 16
        %v1690 = vshll.u32 %v1685, 16
        %v1692 = vrot.slane %v1690, 1
        %v1693 = vor.u32 %v1688, %v1692
        %v1694 = vsel %vm1686, %v1693, %v1692
        %vm1695 = vcmp.ne.s16.totalorder %v1694, 0
        %vm1696 = vcmp.ne.s16.totalorder %v1693, 0
        %v1697 = vsel %vm1695, 0, %v1664
        %v1698 = vsel %vm1695, 0, %v1665
        %v1699 = vsel %vm1695, 0, %v1666
        %v1700 = vsel %vm1695, 0, %v1667
        %v1701 = vsel %vm1695, 0, %v1668
        %v1702 = vsel %vm1695, 0, %v1669
        %v1703 = vsel %vm1695, 0, %v1670
        %v1704 = vsel %vm1696, 0, %v1671
        %vm1705 = vcmp.eq.s32.totalorder %v1675, 15
        %vm1706 = vcmp.eq.s32.totalorder %v1676, 15
        %vm1707 = vmpackc.low %vm1705, %vm1705
        %vm1708 = vmpackc.low %vm1706, %vm1706
        %v1709 = vsel %vm1707, 65537, 0
        %v1710 = vsel %vm1708, 65537, 0
        %v1711 = vunpack.c.l.b16 %v1709
        %v1712 = vunpack.c.l.b16 %v1710
        %v1713 = vpack.c.b16 %v1712, %v1711
        %vm1714 = vsmask.f32 256
        %v1716 = vshrl.u32 %v1713, 16
        %v1718 = vrot.slane %v1716, 7
        %v1719 = vshll.u32 %v1713, 16
        %v1721 = vor.u32 %v1718, %v1719
        %v1722 = vsel %vm1714, %v1718, %v1721
        %vm1723 = vcmp.ne.s16.totalorder %v1721, 0
        %vm1724 = vcmp.ne.s16.totalorder %v1722, 0
        %vm1725 = vcmp.ne.s16.totalorder %v1718, 0
        %v1726 = vsel %vm1723, 0, %v1664
        %v1727 = vsel %vm1724, 0, %v1665
        %v1728 = vsel %vm1724, 0, %v1666
        %v1729 = vsel %vm1724, 0, %v1667
        %v1730 = vsel %vm1724, 0, %v1668
        %v1731 = vsel %vm1724, 0, %v1669
        %v1732 = vsel %vm1724, 0, %v1670
        %v1733 = vsel %vm1724, 0, %v1671
        %v1734 = vsel %vm1725, 0, %v1672
        %vm1735 = vcmp.ne.s16.totalorder %v1692, 0
        %v1736 = vsel %vm1735, 0, %v1664
        %v1737 = vsel %vm1695, 0, %v1671
        %v1738 = vsel %vm1696, 0, %v1672
        %v1739 = vsel %vm1723, 0, %v1665
        %v1740 = vsel %vm1724, 0, %v1672
        %v1741 = vsel %vm1725, 0, %v1673
        %v1742 = vsel %vm1735, 0, %v1665
        %v1743 = vsel %vm1695, 0, %v1672
        %v1744 = vsel %vm1696, 0, %v1673
        %v1745 = vsel %vm1723, 0, %v1666
        %v1746 = vsel %vm1724, 0, %v1673
        %v1748 = vshll.u32 %v1664, 16
        %v1750 = vrot.slane %v1748, 1
        %v1751 = vshrl.u32 %v1664, 16
        %v1753 = vor.u32 %v1751, %v1750
        %v1755 = vshll.u32 %v1665, 16
        %v1757 = vrot.slane %v1755, 1
        %v1758 = vsel %vm1686, %v1753, %v1757
        %v1759 = vshrl.u32 %v1665, 16
        %v1761 = vor.u32 %v1759, %v1757
        %v1763 = vshll.u32 %v1666, 16
        %v1765 = vrot.slane %v1763, 1
        %v1766 = vsel %vm1686, %v1761, %v1765
        %v1767 = vshrl.u32 %v1666, 16
        %v1769 = vor.u32 %v1767, %v1765
        %v1771 = vshll.u32 %v1667, 16
        %v1773 = vrot.slane %v1771, 1
        %v1774 = vsel %vm1686, %v1769, %v1773
        %v1775 = vshrl.u32 %v1667, 16
        %v1777 = vor.u32 %v1775, %v1773
        %v1779 = vshll.u32 %v1668, 16
        %v1781 = vrot.slane %v1779, 1
        %v1782 = vsel %vm1686, %v1777, %v1781
        %v1783 = vshrl.u32 %v1668, 16
        %v1785 = vor.u32 %v1783, %v1781
        %v1787 = vshll.u32 %v1669, 16
        %v1789 = vrot.slane %v1787, 1
        %v1790 = vsel %vm1686, %v1785, %v1789
        %v1791 = vshrl.u32 %v1669, 16
        %v1793 = vor.u32 %v1791, %v1789
        %v1795 = vshll.u32 %v1670, 16
        %v1797 = vrot.slane %v1795, 1
        %v1798 = vsel %vm1686, %v1793, %v1797
        %v1799 = vshrl.u32 %v1670, 16
        %v1801 = vor.u32 %v1799, %v1797
        %v1803 = vshll.u32 %v1671, 16
        %v1805 = vrot.slane %v1803, 1
        %v1806 = vsel %vm1686, %v1801, %v1805
        %v1807 = vshrl.u32 %v1671, 16
        %v1809 = vor.u32 %v1807, %v1805
        %vm1819 = vcmask 1046528
        %v1820 = vrot.slane %v1726, 1
        %v1821 = vrot.slane %v1727, 1
        %v1822 = vsel %vm1819, %v1820, %v1821
        %v1823 = vrot.slane %v1728, 1
        %v1824 = vsel %vm1819, %v1821, %v1823
        %v1825 = vrot.slane %v1729, 1
        %v1826 = vsel %vm1819, %v1823, %v1825
        %v1827 = vrot.slane %v1730, 1
        %v1828 = vsel %vm1819, %v1825, %v1827
        %v1829 = vrot.slane %v1731, 1
        %v1830 = vsel %vm1819, %v1827, %v1829
        %v1831 = vrot.slane %v1732, 1
        %v1832 = vsel %vm1819, %v1829, %v1831
        %v1833 = vrot.slane %v1733, 1
        %v1834 = vsel %vm1819, %v1831, %v1833
        %v1835 = vrot.slane %v1734, 1
        %v1836 = vsel %vm1819, %v1833, %v1835
        %v1838 = vshll.u32 %v1672, 16
        %v1840 = vrot.slane %v1838, 1
        %v1841 = vsel %vm1686, %v1809, %v1840
        %v1842 = vshrl.u32 %v1672, 16
        %v1844 = vor.u32 %v1842, %v1840
        %v1848 = vrot.slane %v1739, 1
        %v1849 = vsel %vm1819, %v1848, %v1823
        %v1850 = vrot.slane %v1740, 1
        %v1851 = vsel %vm1819, %v1833, %v1850
        %v1852 = vrot.slane %v1741, 1
        %v1853 = vsel %vm1819, %v1850, %v1852
        %v1855 = vshll.u32 %v1673, 16
        %v1857 = vrot.slane %v1855, 1
        %v1858 = vsel %vm1686, %v1844, %v1857
        %v1859 = vshrl.u32 %v1673, 16
        %v1861 = vor.u32 %v1859, %v1857
        %v1865 = vrot.slane %v1745, 1
        %v1866 = vsel %vm1819, %v1865, %v1825
        %v1867 = vrot.slane %v1746, 1
        %v1868 = vsel %vm1819, %v1850, %v1867
        %v1869 = vrot.slane 0, 1
        %v1870 = vsel %vm1819, %v1867, %v1869
        %v1871 = vld [vmem:[#allocation13] sm:$0xf]
        %v1872 = vld [vmem:[#allocation13 + $0x4] sm:$0xf]
        %v1873 = vld [vmem:[#allocation13 + $0x8] sm:$0xf]
        %v1874 = vld [vmem:[#allocation13 + $0xc] sm:$0xf]
        %v1875 = vld [vmem:[#allocation13 + $0x10] sm:$0xf]
        %v1876 = vld [vmem:[#allocation13 + $0x14] sm:$0xf]
        %v1877 = vld [vmem:[#allocation13 + $0x18] sm:$0xf]
        %v1878 = vld [vmem:[#allocation13 + $0x1c] sm:$0xf]
        %v1879 = vld [vmem:[#allocation13 + $0x20] sm:$0xf]
        %v1880 = vld [vmem:[#allocation13 + $0x24] sm:$0xf]
        %v1881 = vld [vmem:[#allocation13 + $0x28] sm:$0xf]
        %v1882 = vld [vmem:[#allocation13 + $0x2c] sm:$0xf]
        %v1883 = vld [vmem:[#allocation13 + $0x30] sm:$0xf]
        %v1884 = vld [vmem:[#allocation13 + $0x34] sm:$0xf]
        %v1885 = vld [vmem:[#allocation13 + $0x38] sm:$0xf]
        %v1886 = vld [vmem:[#allocation13 + $0x3c] sm:$0xf]
        %v1887 = vld [vmem:[#allocation13 + $0x40] sm:$0xf]
        %v1888 = vld [vmem:[#allocation13 + $0x44] sm:$0xf]
        %v1889 = vld [vmem:[#allocation13 + $0x48] sm:$0xf]
        %v1890 = vld [vmem:[#allocation13 + $0x4c] sm:$0xf]
        %v1891 = vld [vmem:[#allocation13 + $0x50] sm:$0xf]
        %v1892 = vld [vmem:[#allocation13 + $0x54] sm:$0xf]
        %v1893 = vld [vmem:[#allocation13 + $0x58] sm:$0xf]
        %v1894 = vld [vmem:[#allocation13 + $0x5c] sm:$0xf]
        %v1895 = vld [vmem:[#allocation13 + $0x60] sm:$0xf]
        %v1896 = vld [vmem:[#allocation13 + $0x64] sm:$0xf]
        %v1897 = vld [vmem:[#allocation13 + $0x68] sm:$0xf]
        %v1898 = vld [vmem:[#allocation13 + $0x6c] sm:$0xf]
        %v1899 = vld [vmem:[#allocation13 + $0x70] sm:$0xf]
        %v1900 = vld [vmem:[#allocation13 + $0x74] sm:$0xf]
        %v1901 = vld [vmem:[#allocation13 + $0x78] sm:$0xf]
        %v1902 = vld [vmem:[#allocation13 + $0x7c] sm:$0xf]
        %v1903 = vld [vmem:[#allocation13 + $0x80] sm:$0xf]
        %v1904 = vld [vmem:[#allocation13 + $0x84] sm:$0xf]
        %v1905 = vld [vmem:[#allocation13 + $0x88] sm:$0xf]
        %v1906 = vld [vmem:[#allocation13 + $0x8c] sm:$0xf]
        %v1907 = vld [vmem:[#allocation13 + $0x90] sm:$0xf]
        %v1908 = vld [vmem:[#allocation13 + $0x94] sm:$0xf]
        %v1909 = vld [vmem:[#allocation13 + $0x98] sm:$0xf]
        %v1910 = vld [vmem:[#allocation13 + $0x9c] sm:$0xf]
        %v1911 = vld [vmem:[#allocation13 + $0xa0] sm:$0xf]
        %v1912 = vld [vmem:[#allocation13 + $0xa4] sm:$0xf]
        %v1913 = vld [vmem:[#allocation13 + $0xa8] sm:$0xf]
        %v1914 = vld [vmem:[#allocation13 + $0xac] sm:$0xf]
        %v1915 = vld [vmem:[#allocation13 + $0xb0] sm:$0xf]
        %v1916 = vld [vmem:[#allocation13 + $0xb4] sm:$0xf]
        %v1917 = vld [vmem:[#allocation13 + $0xb8] sm:$0xf]
        %v1918 = vld [vmem:[#allocation13 + $0xbc] sm:$0xf]
        %v1919 = vld [vmem:[#allocation13 + $0xc0] sm:$0xf]
        %v1920 = vld [vmem:[#allocation13 + $0xc4] sm:$0xf]
        %v1921 = vld [vmem:[#allocation13 + $0xc8] sm:$0xf]
        %v1922 = vld [vmem:[#allocation13 + $0xcc] sm:$0xf]
        %v1923 = vld [vmem:[#allocation13 + $0xd0] sm:$0xf]
        %v1924 = vld [vmem:[#allocation13 + $0xd4] sm:$0xf]
        %v1925 = vld [vmem:[#allocation13 + $0xd8] sm:$0xf]
        %v1926 = vld [vmem:[#allocation13 + $0xdc] sm:$0xf]
        %v1927 = vld [vmem:[#allocation13 + $0xe0] sm:$0xf]
        %v1928 = vld [vmem:[#allocation13 + $0xe4] sm:$0xf]
        %v1929 = vld [vmem:[#allocation13 + $0xe8] sm:$0xf]
        %v1930 = vld [vmem:[#allocation13 + $0xec] sm:$0xf]
        %v1931 = vld [vmem:[#allocation13 + $0xf0] sm:$0xf]
        %v1932 = vld [vmem:[#allocation13 + $0xf4] sm:$0xf]
        %v1933 = vld [vmem:[#allocation13 + $0xf8] sm:$0xf]
        %v1934 = vld [vmem:[#allocation13 + $0xfc] sm:$0xf]
        %v1935 = vld [vmem:[#allocation13 + $0x100] sm:$0xf]
        %v1936 = vld [vmem:[#allocation13 + $0x104] sm:$0xf]
        %v1937 = vld [vmem:[#allocation13 + $0x108] sm:$0xf]
        %v1938 = vld [vmem:[#allocation13 + $0x10c] sm:$0xf]
        %v1939 = vld [vmem:[#allocation13 + $0x110] sm:$0xf]
        %v1940 = vld [vmem:[#allocation13 + $0x114] sm:$0xf]
        %v1941 = vld [vmem:[#allocation13 + $0x118] sm:$0xf]
        %v1942 = vld [vmem:[#allocation13 + $0x11c] sm:$0xf]
        %v1943 = vld [vmem:[#allocation13 + $0x120] sm:$0xf]
        %v1944 = vld [vmem:[#allocation13 + $0x124] sm:$0xf]
        %v1945 = vld [vmem:[#allocation13 + $0x128] sm:$0xf]
        %v1946 = vld [vmem:[#allocation13 + $0x12c] sm:$0xf]
        %v1947 = vld [vmem:[#allocation13 + $0x130] sm:$0xf]
        %v1948 = vld [vmem:[#allocation13 + $0x134] sm:$0xf]
        %v1949 = vld [vmem:[#allocation13 + $0x138] sm:$0xf]
        %v1950 = vld [vmem:[#allocation13 + $0x13c] sm:$0xf]
        %v1951 = vld [vmem:[#allocation13 + $0x140] sm:$0xf]
        %v1952 = vld [vmem:[#allocation13 + $0x144] sm:$0xf]
        %v1953 = vld [vmem:[#allocation13 + $0x148] sm:$0xf]
        %v1954 = vld [vmem:[#allocation13 + $0x14c] sm:$0xf]
        %v1955 = vld [vmem:[#allocation13 + $0x150] sm:$0xf]
        %v1956 = vld [vmem:[#allocation13 + $0x154] sm:$0xf]
        %v1957 = vld [vmem:[#allocation13 + $0x158] sm:$0xf]
        %v1958 = vld [vmem:[#allocation13 + $0x15c] sm:$0xf]
        %v1959 = vld [vmem:[#allocation13 + $0x160] sm:$0xf]
        %v1960 = vld [vmem:[#allocation13 + $0x164] sm:$0xf]
        %v1961 = vld [vmem:[#allocation13 + $0x168] sm:$0xf]
        %v1962 = vld [vmem:[#allocation13 + $0x16c] sm:$0xf]
        %v1963 = vld [vmem:[#allocation13 + $0x170] sm:$0xf]
        %v1964 = vld [vmem:[#allocation13 + $0x174] sm:$0xf]
        %v1965 = vld [vmem:[#allocation13 + $0x178] sm:$0xf]
        %v1966 = vld [vmem:[#allocation13 + $0x17c] sm:$0xf]
        %v1967 = vld [vmem:[#allocation13 + $0x180] sm:$0xf]
        %v1968 = vld [vmem:[#allocation13 + $0x184] sm:$0xf]
        %v1969 = vld [vmem:[#allocation13 + $0x188] sm:$0xf]
        %v1970 = vld [vmem:[#allocation13 + $0x18c] sm:$0xf]
        %v1971 = vld [vmem:[#allocation13 + $0x190] sm:$0xf]
        %v1972 = vld [vmem:[#allocation13 + $0x194] sm:$0xf]
        %v1973 = vld [vmem:[#allocation13 + $0x198] sm:$0xf]
        %v1974 = vld [vmem:[#allocation13 + $0x19c] sm:$0xf]
        %v1975 = vld [vmem:[#allocation13 + $0x1a0] sm:$0xf]
        %v1976 = vld [vmem:[#allocation13 + $0x1a4] sm:$0xf]
        %v1977 = vld [vmem:[#allocation13 + $0x1a8] sm:$0xf]
        %v1978 = vld [vmem:[#allocation13 + $0x1ac] sm:$0xf]
        %v1979 = vld [vmem:[#allocation13 + $0x1b0] sm:$0xf]
        %v1980 = vld [vmem:[#allocation13 + $0x1b4] sm:$0xf]
        %v1981 = vld [vmem:[#allocation13 + $0x1b8] sm:$0xf]
        %v1982 = vld [vmem:[#allocation13 + $0x1bc] sm:$0xf]
        %v1983 = vld [vmem:[#allocation13 + $0x1c0] sm:$0xf]
        %v1984 = vld [vmem:[#allocation13 + $0x1c4] sm:$0xf]
        %v1985 = vld [vmem:[#allocation13 + $0x1c8] sm:$0xf]
        %v1986 = vld [vmem:[#allocation13 + $0x1cc] sm:$0xf]
        %v1987 = vld [vmem:[#allocation13 + $0x1d0] sm:$0xf]
        %v1988 = vld [vmem:[#allocation13 + $0x1d4] sm:$0xf]
        %v1989 = vld [vmem:[#allocation13 + $0x1d8] sm:$0xf]
        %v1990 = vld [vmem:[#allocation13 + $0x1dc] sm:$0xf]
        %v1991 = vld [vmem:[#allocation13 + $0x1e0] sm:$0xf]
        %v1992 = vld [vmem:[#allocation13 + $0x1e4] sm:$0xf]
        %v1993 = vld [vmem:[#allocation13 + $0x1e8] sm:$0xf]
        %v1994 = vld [vmem:[#allocation13 + $0x1ec] sm:$0xf]
        %v1995 = vld [vmem:[#allocation13 + $0x1f0] sm:$0xf]
        %v1996 = vld [vmem:[#allocation13 + $0x1f4] sm:$0xf]
        %v1997 = vld [vmem:[#allocation13 + $0x1f8] sm:$0xf]
        %v1998 = vld [vmem:[#allocation13 + $0x1fc] sm:$0xf]
        %v1999 = vld [vmem:[#allocation13 + $0x200] sm:$0xf]
        %v2000 = vld [vmem:[#allocation13 + $0x204] sm:$0xf]
        %v2001 = vld [vmem:[#allocation13 + $0x208] sm:$0xf]
        %v2002 = vld [vmem:[#allocation13 + $0x20c] sm:$0xf]
        %v2003 = vld [vmem:[#allocation13 + $0x210] sm:$0xf]
        %v2004 = vld [vmem:[#allocation13 + $0x214] sm:$0xf]
        %v2005 = vld [vmem:[#allocation13 + $0x218] sm:$0xf]
        %v2006 = vld [vmem:[#allocation13 + $0x21c] sm:$0xf]
        %v2007 = vld [vmem:[#allocation13 + $0x220] sm:$0xf]
        %v2008 = vld [vmem:[#allocation13 + $0x224] sm:$0xf]
        %v2009 = vld [vmem:[#allocation13 + $0x228] sm:$0xf]
        %v2010 = vld [vmem:[#allocation13 + $0x22c] sm:$0xf]
        %v2011 = vld [vmem:[#allocation13 + $0x230] sm:$0xf]
        %v2012 = vld [vmem:[#allocation13 + $0x234] sm:$0xf]
        %v2013 = vld [vmem:[#allocation13 + $0x238] sm:$0xf]
        %v2014 = vld [vmem:[#allocation13 + $0x23c] sm:$0xf]
        %v2016 = vshrl.u32 0, 16
        %v2018 = vrot.slane %v2016, 7
        %v2020 = vshrl.u32 %v1697, 16
        %v2022 = vrot.slane %v2020, 7
        %v2023 = vshll.u32 %v1697, 16
        %v2025 = vor.u32 %v2022, %v2023
        %v2026 = vsel %vm1714, %v2018, %v2025
        %v2028 = vshrl.u32 %v1750, 16
        %v2030 = vrot.slane %v2028, 7
        %v2032 = vshrl.u32 %v1758, 16
        %v2034 = vrot.slane %v2032, 7
        %v2035 = vshll.u32 %v1758, 16
        %v2037 = vor.u32 %v2034, %v2035
        %v2038 = vsel %vm1714, %v2030, %v2037
        %v2040 = vshrl.u32 %v1820, 16
        %v2042 = vrot.slane %v2040, 7
        %v2044 = vshrl.u32 %v1822, 16
        %v2046 = vrot.slane %v2044, 7
        %v2047 = vshll.u32 %v1822, 16
        %v2049 = vor.u32 %v2046, %v2047
        %v2050 = vsel %vm1714, %v2042, %v2049
        %v2052 = vshrl.u32 %v1736, 16
        %v2054 = vrot.slane %v2052, 7
        %v2056 = vshrl.u32 %v1698, 16
        %v2058 = vrot.slane %v2056, 7
        %v2059 = vshll.u32 %v1698, 16
        %v2061 = vor.u32 %v2058, %v2059
        %v2062 = vsel %vm1714, %v2054, %v2061
        %v2064 = vshrl.u32 %v1757, 16
        %v2066 = vrot.slane %v2064, 7
        %v2068 = vshrl.u32 %v1766, 16
        %v2070 = vrot.slane %v2068, 7
        %v2071 = vshll.u32 %v1766, 16
        %v2073 = vor.u32 %v2070, %v2071
        %v2074 = vsel %vm1714, %v2066, %v2073
        %v2076 = vshrl.u32 %v1848, 16
        %v2078 = vrot.slane %v2076, 7
        %v2080 = vshrl.u32 %v1849, 16
        %v2082 = vrot.slane %v2080, 7
        %v2083 = vshll.u32 %v1849, 16
        %v2085 = vor.u32 %v2082, %v2083
        %v2086 = vsel %vm1714, %v2078, %v2085
        %v2088 = vshrl.u32 %v1742, 16
        %v2090 = vrot.slane %v2088, 7
        %v2092 = vshrl.u32 %v1699, 16
        %v2094 = vrot.slane %v2092, 7
        %v2095 = vshll.u32 %v1699, 16
        %v2097 = vor.u32 %v2094, %v2095
        %v2098 = vsel %vm1714, %v2090, %v2097
        %v2100 = vshrl.u32 %v1765, 16
        %v2102 = vrot.slane %v2100, 7
        %v2104 = vshrl.u32 %v1774, 16
        %v2106 = vrot.slane %v2104, 7
        %v2107 = vshll.u32 %v1774, 16
        %v2109 = vor.u32 %v2106, %v2107
        %v2110 = vsel %vm1714, %v2102, %v2109
        %v2112 = vshrl.u32 %v1865, 16
        %v2114 = vrot.slane %v2112, 7
        %v2116 = vshrl.u32 %v1866, 16
        %v2118 = vrot.slane %v2116, 7
        %v2119 = vshll.u32 %v1866, 16
        %v2121 = vor.u32 %v2118, %v2119
        %v2122 = vsel %vm1714, %v2114, %v2121
        %v2123 = vsel %vm1714, %v2022, %v2061
        %v2124 = vsel %vm1714, %v2034, %v2073
        %v2126 = vshrl.u32 %v1824, 16
        %v2128 = vrot.slane %v2126, 7
        %v2129 = vshll.u32 %v1824, 16
        %v2131 = vor.u32 %v2128, %v2129
        %v2132 = vsel %vm1714, %v2046, %v2131
        %v2133 = vsel %vm1714, %v2058, %v2097
        %v2134 = vsel %vm1714, %v2070, %v2109
        %v2136 = vshrl.u32 %v1826, 16
        %v2138 = vrot.slane %v2136, 7
        %v2139 = vshll.u32 %v1826, 16
        %v2141 = vor.u32 %v2138, %v2139
        %v2142 = vsel %vm1714, %v2082, %v2141
        %v2144 = vshrl.u32 %v1700, 16
        %v2146 = vrot.slane %v2144, 7
        %v2147 = vshll.u32 %v1700, 16
        %v2149 = vor.u32 %v2146, %v2147
        %v2150 = vsel %vm1714, %v2094, %v2149
        %v2152 = vshrl.u32 %v1782, 16
        %v2154 = vrot.slane %v2152, 7
        %v2155 = vshll.u32 %v1782, 16
        %v2157 = vor.u32 %v2154, %v2155
        %v2158 = vsel %vm1714, %v2106, %v2157
        %v2160 = vshrl.u32 %v1828, 16
        %v2162 = vrot.slane %v2160, 7
        %v2163 = vshll.u32 %v1828, 16
        %v2165 = vor.u32 %v2162, %v2163
        %v2166 = vsel %vm1714, %v2118, %v2165
        %v2167 = vsel %vm1714, %v2128, %v2141
        %v2168 = vsel %vm1714, %v2138, %v2165
        %v2170 = vshrl.u32 %v1701, 16
        %v2172 = vrot.slane %v2170, 7
        %v2173 = vshll.u32 %v1701, 16
        %v2175 = vor.u32 %v2172, %v2173
        %v2176 = vsel %vm1714, %v2146, %v2175
        %v2178 = vshrl.u32 %v1790, 16
        %v2180 = vrot.slane %v2178, 7
        %v2181 = vshll.u32 %v1790, 16
        %v2183 = vor.u32 %v2180, %v2181
        %v2184 = vsel %vm1714, %v2154, %v2183
        %v2186 = vshrl.u32 %v1830, 16
        %v2188 = vrot.slane %v2186, 7
        %v2189 = vshll.u32 %v1830, 16
        %v2191 = vor.u32 %v2188, %v2189
        %v2192 = vsel %vm1714, %v2162, %v2191
        %v2194 = vshrl.u32 %v1702, 16
        %v2196 = vrot.slane %v2194, 7
        %v2197 = vshll.u32 %v1702, 16
        %v2199 = vor.u32 %v2196, %v2197
        %v2200 = vsel %vm1714, %v2172, %v2199
        %v2202 = vshrl.u32 %v1798, 16
        %v2204 = vrot.slane %v2202, 7
        %v2205 = vshll.u32 %v1798, 16
        %v2207 = vor.u32 %v2204, %v2205
        %v2208 = vsel %vm1714, %v2180, %v2207
        %v2210 = vshrl.u32 %v1832, 16
        %v2212 = vrot.slane %v2210, 7
        %v2213 = vshll.u32 %v1832, 16
        %v2215 = vor.u32 %v2212, %v2213
        %v2216 = vsel %vm1714, %v2188, %v2215
        %v2218 = vshrl.u32 %v1703, 16
        %v2220 = vrot.slane %v2218, 7
        %v2221 = vshll.u32 %v1703, 16
        %v2223 = vor.u32 %v2220, %v2221
        %v2224 = vsel %vm1714, %v2196, %v2223
        %v2226 = vshrl.u32 %v1806, 16
        %v2228 = vrot.slane %v2226, 7
        %v2229 = vshll.u32 %v1806, 16
        %v2231 = vor.u32 %v2228, %v2229
        %v2232 = vsel %vm1714, %v2204, %v2231
        %v2234 = vshrl.u32 %v1834, 16
        %v2236 = vrot.slane %v2234, 7
        %v2237 = vshll.u32 %v1834, 16
        %v2239 = vor.u32 %v2236, %v2237
        %v2240 = vsel %vm1714, %v2212, %v2239
        %v2242 = vshrl.u32 %v1737, 16
        %v2244 = vrot.slane %v2242, 7
        %v2245 = vshll.u32 %v1737, 16
        %v2247 = vor.u32 %v2244, %v2245
        %v2248 = vsel %vm1714, %v2220, %v2247
        %v2250 = vshrl.u32 %v1841, 16
        %v2252 = vrot.slane %v2250, 7
        %v2253 = vshll.u32 %v1841, 16
        %v2255 = vor.u32 %v2252, %v2253
        %v2256 = vsel %vm1714, %v2228, %v2255
        %v2258 = vshrl.u32 %v1851, 16
        %v2260 = vrot.slane %v2258, 7
        %v2261 = vshll.u32 %v1851, 16
        %v2263 = vor.u32 %v2260, %v2261
        %v2264 = vsel %vm1714, %v2236, %v2263
        %v2266 = vshrl.u32 %v1743, 16
        %v2268 = vrot.slane %v2266, 7
        %v2269 = vshll.u32 %v1743, 16
        %v2271 = vor.u32 %v2268, %v2269
        %v2272 = vsel %vm1714, %v2244, %v2271
        %v2274 = vshrl.u32 %v1858, 16
        %v2276 = vrot.slane %v2274, 7
        %v2277 = vshll.u32 %v1858, 16
        %v2279 = vor.u32 %v2276, %v2277
        %v2280 = vsel %vm1714, %v2252, %v2279
        %v2282 = vshrl.u32 %v1868, 16
        %v2284 = vrot.slane %v2282, 7
        %v2285 = vshll.u32 %v1868, 16
        %v2287 = vor.u32 %v2284, %v2285
        %v2288 = vsel %vm1714, %v2260, %v2287
        %v2290 = vshrl.u32 %v1704, 16
        %v2292 = vrot.slane %v2290, 7
        %v2293 = vshll.u32 %v1704, 16
        %v2295 = vor.u32 %v2292, %v2293
        %v2296 = vsel %vm1714, %v2220, %v2295
        %v2298 = vshrl.u32 %v1809, 16
        %v2300 = vrot.slane %v2298, 7
        %v2301 = vshll.u32 %v1809, 16
        %v2303 = vor.u32 %v2300, %v2301
        %v2304 = vsel %vm1714, %v2228, %v2303
        %v2306 = vshrl.u32 %v1836, 16
        %v2308 = vrot.slane %v2306, 7
        %v2309 = vshll.u32 %v1836, 16
        %v2311 = vor.u32 %v2308, %v2309
        %v2312 = vsel %vm1714, %v2236, %v2311
        %v2314 = vshrl.u32 %v1738, 16
        %v2316 = vrot.slane %v2314, 7
        %v2317 = vshll.u32 %v1738, 16
        %v2319 = vor.u32 %v2316, %v2317
        %v2320 = vsel %vm1714, %v2244, %v2319
        %v2322 = vshrl.u32 %v1844, 16
        %v2324 = vrot.slane %v2322, 7
        %v2325 = vshll.u32 %v1844, 16
        %v2327 = vor.u32 %v2324, %v2325
        %v2328 = vsel %vm1714, %v2252, %v2327
        %v2330 = vshrl.u32 %v1853, 16
        %v2332 = vrot.slane %v2330, 7
        %v2333 = vshll.u32 %v1853, 16
        %v2335 = vor.u32 %v2332, %v2333
        %v2336 = vsel %vm1714, %v2260, %v2335
        %v2338 = vshrl.u32 %v1744, 16
        %v2340 = vrot.slane %v2338, 7
        %v2341 = vshll.u32 %v1744, 16
        %v2343 = vor.u32 %v2340, %v2341
        %v2344 = vsel %vm1714, %v2268, %v2343
        %v2346 = vshrl.u32 %v1861, 16
        %v2348 = vrot.slane %v2346, 7
        %v2349 = vshll.u32 %v1861, 16
        %v2351 = vor.u32 %v2348, %v2349
        %v2352 = vsel %vm1714, %v2276, %v2351
        %v2354 = vshrl.u32 %v1870, 16
        %v2356 = vrot.slane %v2354, 7
        %v2357 = vshll.u32 %v1870, 16
        %v2359 = vor.u32 %v2356, %v2357
        %v2360 = vsel %vm1714, %v2284, %v2359
        %v2549 = vunpack.c.l.b16 %v1871
        %v2550 = vunpack.c.l.b16 %v1872
        %v2551 = vunpack.c.l.b16 %v1873
        %v2552 = vunpack.c.l.b16 %v1874
        %v2553 = vunpack.c.l.b16 %v1875
        %v2554 = vunpack.c.l.b16 %v1876
        %v2555 = vunpack.c.l.b16 %v1877
        %v2556 = vunpack.c.l.b16 %v1878
        %v2557 = vunpack.c.l.b16 %v1879
        %v2558 = vunpack.c.l.b16 %v1880
        %v2559 = vunpack.c.l.b16 %v1881
        %v2560 = vunpack.c.l.b16 %v1882
        %v2561 = vunpack.c.l.b16 %v1883
        %v2562 = vunpack.c.l.b16 %v1884
        %v2563 = vunpack.c.l.b16 %v1885
        %v2564 = vunpack.c.l.b16 %v1886
        %v2565 = vunpack.c.l.b16 %v1887
        %v2566 = vunpack.c.l.b16 %v1888
        %v2567 = vunpack.c.l.b16 %v1889
        %v2568 = vunpack.c.l.b16 %v1890
        %v2569 = vunpack.c.l.b16 %v1891
        %v2570 = vunpack.c.l.b16 %v1892
        %v2571 = vunpack.c.l.b16 %v1893
        %v2572 = vunpack.c.l.b16 %v1894
        %v2573 = vunpack.c.l.b16 %v1895
        %v2574 = vunpack.c.l.b16 %v1896
        %v2575 = vunpack.c.l.b16 %v1897
        %v2576 = vunpack.c.l.b16 %v1898
        %v2577 = vunpack.c.l.b16 %v1899
        %v2578 = vunpack.c.l.b16 %v1900
        %v2579 = vunpack.c.l.b16 %v1901
        %v2580 = vunpack.c.l.b16 %v1902
        %v2581 = vunpack.c.l.b16 %v1903
        %v2582 = vunpack.c.l.b16 %v1904
        %v2583 = vunpack.c.l.b16 %v1905
        %v2584 = vunpack.c.l.b16 %v1906
        %v2585 = vunpack.c.l.b16 %v1907
        %v2586 = vunpack.c.l.b16 %v1908
        %v2587 = vunpack.c.l.b16 %v1909
        %v2588 = vunpack.c.l.b16 %v1910
        %v2589 = vunpack.c.l.b16 %v1911
        %v2590 = vunpack.c.l.b16 %v1912
        %v2591 = vunpack.c.l.b16 %v1913
        %v2592 = vunpack.c.l.b16 %v1914
        %v2593 = vunpack.c.l.b16 %v1915
        %v2594 = vunpack.c.l.b16 %v1916
        %v2595 = vunpack.c.l.b16 %v1917
        %v2596 = vunpack.c.l.b16 %v1918
        %v2597 = vunpack.c.l.b16 %v1919
        %v2598 = vunpack.c.l.b16 %v1920
        %v2599 = vunpack.c.l.b16 %v1921
        %v2600 = vunpack.c.l.b16 %v1922
        %v2601 = vunpack.c.l.b16 %v1923
        %v2602 = vunpack.c.l.b16 %v1924
        %v2603 = vunpack.c.l.b16 %v1925
        %v2604 = vunpack.c.l.b16 %v1926
        %v2605 = vunpack.c.l.b16 %v1927
        %v2606 = vunpack.c.l.b16 %v1928
        %v2607 = vunpack.c.l.b16 %v1929
        %v2608 = vunpack.c.l.b16 %v1930
        %v2609 = vunpack.c.l.b16 %v1931
        %v2610 = vunpack.c.l.b16 %v1932
        %v2611 = vunpack.c.l.b16 %v1933
        %v2612 = vunpack.c.l.b16 %v1934
        %v2613 = vunpack.c.l.b16 %v1935
        %v2614 = vunpack.c.l.b16 %v1936
        %v2615 = vunpack.c.l.b16 %v1937
        %v2616 = vunpack.c.l.b16 %v1938
        %v2617 = vunpack.c.l.b16 %v1939
        %v2618 = vunpack.c.l.b16 %v1940
        %v2619 = vunpack.c.l.b16 %v1941
        %v2620 = vunpack.c.l.b16 %v1942
        %v2621 = vunpack.c.l.b16 %v1943
        %v2622 = vunpack.c.l.b16 %v1944
        %v2623 = vunpack.c.l.b16 %v1945
        %v2624 = vunpack.c.l.b16 %v1946
        %v2625 = vunpack.c.l.b16 %v1947
        %v2626 = vunpack.c.l.b16 %v1948
        %v2627 = vunpack.c.l.b16 %v1949
        %v2628 = vunpack.c.l.b16 %v1950
        %v2629 = vunpack.c.l.b16 %v1951
        %v2630 = vunpack.c.l.b16 %v1952
        %v2631 = vunpack.c.l.b16 %v1953
        %v2632 = vunpack.c.l.b16 %v1954
        %v2633 = vunpack.c.l.b16 %v1955
        %v2634 = vunpack.c.l.b16 %v1956
        %v2635 = vunpack.c.l.b16 %v1957
        %v2636 = vunpack.c.l.b16 %v1958
        %v2637 = vunpack.c.l.b16 %v1959
        %v2638 = vunpack.c.l.b16 %v1960
        %v2639 = vunpack.c.l.b16 %v1961
        %v2640 = vunpack.c.l.b16 %v1962
        %v2641 = vunpack.c.l.b16 %v1963
        %v2642 = vunpack.c.l.b16 %v1964
        %v2643 = vunpack.c.l.b16 %v1965
        %v2644 = vunpack.c.l.b16 %v1966
        %v2645 = vunpack.c.l.b16 %v1967
        %v2646 = vunpack.c.l.b16 %v1968
        %v2647 = vunpack.c.l.b16 %v1969
        %v2648 = vunpack.c.l.b16 %v1970
        %v2649 = vunpack.c.l.b16 %v1971
        %v2650 = vunpack.c.l.b16 %v1972
        %v2651 = vunpack.c.l.b16 %v1973
        %v2652 = vunpack.c.l.b16 %v1974
        %v2653 = vunpack.c.l.b16 %v1975
        %v2654 = vunpack.c.l.b16 %v1976
        %v2655 = vunpack.c.l.b16 %v1977
        %v2656 = vunpack.c.l.b16 %v1978
        %v2657 = vunpack.c.l.b16 %v1979
        %v2658 = vunpack.c.l.b16 %v1980
        %v2659 = vunpack.c.l.b16 %v1981
        %v2660 = vunpack.c.l.b16 %v1982
        %v2661 = vunpack.c.l.b16 %v1983
        %v2662 = vunpack.c.l.b16 %v1984
        %v2663 = vunpack.c.l.b16 %v1985
        %v2664 = vunpack.c.l.b16 %v1986
        %v2665 = vunpack.c.l.b16 %v1987
        %v2666 = vunpack.c.l.b16 %v1988
        %v2667 = vunpack.c.l.b16 %v1989
        %v2668 = vunpack.c.l.b16 %v1990
        %v2669 = vunpack.c.l.b16 %v1991
        %v2670 = vunpack.c.l.b16 %v1992
        %v2671 = vunpack.c.l.b16 %v1993
        %v2672 = vunpack.c.l.b16 %v1994
        %v2673 = vunpack.c.l.b16 %v1995
        %v2674 = vunpack.c.l.b16 %v1996
        %v2675 = vunpack.c.l.b16 %v1997
        %v2676 = vunpack.c.l.b16 %v1998
        %v2677 = vunpack.c.l.b16 %v1999
        %v2678 = vunpack.c.l.b16 %v2000
        %v2679 = vunpack.c.l.b16 %v2001
        %v2680 = vunpack.c.l.b16 %v2002
        %v2681 = vunpack.c.l.b16 %v2003
        %v2682 = vunpack.c.l.b16 %v2004
        %v2683 = vunpack.c.l.b16 %v2005
        %v2684 = vunpack.c.l.b16 %v2006
        %v2685 = vunpack.c.l.b16 %v2007
        %v2686 = vunpack.c.l.b16 %v2008
        %v2687 = vunpack.c.l.b16 %v2009
        %v2688 = vunpack.c.l.b16 %v2010
        %v2689 = vunpack.c.l.b16 %v2011
        %v2690 = vunpack.c.l.b16 %v2012
        %v2691 = vunpack.c.l.b16 %v2013
        %v2692 = vunpack.c.l.b16 %v2014
        %v2693 = vpack.c.b16 %v2550, %v2549
        %v2694 = vpack.c.b16 %v2552, %v2551
        %v2695 = vpack.c.b16 %v2554, %v2553
        %v2696 = vpack.c.b16 %v2556, %v2555
        %v2697 = vpack.c.b16 %v2558, %v2557
        %v2698 = vpack.c.b16 %v2560, %v2559
        %v2699 = vpack.c.b16 %v2562, %v2561
        %v2700 = vpack.c.b16 %v2564, %v2563
        %v2701 = vpack.c.b16 %v2566, %v2565
        %v2702 = vpack.c.b16 %v2568, %v2567
        %v2703 = vpack.c.b16 %v2570, %v2569
        %v2704 = vpack.c.b16 %v2572, %v2571
        %v2705 = vpack.c.b16 %v2574, %v2573
        %v2706 = vpack.c.b16 %v2576, %v2575
        %v2707 = vpack.c.b16 %v2578, %v2577
        %v2708 = vpack.c.b16 %v2580, %v2579
        %v2709 = vpack.c.b16 %v2582, %v2581
        %v2710 = vpack.c.b16 %v2584, %v2583
        %v2711 = vpack.c.b16 %v2586, %v2585
        %v2712 = vpack.c.b16 %v2588, %v2587
        %v2713 = vpack.c.b16 %v2590, %v2589
        %v2714 = vpack.c.b16 %v2592, %v2591
        %v2715 = vpack.c.b16 %v2594, %v2593
        %v2716 = vpack.c.b16 %v2596, %v2595
        %v2717 = vpack.c.b16 %v2598, %v2597
        %v2718 = vpack.c.b16 %v2600, %v2599
        %v2719 = vpack.c.b16 %v2602, %v2601
        %v2720 = vpack.c.b16 %v2604, %v2603
        %v2721 = vpack.c.b16 %v2606, %v2605
        %v2722 = vpack.c.b16 %v2608, %v2607
        %v2723 = vpack.c.b16 %v2610, %v2609
        %v2724 = vpack.c.b16 %v2612, %v2611
        %v2725 = vpack.c.b16 %v2614, %v2613
        %v2726 = vpack.c.b16 %v2616, %v2615
        %v2727 = vpack.c.b16 %v2618, %v2617
        %v2728 = vpack.c.b16 %v2620, %v2619
        %v2729 = vpack.c.b16 %v2622, %v2621
        %v2730 = vpack.c.b16 %v2624, %v2623
        %v2731 = vpack.c.b16 %v2626, %v2625
        %v2732 = vpack.c.b16 %v2628, %v2627
        %v2733 = vpack.c.b16 %v2630, %v2629
        %v2734 = vpack.c.b16 %v2632, %v2631
        %v2735 = vpack.c.b16 %v2634, %v2633
        %v2736 = vpack.c.b16 %v2636, %v2635
        %v2737 = vpack.c.b16 %v2638, %v2637
        %v2738 = vpack.c.b16 %v2640, %v2639
        %v2739 = vpack.c.b16 %v2642, %v2641
        %v2740 = vpack.c.b16 %v2644, %v2643
        %v2741 = vpack.c.b16 %v2646, %v2645
        %v2742 = vpack.c.b16 %v2648, %v2647
        %v2743 = vpack.c.b16 %v2650, %v2649
        %v2744 = vpack.c.b16 %v2652, %v2651
        %v2745 = vpack.c.b16 %v2654, %v2653
        %v2746 = vpack.c.b16 %v2656, %v2655
        %v2747 = vpack.c.b16 %v2658, %v2657
        %v2748 = vpack.c.b16 %v2660, %v2659
        %v2749 = vpack.c.b16 %v2662, %v2661
        %v2750 = vpack.c.b16 %v2664, %v2663
        %v2751 = vpack.c.b16 %v2666, %v2665
        %v2752 = vpack.c.b16 %v2668, %v2667
        %v2753 = vpack.c.b16 %v2670, %v2669
        %v2754 = vpack.c.b16 %v2672, %v2671
        %v2755 = vpack.c.b16 %v2674, %v2673
        %v2756 = vpack.c.b16 %v2676, %v2675
        %v2757 = vpack.c.b16 %v2678, %v2677
        %v2758 = vpack.c.b16 %v2680, %v2679
        %v2759 = vpack.c.b16 %v2682, %v2681
        %v2760 = vpack.c.b16 %v2684, %v2683
        %v2761 = vpack.c.b16 %v2686, %v2685
        %v2762 = vpack.c.b16 %v2688, %v2687
        %v2763 = vpack.c.b16 %v2690, %v2689
        %v2764 = vpack.c.b16 %v2692, %v2691
        %2837 = vmatprep.subr.bf16.mxu0 0
        %2838 = vmatpush1.bf16.msra.mxu0 %v2700
        %2839 = vmatprep.subr.bf16.mxu0 0
        %2840 = vmatpush1.bf16.msra.mxu0 %v2699
        %2841 = vmatprep.subr.bf16.mxu0 0
        %2842 = vmatpush1.bf16.msra.mxu0 %v2698
        %2843 = vmatprep.subr.bf16.mxu0 0
        %2844 = vmatpush1.bf16.msra.mxu0 %v2697
        %2845 = vmatprep.subr.bf16.mxu0 0
        %2846 = vmatpush1.bf16.msra.mxu0 %v2696
        %2847 = vmatprep.subr.bf16.mxu0 0
        %2848 = vmatpush1.bf16.msra.mxu0 %v2695
        %2849 = vmatprep.subr.bf16.mxu0 0
        %2850 = vmatpush1.bf16.msra.mxu0 %v2694
        %2851 = vmatprep.subr.bf16.mxu0 0
        %2852 = vmatpush1.bf16.msra.mxu0 %v2693
        %2853 = vmatprep.subr.bf16.mxu0 0
        %2854 = vmatpush2.bf16.msra.mxu0 %v2708
        %2855 = vmatprep.subr.bf16.mxu0 0
        %2856 = vmatpush2.bf16.msra.mxu0 %v2707
        %2857 = vmatprep.subr.bf16.mxu0 0
        %2858 = vmatpush2.bf16.msra.mxu0 %v2706
        %2859 = vmatprep.subr.bf16.mxu0 0
        %2860 = vmatpush2.bf16.msra.mxu0 %v2705
        %2861 = vmatprep.subr.bf16.mxu0 0
        %2862 = vmatpush2.bf16.msra.mxu0 %v2704
        %2863 = vmatprep.subr.bf16.mxu0 0
        %2864 = vmatpush2.bf16.msra.mxu0 %v2703
        %2865 = vmatprep.subr.bf16.mxu0 0
        %2866 = vmatpush2.bf16.msra.mxu0 %v2702
        %2867 = vmatprep.subr.bf16.mxu0 0
        %2868 = vmatpush2.bf16.msra.mxu0 %v2701
        %2869 = vmatprep.mubr.bf16.mxu0 %v2038
        %2870 = vmatmul.mubr.bf16.gmra.mxu0 %v2026
        %v2871 = vpop.f32.mrf.mxu0
        %v2872 = vadd.f32 0.0, %v2871
        %v2873 = vpop.f32.mrf.mxu0
        %v2874 = vpop.f32.mrf.mxu0
        %v2875 = vadd.f32 0.0, %v2874
        %v2876 = vpop.f32.mrf.mxu0
        %2877 = vmatprep.mubr.bf16.mxu0 %v2124
        %2878 = vmatmul.mubr.bf16.gmra.mxu0 %v2123
        %v2879 = vpop.f32.mrf.mxu0
        %v2880 = vadd.f32 0.0, %v2879
        %v2881 = vpop.f32.mrf.mxu0
        %v2882 = vpop.f32.mrf.mxu0
        %v2883 = vadd.f32 0.0, %v2882
        %v2884 = vpop.f32.mrf.mxu0
        %2885 = vmatprep.mubr.bf16.mxu0 %v2134
        %2886 = vmatmul.mubr.bf16.gmra.mxu0 %v2133
        %v2887 = vpop.f32.mrf.mxu0
        %v2888 = vadd.f32 0.0, %v2887
        %v2889 = vpop.f32.mrf.mxu0
        %v2890 = vpop.f32.mrf.mxu0
        %v2891 = vadd.f32 0.0, %v2890
        %v2892 = vpop.f32.mrf.mxu0
        %2893 = vmatprep.mubr.bf16.mxu0 %v2158
        %2894 = vmatmul.mubr.bf16.gmra.mxu0 %v2150
        %v2895 = vpop.f32.mrf.mxu0
        %v2896 = vadd.f32 0.0, %v2895
        %v2897 = vpop.f32.mrf.mxu0
        %v2898 = vpop.f32.mrf.mxu0
        %v2899 = vadd.f32 0.0, %v2898
        %v2900 = vpop.f32.mrf.mxu0
        %2901 = vmatprep.mubr.bf16.mxu0 %v2184
        %2902 = vmatmul.mubr.bf16.gmra.mxu0 %v2176
        %v2903 = vpop.f32.mrf.mxu0
        %v2904 = vadd.f32 0.0, %v2903
        %v2905 = vpop.f32.mrf.mxu0
        %v2906 = vpop.f32.mrf.mxu0
        %v2907 = vadd.f32 0.0, %v2906
        %v2908 = vpop.f32.mrf.mxu0
        %2909 = vmatprep.mubr.bf16.mxu0 %v2208
        %2910 = vmatmul.mubr.bf16.gmra.mxu0 %v2200
        %v2911 = vpop.f32.mrf.mxu0
        %v2912 = vadd.f32 0.0, %v2911
        %v2913 = vpop.f32.mrf.mxu0
        %v2914 = vpop.f32.mrf.mxu0
        %v2915 = vadd.f32 0.0, %v2914
        %v2916 = vpop.f32.mrf.mxu0
        %2917 = vmatprep.mubr.bf16.mxu0 %v2232
        %2918 = vmatmul.mubr.bf16.gmra.mxu0 %v2224
        %v2919 = vpop.f32.mrf.mxu0
        %v2920 = vadd.f32 0.0, %v2919
        %v2921 = vpop.f32.mrf.mxu0
        %v2922 = vpop.f32.mrf.mxu0
        %v2923 = vadd.f32 0.0, %v2922
        %v2924 = vpop.f32.mrf.mxu0
        %2925 = vmatprep.mubr.bf16.mxu0 %v2304
        %2926 = vmatmul.mubr.bf16.gmra.mxu0 %v2296
        %v2927 = vpop.f32.mrf.mxu0
        %v2928 = vadd.f32 0.0, %v2927
        %v2929 = vpop.f32.mrf.mxu0
        %v2930 = vpop.f32.mrf.mxu0
        %v2931 = vadd.f32 0.0, %v2930
        %v2932 = vpop.f32.mrf.mxu0
        %2933 = vdwg.mxu0
        %2934 = vmatprep.subr.bf16.mxu0 0
        %2935 = vmatpush1.bf16.msra.mxu0 %v2716
        %2936 = vmatprep.subr.bf16.mxu0 0
        %2937 = vmatpush1.bf16.msra.mxu0 %v2715
        %2938 = vmatprep.subr.bf16.mxu0 0
        %2939 = vmatpush1.bf16.msra.mxu0 %v2714
        %2940 = vmatprep.subr.bf16.mxu0 0
        %2941 = vmatpush1.bf16.msra.mxu0 %v2713
        %2942 = vmatprep.subr.bf16.mxu0 0
        %2943 = vmatpush1.bf16.msra.mxu0 %v2712
        %2944 = vmatprep.subr.bf16.mxu0 0
        %2945 = vmatpush1.bf16.msra.mxu0 %v2711
        %2946 = vmatprep.subr.bf16.mxu0 0
        %2947 = vmatpush1.bf16.msra.mxu0 %v2710
        %2948 = vmatprep.subr.bf16.mxu0 0
        %2949 = vmatpush1.bf16.msra.mxu0 %v2709
        %2950 = vmatprep.subr.bf16.mxu0 0
        %2951 = vmatpush2.bf16.msra.mxu0 %v2724
        %2952 = vmatprep.subr.bf16.mxu0 0
        %2953 = vmatpush2.bf16.msra.mxu0 %v2723
        %2954 = vmatprep.subr.bf16.mxu0 0
        %2955 = vmatpush2.bf16.msra.mxu0 %v2722
        %2956 = vmatprep.subr.bf16.mxu0 0
        %2957 = vmatpush2.bf16.msra.mxu0 %v2721
        %2958 = vmatprep.subr.bf16.mxu0 0
        %2959 = vmatpush2.bf16.msra.mxu0 %v2720
        %2960 = vmatprep.subr.bf16.mxu0 0
        %2961 = vmatpush2.bf16.msra.mxu0 %v2719
        %2962 = vmatprep.subr.bf16.mxu0 0
        %2963 = vmatpush2.bf16.msra.mxu0 %v2718
        %2964 = vmatprep.subr.bf16.mxu0 0
        %2965 = vmatpush2.bf16.msra.mxu0 %v2717
        %2966 = vmatprep.mubr.bf16.mxu0 %v2062
        %2967 = vmatmul.mubr.bf16.gmra.mxu0 %v2050
        %v2968 = vpop.f32.mrf.mxu0
        %v2969 = vadd.f32 %v2872, %v2968
        %v2970 = vpop.f32.mrf.mxu0
        %v2971 = vpop.f32.mrf.mxu0
        %v2972 = vadd.f32 %v2875, %v2971
        %v2973 = vpop.f32.mrf.mxu0
        %2974 = vmatprep.mubr.bf16.mxu0 %v2133
        %2975 = vmatmul.mubr.bf16.gmra.mxu0 %v2132
        %v2976 = vpop.f32.mrf.mxu0
        %v2977 = vadd.f32 %v2880, %v2976
        %v2978 = vpop.f32.mrf.mxu0
        %v2979 = vpop.f32.mrf.mxu0
        %v2980 = vadd.f32 %v2883, %v2979
        %v2981 = vpop.f32.mrf.mxu0
        %2982 = vmatprep.mubr.bf16.mxu0 %v2150
        %2983 = vmatmul.mubr.bf16.gmra.mxu0 %v2167
        %v2984 = vpop.f32.mrf.mxu0
        %v2985 = vadd.f32 %v2888, %v2984
        %v2986 = vpop.f32.mrf.mxu0
        %v2987 = vpop.f32.mrf.mxu0
        %v2988 = vadd.f32 %v2891, %v2987
        %v2989 = vpop.f32.mrf.mxu0
        %2990 = vmatprep.mubr.bf16.mxu0 %v2176
        %2991 = vmatmul.mubr.bf16.gmra.mxu0 %v2168
        %v2992 = vpop.f32.mrf.mxu0
        %v2993 = vadd.f32 %v2896, %v2992
        %v2994 = vpop.f32.mrf.mxu0
        %v2995 = vpop.f32.mrf.mxu0
        %v2996 = vadd.f32 %v2899, %v2995
        %v2997 = vpop.f32.mrf.mxu0
        %2998 = vmatprep.mubr.bf16.mxu0 %v2200
        %2999 = vmatmul.mubr.bf16.gmra.mxu0 %v2192
        %v3000 = vpop.f32.mrf.mxu0
        %v3001 = vadd.f32 %v2904, %v3000
        %v3002 = vpop.f32.mrf.mxu0
        %v3003 = vpop.f32.mrf.mxu0
        %v3004 = vadd.f32 %v2907, %v3003
        %v3005 = vpop.f32.mrf.mxu0
        %3006 = vmatprep.mubr.bf16.mxu0 %v2224
        %3007 = vmatmul.mubr.bf16.gmra.mxu0 %v2216
        %v3008 = vpop.f32.mrf.mxu0
        %v3009 = vadd.f32 %v2912, %v3008
        %v3010 = vpop.f32.mrf.mxu0
        %v3011 = vpop.f32.mrf.mxu0
        %v3012 = vadd.f32 %v2915, %v3011
        %v3013 = vpop.f32.mrf.mxu0
        %3014 = vmatprep.mubr.bf16.mxu0 %v2248
        %3015 = vmatmul.mubr.bf16.gmra.mxu0 %v2240
        %v3016 = vpop.f32.mrf.mxu0
        %v3017 = vadd.f32 %v2920, %v3016
        %v3018 = vpop.f32.mrf.mxu0
        %v3019 = vpop.f32.mrf.mxu0
        %v3020 = vadd.f32 %v2923, %v3019
        %v3021 = vpop.f32.mrf.mxu0
        %3022 = vmatprep.mubr.bf16.mxu0 %v2320
        %3023 = vmatmul.mubr.bf16.gmra.mxu0 %v2312
        %v3024 = vpop.f32.mrf.mxu0
        %v3025 = vadd.f32 %v2928, %v3024
        %v3026 = vpop.f32.mrf.mxu0
        %v3027 = vpop.f32.mrf.mxu0
        %v3028 = vadd.f32 %v2931, %v3027
        %v3029 = vpop.f32.mrf.mxu0
        %3030 = vdwg.mxu0
        %3031 = vmatprep.subr.bf16.mxu0 0
        %3032 = vmatpush1.bf16.msra.mxu0 %v2732
        %3033 = vmatprep.subr.bf16.mxu0 0
        %3034 = vmatpush1.bf16.msra.mxu0 %v2731
        %3035 = vmatprep.subr.bf16.mxu0 0
        %3036 = vmatpush1.bf16.msra.mxu0 %v2730
        %3037 = vmatprep.subr.bf16.mxu0 0
        %3038 = vmatpush1.bf16.msra.mxu0 %v2729
        %3039 = vmatprep.subr.bf16.mxu0 0
        %3040 = vmatpush1.bf16.msra.mxu0 %v2728
        %3041 = vmatprep.subr.bf16.mxu0 0
        %3042 = vmatpush1.bf16.msra.mxu0 %v2727
        %3043 = vmatprep.subr.bf16.mxu0 0
        %3044 = vmatpush1.bf16.msra.mxu0 %v2726
        %3045 = vmatprep.subr.bf16.mxu0 0
        %3046 = vmatpush1.bf16.msra.mxu0 %v2725
        %3047 = vmatprep.subr.bf16.mxu0 0
        %3048 = vmatpush2.bf16.msra.mxu0 %v2740
        %3049 = vmatprep.subr.bf16.mxu0 0
        %3050 = vmatpush2.bf16.msra.mxu0 %v2739
        %3051 = vmatprep.subr.bf16.mxu0 0
        %3052 = vmatpush2.bf16.msra.mxu0 %v2738
        %3053 = vmatprep.subr.bf16.mxu0 0
        %3054 = vmatpush2.bf16.msra.mxu0 %v2737
        %3055 = vmatprep.subr.bf16.mxu0 0
        %3056 = vmatpush2.bf16.msra.mxu0 %v2736
        %3057 = vmatprep.subr.bf16.mxu0 0
        %3058 = vmatpush2.bf16.msra.mxu0 %v2735
        %3059 = vmatprep.subr.bf16.mxu0 0
        %3060 = vmatpush2.bf16.msra.mxu0 %v2734
        %3061 = vmatprep.subr.bf16.mxu0 0
        %3062 = vmatpush2.bf16.msra.mxu0 %v2733
        %3063 = vmatprep.mubr.bf16.mxu0 %v2086
        %3064 = vmatmul.mubr.bf16.gmra.mxu0 %v2074
        %v3065 = vpop.f32.mrf.mxu0
        %v3066 = vadd.f32 %v2969, %v3065
        %v3067 = vpop.f32.mrf.mxu0
        %v3068 = vpop.f32.mrf.mxu0
        %v3069 = vadd.f32 %v2972, %v3068
        %v3070 = vpop.f32.mrf.mxu0
        %3071 = vmatprep.mubr.bf16.mxu0 %v2142
        %3072 = vmatmul.mubr.bf16.gmra.mxu0 %v2134
        %v3073 = vpop.f32.mrf.mxu0
        %v3074 = vadd.f32 %v2977, %v3073
        %v3075 = vpop.f32.mrf.mxu0
        %v3076 = vpop.f32.mrf.mxu0
        %v3077 = vadd.f32 %v2980, %v3076
        %v3078 = vpop.f32.mrf.mxu0
        %3079 = vmatprep.mubr.bf16.mxu0 %v2168
        %3080 = vmatmul.mubr.bf16.gmra.mxu0 %v2158
        %v3081 = vpop.f32.mrf.mxu0
        %v3082 = vadd.f32 %v2985, %v3081
        %v3083 = vpop.f32.mrf.mxu0
        %v3084 = vpop.f32.mrf.mxu0
        %v3085 = vadd.f32 %v2988, %v3084
        %v3086 = vpop.f32.mrf.mxu0
        %3087 = vmatprep.mubr.bf16.mxu0 %v2192
        %3088 = vmatmul.mubr.bf16.gmra.mxu0 %v2184
        %v3089 = vpop.f32.mrf.mxu0
        %v3090 = vadd.f32 %v2993, %v3089
        %v3091 = vpop.f32.mrf.mxu0
        %v3092 = vpop.f32.mrf.mxu0
        %v3093 = vadd.f32 %v2996, %v3092
        %v3094 = vpop.f32.mrf.mxu0
        %3095 = vmatprep.mubr.bf16.mxu0 %v2216
        %3096 = vmatmul.mubr.bf16.gmra.mxu0 %v2208
        %v3097 = vpop.f32.mrf.mxu0
        %v3098 = vadd.f32 %v3001, %v3097
        %v3099 = vpop.f32.mrf.mxu0
        %v3100 = vpop.f32.mrf.mxu0
        %v3101 = vadd.f32 %v3004, %v3100
        %v3102 = vpop.f32.mrf.mxu0
        %3103 = vmatprep.mubr.bf16.mxu0 %v2240
        %3104 = vmatmul.mubr.bf16.gmra.mxu0 %v2232
        %v3105 = vpop.f32.mrf.mxu0
        %v3106 = vadd.f32 %v3009, %v3105
        %v3107 = vpop.f32.mrf.mxu0
        %v3108 = vpop.f32.mrf.mxu0
        %v3109 = vadd.f32 %v3012, %v3108
        %v3110 = vpop.f32.mrf.mxu0
        %3111 = vmatprep.mubr.bf16.mxu0 %v2264
        %3112 = vmatmul.mubr.bf16.gmra.mxu0 %v2256
        %v3113 = vpop.f32.mrf.mxu0
        %v3114 = vadd.f32 %v3017, %v3113
        %v3115 = vpop.f32.mrf.mxu0
        %v3116 = vpop.f32.mrf.mxu0
        %v3117 = vadd.f32 %v3020, %v3116
        %v3118 = vpop.f32.mrf.mxu0
        %3119 = vmatprep.mubr.bf16.mxu0 %v2336
        %3120 = vmatmul.mubr.bf16.gmra.mxu0 %v2328
        %v3121 = vpop.f32.mrf.mxu0
        %v3122 = vadd.f32 %v3025, %v3121
        %v3123 = vpop.f32.mrf.mxu0
        %v3124 = vpop.f32.mrf.mxu0
        %v3125 = vadd.f32 %v3028, %v3124
        %v3126 = vpop.f32.mrf.mxu0
        %3127 = vdwg.mxu0
        %3128 = vmatprep.subr.bf16.mxu0 0
        %3129 = vmatpush1.bf16.msra.mxu0 %v2748
        %3130 = vmatprep.subr.bf16.mxu0 0
        %3131 = vmatpush1.bf16.msra.mxu0 %v2747
        %3132 = vmatprep.subr.bf16.mxu0 0
        %3133 = vmatpush1.bf16.msra.mxu0 %v2746
        %3134 = vmatprep.subr.bf16.mxu0 0
        %3135 = vmatpush1.bf16.msra.mxu0 %v2745
        %3136 = vmatprep.subr.bf16.mxu0 0
        %3137 = vmatpush1.bf16.msra.mxu0 %v2744
        %3138 = vmatprep.subr.bf16.mxu0 0
        %3139 = vmatpush1.bf16.msra.mxu0 %v2743
        %3140 = vmatprep.subr.bf16.mxu0 0
        %3141 = vmatpush1.bf16.msra.mxu0 %v2742
        %3142 = vmatprep.subr.bf16.mxu0 0
        %3143 = vmatpush1.bf16.msra.mxu0 %v2741
        %3144 = vmatprep.subr.bf16.mxu0 0
        %3145 = vmatpush2.bf16.msra.mxu0 %v2756
        %3146 = vmatprep.subr.bf16.mxu0 0
        %3147 = vmatpush2.bf16.msra.mxu0 %v2755
        %3148 = vmatprep.subr.bf16.mxu0 0
        %3149 = vmatpush2.bf16.msra.mxu0 %v2754
        %3150 = vmatprep.subr.bf16.mxu0 0
        %3151 = vmatpush2.bf16.msra.mxu0 %v2753
        %3152 = vmatprep.subr.bf16.mxu0 0
        %3153 = vmatpush2.bf16.msra.mxu0 %v2752
        %3154 = vmatprep.subr.bf16.mxu0 0
        %3155 = vmatpush2.bf16.msra.mxu0 %v2751
        %3156 = vmatprep.subr.bf16.mxu0 0
        %3157 = vmatpush2.bf16.msra.mxu0 %v2750
        %3158 = vmatprep.subr.bf16.mxu0 0
        %3159 = vmatpush2.bf16.msra.mxu0 %v2749
        %3160 = vmatprep.mubr.bf16.mxu0 %v2110
        %3161 = vmatmul.mubr.bf16.gmra.mxu0 %v2098
        %v3162 = vpop.f32.mrf.mxu0
        %v3163 = vadd.f32 %v3066, %v3162
        %v3164 = vpop.f32.mrf.mxu0
        %v3165 = vpop.f32.mrf.mxu0
        %v3166 = vadd.f32 %v3069, %v3165
        %v3167 = vpop.f32.mrf.mxu0
        %3168 = vmatprep.mubr.bf16.mxu0 %v2158
        %3169 = vmatmul.mubr.bf16.gmra.mxu0 %v2150
        %v3170 = vpop.f32.mrf.mxu0
        %v3171 = vadd.f32 %v3074, %v3170
        %v3172 = vpop.f32.mrf.mxu0
        %v3173 = vpop.f32.mrf.mxu0
        %v3174 = vadd.f32 %v3077, %v3173
        %v3175 = vpop.f32.mrf.mxu0
        %3176 = vmatprep.mubr.bf16.mxu0 %v2184
        %3177 = vmatmul.mubr.bf16.gmra.mxu0 %v2176
        %v3178 = vpop.f32.mrf.mxu0
        %v3179 = vadd.f32 %v3082, %v3178
        %v3180 = vpop.f32.mrf.mxu0
        %v3181 = vpop.f32.mrf.mxu0
        %v3182 = vadd.f32 %v3085, %v3181
        %v3183 = vpop.f32.mrf.mxu0
        %3184 = vmatprep.mubr.bf16.mxu0 %v2208
        %3185 = vmatmul.mubr.bf16.gmra.mxu0 %v2200
        %v3186 = vpop.f32.mrf.mxu0
        %v3187 = vadd.f32 %v3090, %v3186
        %v3188 = vpop.f32.mrf.mxu0
        %v3189 = vpop.f32.mrf.mxu0
        %v3190 = vadd.f32 %v3093, %v3189
        %v3191 = vpop.f32.mrf.mxu0
        %3192 = vmatprep.mubr.bf16.mxu0 %v2232
        %3193 = vmatmul.mubr.bf16.gmra.mxu0 %v2224
        %v3194 = vpop.f32.mrf.mxu0
        %v3195 = vadd.f32 %v3098, %v3194
        %v3196 = vpop.f32.mrf.mxu0
        %v3197 = vpop.f32.mrf.mxu0
        %v3198 = vadd.f32 %v3101, %v3197
        %v3199 = vpop.f32.mrf.mxu0
        %3200 = vmatprep.mubr.bf16.mxu0 %v2256
        %3201 = vmatmul.mubr.bf16.gmra.mxu0 %v2248
        %v3202 = vpop.f32.mrf.mxu0
        %v3203 = vadd.f32 %v3106, %v3202
        %v3204 = vpop.f32.mrf.mxu0
        %v3205 = vpop.f32.mrf.mxu0
        %v3206 = vadd.f32 %v3109, %v3205
        %v3207 = vpop.f32.mrf.mxu0
        %3208 = vmatprep.mubr.bf16.mxu0 %v2280
        %3209 = vmatmul.mubr.bf16.gmra.mxu0 %v2272
        %v3210 = vpop.f32.mrf.mxu0
        %v3211 = vadd.f32 %v3114, %v3210
        %v3212 = vpop.f32.mrf.mxu0
        %v3213 = vpop.f32.mrf.mxu0
        %v3214 = vadd.f32 %v3117, %v3213
        %v3215 = vpop.f32.mrf.mxu0
        %3216 = vmatprep.mubr.bf16.mxu0 %v2352
        %3217 = vmatmul.mubr.bf16.gmra.mxu0 %v2344
        %v3218 = vpop.f32.mrf.mxu0
        %v3219 = vadd.f32 %v3122, %v3218
        %v3220 = vpop.f32.mrf.mxu0
        %v3221 = vpop.f32.mrf.mxu0
        %v3222 = vadd.f32 %v3125, %v3221
        %v3223 = vpop.f32.mrf.mxu0
        %3224 = vdwg.mxu0
        %3225 = vmatprep.subr.bf16.mxu0 0
        %3226 = vmatpush1.bf16.msra.mxu0 %v2764
        %3227 = vmatprep.subr.bf16.mxu0 0
        %3228 = vmatpush1.bf16.msra.mxu0 %v2763
        %3229 = vmatprep.subr.bf16.mxu0 0
        %3230 = vmatpush1.bf16.msra.mxu0 %v2762
        %3231 = vmatprep.subr.bf16.mxu0 0
        %3232 = vmatpush1.bf16.msra.mxu0 %v2761
        %3233 = vmatprep.subr.bf16.mxu0 0
        %3234 = vmatpush1.bf16.msra.mxu0 %v2760
        %3235 = vmatprep.subr.bf16.mxu0 0
        %3236 = vmatpush1.bf16.msra.mxu0 %v2759
        %3237 = vmatprep.subr.bf16.mxu0 0
        %3238 = vmatpush1.bf16.msra.mxu0 %v2758
        %3239 = vmatprep.subr.bf16.mxu0 0
        %3240 = vmatpush1.bf16.msra.mxu0 %v2757
        %3241 = vmatprep.subr.bf16.mxu0 0
        %3242 = vmatpush2.bf16.msra.mxu0 0
        %3243 = vmatprep.subr.bf16.mxu0 0
        %3244 = vmatpush2.bf16.msra.mxu0 0
        %3245 = vmatprep.subr.bf16.mxu0 0
        %3246 = vmatpush2.bf16.msra.mxu0 0
        %3247 = vmatprep.subr.bf16.mxu0 0
        %3248 = vmatpush2.bf16.msra.mxu0 0
        %3249 = vmatprep.subr.bf16.mxu0 0
        %3250 = vmatpush2.bf16.msra.mxu0 0
        %3251 = vmatprep.subr.bf16.mxu0 0
        %3252 = vmatpush2.bf16.msra.mxu0 0
        %3253 = vmatprep.subr.bf16.mxu0 0
        %3254 = vmatpush2.bf16.msra.mxu0 0
        %3255 = vmatprep.subr.bf16.mxu0 0
        %3256 = vmatpush2.bf16.msra.mxu0 0
        %3257 = vmatprep.mubr.bf16.mxu0 0
        %3258 = vmatmul.mubr.bf16.gmra.mxu0 %v2122
        %v3259 = vpop.f32.mrf.mxu0
        %v3260 = vadd.f32 %v3163, %v3259
        %v3261 = vpop.f32.mrf.mxu0
        %v3262 = vpop.f32.mrf.mxu0
        %v3263 = vadd.f32 %v3166, %v3262
        %v3264 = vpop.f32.mrf.mxu0
        %3265 = vmatprep.mubr.bf16.mxu0 0
        %3266 = vmatmul.mubr.bf16.gmra.mxu0 %v2166
        %v3267 = vpop.f32.mrf.mxu0
        %v3268 = vadd.f32 %v3171, %v3267
        %v3269 = vpop.f32.mrf.mxu0
        %v3270 = vpop.f32.mrf.mxu0
        %v3271 = vadd.f32 %v3174, %v3270
        %v3272 = vpop.f32.mrf.mxu0
        %3273 = vmatprep.mubr.bf16.mxu0 0
        %3274 = vmatmul.mubr.bf16.gmra.mxu0 %v2192
        %v3275 = vpop.f32.mrf.mxu0
        %v3276 = vadd.f32 %v3179, %v3275
        %v3277 = vpop.f32.mrf.mxu0
        %v3278 = vpop.f32.mrf.mxu0
        %v3279 = vadd.f32 %v3182, %v3278
        %v3280 = vpop.f32.mrf.mxu0
        %3281 = vmatprep.mubr.bf16.mxu0 0
        %3282 = vmatmul.mubr.bf16.gmra.mxu0 %v2216
        %v3283 = vpop.f32.mrf.mxu0
        %v3284 = vadd.f32 %v3187, %v3283
        %v3285 = vpop.f32.mrf.mxu0
        %v3286 = vpop.f32.mrf.mxu0
        %v3287 = vadd.f32 %v3190, %v3286
        %v3288 = vpop.f32.mrf.mxu0
        %3289 = vmatprep.mubr.bf16.mxu0 0
        %3290 = vmatmul.mubr.bf16.gmra.mxu0 %v2240
        %v3291 = vpop.f32.mrf.mxu0
        %v3292 = vadd.f32 %v3195, %v3291
        %v3293 = vpop.f32.mrf.mxu0
        %v3294 = vpop.f32.mrf.mxu0
        %v3295 = vadd.f32 %v3198, %v3294
        %v3296 = vpop.f32.mrf.mxu0
        %3297 = vmatprep.mubr.bf16.mxu0 0
        %3298 = vmatmul.mubr.bf16.gmra.mxu0 %v2264
        %v3299 = vpop.f32.mrf.mxu0
        %v3300 = vadd.f32 %v3203, %v3299
        %v3301 = vpop.f32.mrf.mxu0
        %v3302 = vpop.f32.mrf.mxu0
        %v3303 = vadd.f32 %v3206, %v3302
        %v3304 = vpop.f32.mrf.mxu0
        %3305 = vmatprep.mubr.bf16.mxu0 0
        %3306 = vmatmul.mubr.bf16.gmra.mxu0 %v2288
        %v3307 = vpop.f32.mrf.mxu0
        %v3308 = vadd.f32 %v3211, %v3307
        %v3309 = vpop.f32.mrf.mxu0
        %v3310 = vpop.f32.mrf.mxu0
        %v3311 = vadd.f32 %v3214, %v3310
        %v3312 = vpop.f32.mrf.mxu0
        %3313 = vmatprep.mubr.bf16.mxu0 0
        %3314 = vmatmul.mubr.bf16.gmra.mxu0 %v2360
        %v3315 = vpop.f32.mrf.mxu0
        %v3316 = vadd.f32 %v3219, %v3315
        %v3317 = vpop.f32.mrf.mxu0
        %v3318 = vpop.f32.mrf.mxu0
        %v3319 = vadd.f32 %v3222, %v3318
        %v3320 = vpop.f32.mrf.mxu0
        %3321 = vdwg.mxu0
        %v3322 = vld [vmem:[%s9] sm:$0x1]
        %v3324 = vlaneseq
        %v3325 = vshrl.u32 %v3324, 7
        %v3326 = vsub.s32 0, %v3325
        %v3327 = vrot.slane %v3322, %v3326
        %v3329 = vmul.f32 %v3260, %v3327
        %v3330 = vmul.f32 %v3263, %v3327
        %v3331 = vmul.f32 %v3268, %v3327
        %v3332 = vmul.f32 %v3271, %v3327
        %v3333 = vmul.f32 %v3276, %v3327
        %v3334 = vmul.f32 %v3279, %v3327
        %v3335 = vmul.f32 %v3284, %v3327
        %v3336 = vmul.f32 %v3287, %v3327
        %v3337 = vmul.f32 %v3292, %v3327
        %v3338 = vmul.f32 %v3295, %v3327
        %v3339 = vmul.f32 %v3300, %v3327
        %v3340 = vmul.f32 %v3303, %v3327
        %v3341 = vmul.f32 %v3308, %v3327
        %v3342 = vmul.f32 %v3311, %v3327
        %v3343 = vmul.f32 %v3316, %v3327
        %v3344 = vmul.f32 %v3319, %v3327
        %v3345 = vld [vmem:[%s10] sm:$0x1]
        %v3347 = vlaneseq
        %v3348 = vshrl.u32 %v3347, 7
        %v3349 = vsub.s32 0, %v3348
        %v3350 = vrot.slane %v3345, %v3349
        %v3352 = vadd.f32 %v3329, %v3350
        %v3353 = vadd.f32 %v3330, %v3350
        %v3354 = vadd.f32 %v3331, %v3350
        %v3355 = vadd.f32 %v3332, %v3350
        %v3356 = vadd.f32 %v3333, %v3350
        %v3357 = vadd.f32 %v3334, %v3350
        %v3358 = vadd.f32 %v3335, %v3350
        %v3359 = vadd.f32 %v3336, %v3350
        %v3360 = vadd.f32 %v3337, %v3350
        %v3361 = vadd.f32 %v3338, %v3350
        %v3362 = vadd.f32 %v3339, %v3350
        %v3363 = vadd.f32 %v3340, %v3350
        %v3364 = vadd.f32 %v3341, %v3350
        %v3365 = vadd.f32 %v3342, %v3350
        %v3366 = vadd.f32 %v3343, %v3350
        %v3367 = vadd.f32 %v3344, %v3350
        %v3368 = vmax.f32 %v3352, 0.0
        %v3369 = vmax.f32 %v3353, 0.0
        %v3370 = vmax.f32 %v3354, 0.0
        %v3371 = vmax.f32 %v3355, 0.0
        %v3372 = vmax.f32 %v3356, 0.0
        %v3373 = vmax.f32 %v3357, 0.0
        %v3374 = vmax.f32 %v3358, 0.0
        %v3375 = vmax.f32 %v3359, 0.0
        %v3376 = vmax.f32 %v3360, 0.0
        %v3377 = vmax.f32 %v3361, 0.0
        %v3378 = vmax.f32 %v3362, 0.0
        %v3379 = vmax.f32 %v3363, 0.0
        %v3380 = vmax.f32 %v3364, 0.0
        %v3381 = vmax.f32 %v3365, 0.0
        %v3382 = vmax.f32 %v3366, 0.0
        %v3383 = vmax.f32 %v3367, 0.0
        %v3384 = vpack.c.bf16 %v3369, %v3368
        %v3385 = vpack.c.bf16 %v3371, %v3370
        %v3386 = vpack.c.bf16 %v3373, %v3372
        %v3387 = vpack.c.bf16 %v3375, %v3374
        %v3388 = vpack.c.bf16 %v3377, %v3376
        %v3389 = vpack.c.bf16 %v3379, %v3378
        %v3390 = vpack.c.bf16 %v3381, %v3380
        %v3391 = vpack.c.bf16 %v3383, %v3382
        %v3392 = vld [vmem:[#allocation14] sm:$0xff]
        %v3393 = vld [vmem:[#allocation14 + $0x8] sm:$0xff]
        %v3394 = vld [vmem:[#allocation14 + $0x10] sm:$0xff]
        %v3395 = vld [vmem:[#allocation14 + $0x18] sm:$0xff]
        %v3396 = vld [vmem:[#allocation14 + $0x20] sm:$0xff]
        %v3397 = vld [vmem:[#allocation14 + $0x28] sm:$0xff]
        %v3398 = vld [vmem:[#allocation14 + $0x30] sm:$0xff]
        %v3399 = vld [vmem:[#allocation14 + $0x38] sm:$0xff]
        %v3400 = vld [vmem:[#allocation14 + $0x40] sm:$0xff]
        %v3401 = vld [vmem:[#allocation14 + $0x48] sm:$0xff]
        %v3402 = vld [vmem:[#allocation14 + $0x50] sm:$0xff]
        %v3403 = vld [vmem:[#allocation14 + $0x58] sm:$0xff]
        %v3404 = vld [vmem:[#allocation14 + $0x60] sm:$0xff]
        %v3405 = vld [vmem:[#allocation14 + $0x68] sm:$0xff]
        %v3406 = vld [vmem:[#allocation14 + $0x70] sm:$0xff]
        %v3407 = vld [vmem:[#allocation14 + $0x78] sm:$0xff]
        %v3408 = vld [vmem:[#allocation14 + $0x80] sm:$0xff]
        %v3409 = vld [vmem:[#allocation14 + $0x88] sm:$0xff]
        %v3410 = vld [vmem:[#allocation14 + $0x90] sm:$0xff]
        %v3411 = vld [vmem:[#allocation14 + $0x98] sm:$0xff]
        %v3412 = vld [vmem:[#allocation14 + $0xa0] sm:$0xff]
        %v3413 = vld [vmem:[#allocation14 + $0xa8] sm:$0xff]
        %v3414 = vld [vmem:[#allocation14 + $0xb0] sm:$0xff]
        %v3415 = vld [vmem:[#allocation14 + $0xb8] sm:$0xff]
        %v3416 = vld [vmem:[#allocation14 + $0xc0] sm:$0xff]
        %v3417 = vld [vmem:[#allocation14 + $0xc8] sm:$0xff]
        %v3418 = vld [vmem:[#allocation14 + $0xd0] sm:$0xff]
        %v3419 = vld [vmem:[#allocation14 + $0xd8] sm:$0xff]
        %v3420 = vld [vmem:[#allocation14 + $0xe0] sm:$0xff]
        %v3421 = vld [vmem:[#allocation14 + $0xe8] sm:$0xff]
        %v3422 = vld [vmem:[#allocation14 + $0xf0] sm:$0xff]
        %v3423 = vld [vmem:[#allocation14 + $0xf8] sm:$0xff]
        %v3456 = vunpack.c.l.b16 %v3392
        %v3457 = vunpack.c.h.b16 %v3392
        %v3458 = vunpack.c.l.b16 %v3393
        %v3459 = vunpack.c.h.b16 %v3393
        %v3460 = vunpack.c.l.b16 %v3394
        %v3461 = vunpack.c.h.b16 %v3394
        %v3462 = vunpack.c.l.b16 %v3395
        %v3463 = vunpack.c.h.b16 %v3395
        %v3464 = vunpack.c.l.b16 %v3396
        %v3465 = vunpack.c.h.b16 %v3396
        %v3466 = vunpack.c.l.b16 %v3397
        %v3467 = vunpack.c.h.b16 %v3397
        %v3468 = vunpack.c.l.b16 %v3398
        %v3469 = vunpack.c.h.b16 %v3398
        %v3470 = vunpack.c.l.b16 %v3399
        %v3471 = vunpack.c.h.b16 %v3399
        %v3472 = vunpack.c.l.b16 %v3400
        %v3473 = vunpack.c.h.b16 %v3400
        %v3474 = vunpack.c.l.b16 %v3401
        %v3475 = vunpack.c.h.b16 %v3401
        %v3476 = vunpack.c.l.b16 %v3402
        %v3477 = vunpack.c.h.b16 %v3402
        %v3478 = vunpack.c.l.b16 %v3403
        %v3479 = vunpack.c.h.b16 %v3403
        %v3480 = vunpack.c.l.b16 %v3404
        %v3481 = vunpack.c.h.b16 %v3404
        %v3482 = vunpack.c.l.b16 %v3405
        %v3483 = vunpack.c.h.b16 %v3405
        %v3484 = vunpack.c.l.b16 %v3406
        %v3485 = vunpack.c.h.b16 %v3406
        %v3486 = vunpack.c.l.b16 %v3407
        %v3487 = vunpack.c.h.b16 %v3407
        %v3488 = vunpack.c.l.b16 %v3408
        %v3489 = vunpack.c.h.b16 %v3408
        %v3490 = vunpack.c.l.b16 %v3409
        %v3491 = vunpack.c.h.b16 %v3409
        %v3492 = vunpack.c.l.b16 %v3410
        %v3493 = vunpack.c.h.b16 %v3410
        %v3494 = vunpack.c.l.b16 %v3411
        %v3495 = vunpack.c.h.b16 %v3411
        %v3496 = vunpack.c.l.b16 %v3412
        %v3497 = vunpack.c.h.b16 %v3412
        %v3498 = vunpack.c.l.b16 %v3413
        %v3499 = vunpack.c.h.b16 %v3413
        %v3500 = vunpack.c.l.b16 %v3414
        %v3501 = vunpack.c.h.b16 %v3414
        %v3502 = vunpack.c.l.b16 %v3415
        %v3503 = vunpack.c.h.b16 %v3415
        %v3504 = vunpack.c.l.b16 %v3416
        %v3505 = vunpack.c.h.b16 %v3416
        %v3506 = vunpack.c.l.b16 %v3417
        %v3507 = vunpack.c.h.b16 %v3417
        %v3508 = vunpack.c.l.b16 %v3418
        %v3509 = vunpack.c.h.b16 %v3418
        %v3510 = vunpack.c.l.b16 %v3419
        %v3511 = vunpack.c.h.b16 %v3419
        %v3512 = vunpack.c.l.b16 %v3420
        %v3513 = vunpack.c.h.b16 %v3420
        %v3514 = vunpack.c.l.b16 %v3421
        %v3515 = vunpack.c.h.b16 %v3421
        %v3516 = vunpack.c.l.b16 %v3422
        %v3517 = vunpack.c.h.b16 %v3422
        %v3518 = vunpack.c.l.b16 %v3423
        %v3519 = vunpack.c.h.b16 %v3423
        %v3520 = vpack.c.b16 %v3460, %v3456
        %v3521 = vpack.c.b16 %v3461, %v3457
        %v3522 = vpack.c.b16 %v3462, %v3458
        %v3523 = vpack.c.b16 %v3463, %v3459
        %v3524 = vpack.c.b16 %v3468, %v3464
        %v3525 = vpack.c.b16 %v3469, %v3465
        %v3526 = vpack.c.b16 %v3470, %v3466
        %v3527 = vpack.c.b16 %v3471, %v3467
        %v3528 = vpack.c.b16 %v3476, %v3472
        %v3529 = vpack.c.b16 %v3477, %v3473
        %v3530 = vpack.c.b16 %v3478, %v3474
        %v3531 = vpack.c.b16 %v3479, %v3475
        %v3532 = vpack.c.b16 %v3484, %v3480
        %v3533 = vpack.c.b16 %v3485, %v3481
        %v3534 = vpack.c.b16 %v3486, %v3482
        %v3535 = vpack.c.b16 %v3487, %v3483
        %v3536 = vpack.c.b16 %v3492, %v3488
        %v3537 = vpack.c.b16 %v3493, %v3489
        %v3538 = vpack.c.b16 %v3494, %v3490
        %v3539 = vpack.c.b16 %v3495, %v3491
        %v3540 = vpack.c.b16 %v3500, %v3496
        %v3541 = vpack.c.b16 %v3501, %v3497
        %v3542 = vpack.c.b16 %v3502, %v3498
        %v3543 = vpack.c.b16 %v3503, %v3499
        %v3544 = vpack.c.b16 %v3508, %v3504
        %v3545 = vpack.c.b16 %v3509, %v3505
        %v3546 = vpack.c.b16 %v3510, %v3506
        %v3547 = vpack.c.b16 %v3511, %v3507
        %v3548 = vpack.c.b16 %v3516, %v3512
        %v3549 = vpack.c.b16 %v3517, %v3513
        %v3550 = vpack.c.b16 %v3518, %v3514
        %v3551 = vpack.c.b16 %v3519, %v3515
        %3584 = vmatprep.subr.bf16.mxu0 %v3549
        %3585 = vmatpush1.bf16.msra.mxu0 %v3548
        %3586 = vmatprep.subr.bf16.mxu0 %v3545
        %3587 = vmatpush1.bf16.msra.mxu0 %v3544
        %3588 = vmatprep.subr.bf16.mxu0 %v3541
        %3589 = vmatpush1.bf16.msra.mxu0 %v3540
        %3590 = vmatprep.subr.bf16.mxu0 %v3537
        %3591 = vmatpush1.bf16.msra.mxu0 %v3536
        %3592 = vmatprep.subr.bf16.mxu0 %v3533
        %3593 = vmatpush1.bf16.msra.mxu0 %v3532
        %3594 = vmatprep.subr.bf16.mxu0 %v3529
        %3595 = vmatpush1.bf16.msra.mxu0 %v3528
        %3596 = vmatprep.subr.bf16.mxu0 %v3525
        %3597 = vmatpush1.bf16.msra.mxu0 %v3524
        %3598 = vmatprep.subr.bf16.mxu0 %v3521
        %3599 = vmatpush1.bf16.msra.mxu0 %v3520
        %3600 = vmatprep.subr.bf16.mxu0 0
        %3601 = vmatpush2.bf16.msra.mxu0 0
        %3602 = vmatprep.subr.bf16.mxu0 0
        %3603 = vmatpush2.bf16.msra.mxu0 0
        %3604 = vmatprep.subr.bf16.mxu0 0
        %3605 = vmatpush2.bf16.msra.mxu0 0
        %3606 = vmatprep.subr.bf16.mxu0 0
        %3607 = vmatpush2.bf16.msra.mxu0 0
        %3608 = vmatprep.subr.bf16.mxu0 0
        %3609 = vmatpush2.bf16.msra.mxu0 0
        %3610 = vmatprep.subr.bf16.mxu0 0
        %3611 = vmatpush2.bf16.msra.mxu0 0
        %3612 = vmatprep.subr.bf16.mxu0 0
        %3613 = vmatpush2.bf16.msra.mxu0 0
        %3614 = vmatprep.subr.bf16.mxu0 0
        %3615 = vmatpush2.bf16.msra.mxu0 0
        %3616 = vmatprep.mubr.bf16.mxu0 0
        %3617 = vmatmul.mubr.bf16.gmra.mxu0 %v3384
        %v3618 = vpop.f32.mrf.mxu0
        %v3619 = vadd.f32 %v650, %v3618
        %v3620 = vpop.f32.mrf.mxu0
        %v3621 = vadd.f32 %v651, %v3620
        %v3622 = vpop.f32.mrf.mxu0
        %v3623 = vadd.f32 %v654, %v3622
        %v3624 = vpop.f32.mrf.mxu0
        %v3625 = vadd.f32 %v655, %v3624
        %3626 = vmatprep.mubr.bf16.mxu0 0
        %3627 = vmatmul.mubr.bf16.gmra.mxu0 %v3385
        %v3628 = vpop.f32.mrf.mxu0
        %v3629 = vadd.f32 %v658, %v3628
        %v3630 = vpop.f32.mrf.mxu0
        %v3631 = vadd.f32 %v659, %v3630
        %v3632 = vpop.f32.mrf.mxu0
        %v3633 = vadd.f32 %v662, %v3632
        %v3634 = vpop.f32.mrf.mxu0
        %v3635 = vadd.f32 %v663, %v3634
        %3636 = vmatprep.mubr.bf16.mxu0 0
        %3637 = vmatmul.mubr.bf16.gmra.mxu0 %v3386
        %v3638 = vpop.f32.mrf.mxu0
        %v3639 = vadd.f32 %v666, %v3638
        %v3640 = vpop.f32.mrf.mxu0
        %v3641 = vadd.f32 %v667, %v3640
        %v3642 = vpop.f32.mrf.mxu0
        %v3643 = vadd.f32 %v670, %v3642
        %v3644 = vpop.f32.mrf.mxu0
        %v3645 = vadd.f32 %v671, %v3644
        %3646 = vmatprep.mubr.bf16.mxu0 0
        %3647 = vmatmul.mubr.bf16.gmra.mxu0 %v3387
        %v3648 = vpop.f32.mrf.mxu0
        %v3649 = vadd.f32 %v674, %v3648
        %v3650 = vpop.f32.mrf.mxu0
        %v3651 = vadd.f32 %v675, %v3650
        %v3652 = vpop.f32.mrf.mxu0
        %v3653 = vadd.f32 %v678, %v3652
        %v3654 = vpop.f32.mrf.mxu0
        %v3655 = vadd.f32 %v679, %v3654
        %3656 = vmatprep.mubr.bf16.mxu0 0
        %3657 = vmatmul.mubr.bf16.gmra.mxu0 %v3388
        %v3658 = vpop.f32.mrf.mxu0
        %v3659 = vadd.f32 %v682, %v3658
        %v3660 = vpop.f32.mrf.mxu0
        %v3661 = vadd.f32 %v683, %v3660
        %v3662 = vpop.f32.mrf.mxu0
        %v3663 = vadd.f32 %v686, %v3662
        %v3664 = vpop.f32.mrf.mxu0
        %v3665 = vadd.f32 %v687, %v3664
        %3666 = vmatprep.mubr.bf16.mxu0 0
        %3667 = vmatmul.mubr.bf16.gmra.mxu0 %v3389
        %v3668 = vpop.f32.mrf.mxu0
        %v3669 = vadd.f32 %v690, %v3668
        %v3670 = vpop.f32.mrf.mxu0
        %v3671 = vadd.f32 %v691, %v3670
        %v3672 = vpop.f32.mrf.mxu0
        %v3673 = vadd.f32 %v694, %v3672
        %v3674 = vpop.f32.mrf.mxu0
        %v3675 = vadd.f32 %v695, %v3674
        %3676 = vmatprep.mubr.bf16.mxu0 0
        %3677 = vmatmul.mubr.bf16.gmra.mxu0 %v3390
        %v3678 = vpop.f32.mrf.mxu0
        %v3679 = vadd.f32 %v698, %v3678
        %v3680 = vpop.f32.mrf.mxu0
        %v3681 = vadd.f32 %v699, %v3680
        %v3682 = vpop.f32.mrf.mxu0
        %v3683 = vadd.f32 %v702, %v3682
        %v3684 = vpop.f32.mrf.mxu0
        %v3685 = vadd.f32 %v703, %v3684
        %3686 = vmatprep.mubr.bf16.mxu0 0
        %3687 = vmatmul.mubr.bf16.gmra.mxu0 %v3391
        %v3688 = vpop.f32.mrf.mxu0
        %v3689 = vadd.f32 %v706, %v3688
        %v3690 = vpop.f32.mrf.mxu0
        %v3691 = vadd.f32 %v707, %v3690
        %v3692 = vpop.f32.mrf.mxu0
        %v3693 = vadd.f32 %v710, %v3692
        %v3694 = vpop.f32.mrf.mxu0
        %v3695 = vadd.f32 %v711, %v3694
        %3696 = vdwg.mxu0
        %3697 = vmatprep.subr.bf16.mxu0 %v3551
        %3698 = vmatpush1.bf16.msra.mxu0 %v3550
        %3699 = vmatprep.subr.bf16.mxu0 %v3547
        %3700 = vmatpush1.bf16.msra.mxu0 %v3546
        %3701 = vmatprep.subr.bf16.mxu0 %v3543
        %3702 = vmatpush1.bf16.msra.mxu0 %v3542
        %3703 = vmatprep.subr.bf16.mxu0 %v3539
        %3704 = vmatpush1.bf16.msra.mxu0 %v3538
        %3705 = vmatprep.subr.bf16.mxu0 %v3535
        %3706 = vmatpush1.bf16.msra.mxu0 %v3534
        %3707 = vmatprep.subr.bf16.mxu0 %v3531
        %3708 = vmatpush1.bf16.msra.mxu0 %v3530
        %3709 = vmatprep.subr.bf16.mxu0 %v3527
        %3710 = vmatpush1.bf16.msra.mxu0 %v3526
        %3711 = vmatprep.subr.bf16.mxu0 %v3523
        %3712 = vmatpush1.bf16.msra.mxu0 %v3522
        %3713 = vmatprep.subr.bf16.mxu0 0
        %3714 = vmatpush2.bf16.msra.mxu0 0
        %3715 = vmatprep.subr.bf16.mxu0 0
        %3716 = vmatpush2.bf16.msra.mxu0 0
        %3717 = vmatprep.subr.bf16.mxu0 0
        %3718 = vmatpush2.bf16.msra.mxu0 0
        %3719 = vmatprep.subr.bf16.mxu0 0
        %3720 = vmatpush2.bf16.msra.mxu0 0
        %3721 = vmatprep.subr.bf16.mxu0 0
        %3722 = vmatpush2.bf16.msra.mxu0 0
        %3723 = vmatprep.subr.bf16.mxu0 0
        %3724 = vmatpush2.bf16.msra.mxu0 0
        %3725 = vmatprep.subr.bf16.mxu0 0
        %3726 = vmatpush2.bf16.msra.mxu0 0
        %3727 = vmatprep.subr.bf16.mxu0 0
        %3728 = vmatpush2.bf16.msra.mxu0 0
        %3729 = vmatprep.mubr.bf16.mxu0 0
        %3730 = vmatmul.mubr.bf16.gmra.mxu0 %v3384
        %v3731 = vpop.f32.mrf.mxu0
        %v3732 = vadd.f32 %v652, %v3731
        %v3733 = vpop.f32.mrf.mxu0
        %v3734 = vadd.f32 %v653, %v3733
        %v3735 = vpop.f32.mrf.mxu0
        %v3736 = vadd.f32 %v656, %v3735
        %v3737 = vpop.f32.mrf.mxu0
        %v3738 = vadd.f32 %v657, %v3737
        %3739 = vmatprep.mubr.bf16.mxu0 0
        %3740 = vmatmul.mubr.bf16.gmra.mxu0 %v3385
        %v3741 = vpop.f32.mrf.mxu0
        %v3742 = vadd.f32 %v660, %v3741
        %v3743 = vpop.f32.mrf.mxu0
        %v3744 = vadd.f32 %v661, %v3743
        %v3745 = vpop.f32.mrf.mxu0
        %v3746 = vadd.f32 %v664, %v3745
        %v3747 = vpop.f32.mrf.mxu0
        %v3748 = vadd.f32 %v665, %v3747
        %3749 = vmatprep.mubr.bf16.mxu0 0
        %3750 = vmatmul.mubr.bf16.gmra.mxu0 %v3386
        %v3751 = vpop.f32.mrf.mxu0
        %v3752 = vadd.f32 %v668, %v3751
        %v3753 = vpop.f32.mrf.mxu0
        %v3754 = vadd.f32 %v669, %v3753
        %v3755 = vpop.f32.mrf.mxu0
        %v3756 = vadd.f32 %v672, %v3755
        %v3757 = vpop.f32.mrf.mxu0
        %v3758 = vadd.f32 %v673, %v3757
        %3759 = vmatprep.mubr.bf16.mxu0 0
        %3760 = vmatmul.mubr.bf16.gmra.mxu0 %v3387
        %v3761 = vpop.f32.mrf.mxu0
        %v3762 = vadd.f32 %v676, %v3761
        %v3763 = vpop.f32.mrf.mxu0
        %v3764 = vadd.f32 %v677, %v3763
        %v3765 = vpop.f32.mrf.mxu0
        %v3766 = vadd.f32 %v680, %v3765
        %v3767 = vpop.f32.mrf.mxu0
        %v3768 = vadd.f32 %v681, %v3767
        %3769 = vmatprep.mubr.bf16.mxu0 0
        %3770 = vmatmul.mubr.bf16.gmra.mxu0 %v3388
        %v3771 = vpop.f32.mrf.mxu0
        %v3772 = vadd.f32 %v684, %v3771
        %v3773 = vpop.f32.mrf.mxu0
        %v3774 = vadd.f32 %v685, %v3773
        %v3775 = vpop.f32.mrf.mxu0
        %v3776 = vadd.f32 %v688, %v3775
        %v3777 = vpop.f32.mrf.mxu0
        %v3778 = vadd.f32 %v689, %v3777
        %3779 = vmatprep.mubr.bf16.mxu0 0
        %3780 = vmatmul.mubr.bf16.gmra.mxu0 %v3389
        %v3781 = vpop.f32.mrf.mxu0
        %v3782 = vadd.f32 %v692, %v3781
        %v3783 = vpop.f32.mrf.mxu0
        %v3784 = vadd.f32 %v693, %v3783
        %v3785 = vpop.f32.mrf.mxu0
        %v3786 = vadd.f32 %v696, %v3785
        %v3787 = vpop.f32.mrf.mxu0
        %v3788 = vadd.f32 %v697, %v3787
        %3789 = vmatprep.mubr.bf16.mxu0 0
        %3790 = vmatmul.mubr.bf16.gmra.mxu0 %v3390
        %v3791 = vpop.f32.mrf.mxu0
        %v3792 = vadd.f32 %v700, %v3791
        %v3793 = vpop.f32.mrf.mxu0
        %v3794 = vadd.f32 %v701, %v3793
        %v3795 = vpop.f32.mrf.mxu0
        %v3796 = vadd.f32 %v704, %v3795
        %v3797 = vpop.f32.mrf.mxu0
        %v3798 = vadd.f32 %v705, %v3797
        %3799 = vmatprep.mubr.bf16.mxu0 0
        %3800 = vmatmul.mubr.bf16.gmra.mxu0 %v3391
        %v3801 = vpop.f32.mrf.mxu0
        %v3802 = vadd.f32 %v708, %v3801
        %v3803 = vpop.f32.mrf.mxu0
        %v3804 = vadd.f32 %v709, %v3803
        %v3805 = vpop.f32.mrf.mxu0
        %v3806 = vadd.f32 %v712, %v3805
        %v3807 = vpop.f32.mrf.mxu0
        %v3808 = vadd.f32 %v713, %v3807
        %3809 = vdwg.mxu0
        %3810 = vst [vmem:[%s628] sm:$0xff] %v3619
        %3811 = vst [vmem:[%s628 + $0x8] sm:$0xff] %v3621
        %3812 = vst [vmem:[%s628 + $0x10] sm:$0xff] %v3732
        %3813 = vst [vmem:[%s628 + $0x18] sm:$0xff] %v3734
        %3814 = vst [vmem:[%s628 + $0x20] sm:$0xff] %v3623
        %3815 = vst [vmem:[%s628 + $0x28] sm:$0xff] %v3625
        %3816 = vst [vmem:[%s628 + $0x30] sm:$0xff] %v3736
        %3817 = vst [vmem:[%s628 + $0x38] sm:$0xff] %v3738
        %3818 = vst [vmem:[%s628 + $0x40] sm:$0xff] %v3629
        %3819 = vst [vmem:[%s628 + $0x48] sm:$0xff] %v3631
        %3820 = vst [vmem:[%s628 + $0x50] sm:$0xff] %v3742
        %3821 = vst [vmem:[%s628 + $0x58] sm:$0xff] %v3744
        %3822 = vst [vmem:[%s628 + $0x60] sm:$0xff] %v3633
        %3823 = vst [vmem:[%s628 + $0x68] sm:$0xff] %v3635
        %3824 = vst [vmem:[%s628 + $0x70] sm:$0xff] %v3746
        %3825 = vst [vmem:[%s628 + $0x78] sm:$0xff] %v3748
        %3826 = vst [vmem:[%s628 + $0x80] sm:$0xff] %v3639
        %3827 = vst [vmem:[%s628 + $0x88] sm:$0xff] %v3641
        %3828 = vst [vmem:[%s628 + $0x90] sm:$0xff] %v3752
        %3829 = vst [vmem:[%s628 + $0x98] sm:$0xff] %v3754
        %3830 = vst [vmem:[%s628 + $0xa0] sm:$0xff] %v3643
        %3831 = vst [vmem:[%s628 + $0xa8] sm:$0xff] %v3645
        %3832 = vst [vmem:[%s628 + $0xb0] sm:$0xff] %v3756
        %3833 = vst [vmem:[%s628 + $0xb8] sm:$0xff] %v3758
        %3834 = vst [vmem:[%s628 + $0xc0] sm:$0xff] %v3649
        %3835 = vst [vmem:[%s628 + $0xc8] sm:$0xff] %v3651
        %3836 = vst [vmem:[%s628 + $0xd0] sm:$0xff] %v3762
        %3837 = vst [vmem:[%s628 + $0xd8] sm:$0xff] %v3764
        %3838 = vst [vmem:[%s628 + $0xe0] sm:$0xff] %v3653
        %3839 = vst [vmem:[%s628 + $0xe8] sm:$0xff] %v3655
        %3840 = vst [vmem:[%s628 + $0xf0] sm:$0xff] %v3766
        %3841 = vst [vmem:[%s628 + $0xf8] sm:$0xff] %v3768
        %3842 = vst [vmem:[%s628 + $0x100] sm:$0xff] %v3659
        %3843 = vst [vmem:[%s628 + $0x108] sm:$0xff] %v3661
        %3844 = vst [vmem:[%s628 + $0x110] sm:$0xff] %v3772
        %3845 = vst [vmem:[%s628 + $0x118] sm:$0xff] %v3774
        %3846 = vst [vmem:[%s628 + $0x120] sm:$0xff] %v3663
        %3847 = vst [vmem:[%s628 + $0x128] sm:$0xff] %v3665
        %3848 = vst [vmem:[%s628 + $0x130] sm:$0xff] %v3776
        %3849 = vst [vmem:[%s628 + $0x138] sm:$0xff] %v3778
        %3850 = vst [vmem:[%s628 + $0x140] sm:$0xff] %v3669
        %3851 = vst [vmem:[%s628 + $0x148] sm:$0xff] %v3671
        %3852 = vst [vmem:[%s628 + $0x150] sm:$0xff] %v3782
        %3853 = vst [vmem:[%s628 + $0x158] sm:$0xff] %v3784
        %3854 = vst [vmem:[%s628 + $0x160] sm:$0xff] %v3673
        %3855 = vst [vmem:[%s628 + $0x168] sm:$0xff] %v3675
        %3856 = vst [vmem:[%s628 + $0x170] sm:$0xff] %v3786
        %3857 = vst [vmem:[%s628 + $0x178] sm:$0xff] %v3788
        %3858 = vst [vmem:[%s628 + $0x180] sm:$0xff] %v3679
        %3859 = vst [vmem:[%s628 + $0x188] sm:$0xff] %v3681
        %3860 = vst [vmem:[%s628 + $0x190] sm:$0xff] %v3792
        %3861 = vst [vmem:[%s628 + $0x198] sm:$0xff] %v3794
        %3862 = vst [vmem:[%s628 + $0x1a0] sm:$0xff] %v3683
        %3863 = vst [vmem:[%s628 + $0x1a8] sm:$0xff] %v3685
        %3864 = vst [vmem:[%s628 + $0x1b0] sm:$0xff] %v3796
        %3865 = vst [vmem:[%s628 + $0x1b8] sm:$0xff] %v3798
        %3866 = vst [vmem:[%s628 + $0x1c0] sm:$0xff] %v3689
        %3867 = vst [vmem:[%s628 + $0x1c8] sm:$0xff] %v3691
        %3868 = vst [vmem:[%s628 + $0x1d0] sm:$0xff] %v3802
        %3869 = vst [vmem:[%s628 + $0x1d8] sm:$0xff] %v3804
        %3870 = vst [vmem:[%s628 + $0x1e0] sm:$0xff] %v3693
        %3871 = vst [vmem:[%s628 + $0x1e8] sm:$0xff] %v3695
        %3872 = vst [vmem:[%s628 + $0x1f0] sm:$0xff] %v3806
        %3873 = vst [vmem:[%s628 + $0x1f8] sm:$0xff] %v3808
        %s3874 = sand.u32 %s346, 1
        %s3875 = scalar_lea.sflag [#allocation4], %s3874
        %s3876 = sand.u32 %s346, 1
        %s3877 = smul.addr %s3876, 512
        %s3878 = scalar_lea.vmem [#allocation16], %s3877
        // Predicated region
        $region101: #{bottleneck_v2_forward.1} parent=67 // pred_check
          %p3879 = pneg %p356
        $region102: #{bottleneck_v2_forward.1} parent=67 // pred_check_branch
          %3881 = sbr.rel (%p3879) target = $region104
        $region103: #{bottleneck_v2_forward.1} parent=67 // pred_region
          %s3882 = smul.u32 8, %s40
          %s3884 = ssub.s32 8192, 8192
          %3885 = vsyncadd %s3875, %s3884
          %s3886 = smul.addr %s3882, 8
          %s3887 = smul.addr %s39, 128
          %s3888 = sadd.s32 %s3886, %s3887
          %s3889 = smul.addr %s3888, 128
          %s3890 = scalar_lea.hbm %s12, %s3889
          %s3891 = sshll.u32 %s3878, 4
          %s3892 = int_to_ptr.vmem [resolvable:$true] %s3891
          %3897 = dma.vmem_to_hbm [thread:$0]  %s3892, 8192, %s3890, %s3875, 512, 512, 32
        $region104: #{bottleneck_v2_forward.1} parent=67 // pred_fallthru
          _
      $region68: #{bottleneck_v2_forward.1} parent=5 // pred_fallthru
        _
      %p3898 = scmp.le.s32.totalorder 2, %s30
      // Predicated region
      $region105: #{bottleneck_v2_forward.1} parent=5 // pred_check
        %p3899 = pneg %p3898
      $region106: #{bottleneck_v2_forward.1} parent=5 // pred_check_branch
        %3901 = sbr.rel (%p3899) target = $region108
      $region107: #{bottleneck_v2_forward.1} parent=5 // pred_region
        %s3902 = ssub.s32 %s30, 2
        // Predicated region
        $region109: #{bottleneck_v2_forward.1} parent=107 // pred_check
          %p3903 = pneg %p362
        $region110: #{bottleneck_v2_forward.1} parent=107 // pred_check_branch
          %3905 = sbr.rel (%p3903) target = $region112
        $region111: #{bottleneck_v2_forward.1} parent=107 // pred_region
          %s3906 = sand.u32 %s347, 1
          %s3907 = scalar_lea.sflag [#allocation4], %s3906
          %s3908 = sand.u32 %s347, 1
          %s3909 = smul.addr %s3908, 512
          %s3910 = scalar_lea.vmem [#allocation16], %s3909
          %3911 = dma.done %s3907, 8192
        $region112: #{bottleneck_v2_forward.1} parent=107 // pred_fallthru
          _
      $region108: #{bottleneck_v2_forward.1} parent=5 // pred_fallthru
        _
    $region6: #{bottleneck_v2_forward.1} parent=1 // loop_footer
      %s34 = sadd.s32 1, %s30
    $region7: #{bottleneck_v2_forward.1} parent=1 // loop_footer_branch
      %29 = sbr.rel target = $region3
    $region8: #{bottleneck_v2_forward.1} parent=1 // loop_exit
      _
    %3912 = vsyncpa [#allocation3], 1
    %s3913 = scalar_lea.sflag [#allocation3], 1
    %3914 = vsyncpa %s3913, 1
    %3915 = vsyncpa [#allocation6], 1
    %s3916 = scalar_lea.sflag [#allocation6], 1
    %3917 = vsyncpa %s3916, 1
    %3918 = vsyncpa [#allocation9], 1
    %3919 = vsyncpa [#allocation12], 1
    %3920 = vsyncpa [#allocation15], 1
    %3921 = vsyncpa [#allocation4], 1
    %s3922 = scalar_lea.sflag [#allocation4], 1
    %3923 = vsyncpa %s3922, 1

</llo_original>
